<compile_context>
chip_gen: v7x
topology: tpu7x:2x2x1
jax: 0.10.0
libtpu: 0.0.40
codegen_flags: <defaults>
</compile_context>

<pallas_src>
import functools

import numpy as np

import jax
import jax.numpy as jnp
from jax.experimental import pallas as pl
from jax.experimental.pallas import tpu as pltpu


def _round_up(v, m):
    return ((v + m - 1) // m) * m


def _set2set_kernel(counts_ref, x_ref, w_ref, b_ref, out_ref, *,
                    steps, Cp, approx_recip):
    x = x_ref[...]                        # [G, Np, Cp]   (bf16 on the fast path)
    G, Np, _ = x.shape
    W2 = w_ref[...]                       # [2Cp, 4Cp] f32 (rows 0:Cp = Wq + Wh, rows Cp:2Cp = Wr)
    bias_g = jnp.broadcast_to(b_ref[...], (G, 4 * Cp))   # hoisted out of the unrolled loop

    # Validity mask for this block's G graphs, built once from the node counts.
    counts = counts_ref[...]              # [G, 1] int32
    node_ids = jax.lax.broadcasted_iota(jnp.int32, (G, Np), 1)
    add_mask = jnp.where(node_ids < counts, 0.0, -1e30).astype(jnp.float32)   # [G, Np]

    q = jnp.zeros((G, Cp), jnp.float32)   # q == h (LSTM hidden) at every step
    r = jnp.zeros((G, Cp), jnp.float32)
    c = jnp.zeros((G, Cp), jnp.float32)

    for _ in range(steps):                # processing_steps is static -> unrolled
        # --- fused LSTM cell (PyTorch gate order i, f, g, o) ---
        # W_hh is folded into the q rows (exact: q == h), so a single K=2Cp dot.
        qr = jnp.concatenate([q, r], axis=-1)                          # [G, 2Cp] lane-aligned
        gates = jnp.dot(qr, W2, preferred_element_type=jnp.float32) + bias_g
        i_g = jax.nn.sigmoid(gates[:, 0 * Cp:1 * Cp])
        f_g = jax.nn.sigmoid(gates[:, 1 * Cp:2 * Cp])
        g_g = jnp.tanh(gates[:, 2 * Cp:3 * Cp])
        o_g = jax.nn.sigmoid(gates[:, 3 * Cp:4 * Cp])
        c = f_g * c + i_g * g_g
        q = o_g * jnp.tanh(c)                                          # new q (== h)

        # --- attention scores S[g, n] = x[g, n, :] . q[g, :]  (batched, flash-style) ---
        q3 = q.astype(x.dtype)[:, None, :]                             # [G, 1, Cp]
        S3 = jax.lax.dot_general(q3, x, (((2,), (2,)), ((0,), (0,))),
                                 preferred_element_type=jnp.float32)   # [G, 1, Np]
        S = S3[:, 0, :] + add_mask                                     # [G, Np] f32

        # --- masked softmax (padded lanes underflow to exactly 0) ---
        mx = jnp.max(S, axis=-1, keepdims=True)
        ex = jnp.exp(S - mx)
        denom = jnp.sum(ex, axis=-1, keepdims=True)                    # >= 1 (no guard needed)
        a = ex * pl.reciprocal(denom, approx=approx_recip)             # [G, Np]

        # --- weighted readout r[g] = sum_n a[g, n] * x[g, n, :] (padded rows are zero) ---
        a3 = a.astype(x.dtype)[:, None, :]                             # [G, 1, Np]
        r3 = jax.lax.dot_general(a3, x, (((2,), (1,)), ((0,), (0,))),
                                 preferred_element_type=jnp.float32)   # [G, 1, Cp]
        r = r3[:, 0, :]

    # Lane-aligned, full-width stores (Cp is a multiple of 128).
    out_ref[:, 0:Cp] = q
    out_ref[:, Cp:2 * Cp] = r


def set2set_forward(x, batch_num_nodes, w_ih, w_hh, b_ih, b_hh,
                    processing_steps, *, fast_math=True, graphs_per_block=8):
    """x: [N, C] node features; batch_num_nodes: per-graph node counts (python list).

    Returns q_star: [B, 2C]  (matches the PyTorch Set2Set forward).
    """
    x = jnp.asarray(x, jnp.float32)
    N, C = x.shape
    counts_np = np.asarray(batch_num_nodes, dtype=np.int32)
    B = int(counts_np.size)
    assert int(counts_np.sum()) == N

    G = _round_up(max(8, int(graphs_per_block)), 8)       # >= 8 sublanes per block
    Cp = _round_up(C, 128)                                # lane-aligned channel dim
    Np = _round_up(max(int(counts_np.max()) if B else 1, 1), 128)   # node bucket
    B_pad = _round_up(max(B, 1), G)
    mm_dtype = jnp.bfloat16 if fast_math else jnp.float32

    # --- host-side packing: ONE gather into per-graph padded blocks [B_pad, Np, Cp] ---
    # TODO(synk): bucket graphs by padded size / N-tile in-kernel instead of padding
    # every graph to the largest graph's Np.
    offsets = np.zeros(B, np.int64)
    if B > 1:
        offsets[1:] = np.cumsum(counts_np)[:-1]
    n_iota = np.arange(Np)
    src = offsets[:, None] + n_iota[None, :]
    src = np.where(n_iota[None, :] < counts_np[:, None], src, N)    # N -> appended zero row
    src_full = np.full((B_pad, Np), N, np.int64)
    src_full[:B] = src

    x_ext = jnp.pad(x, ((0, 1), (0, Cp - C))).astype(mm_dtype)      # [N+1, Cp], row N is zero
    x_pad = jnp.take(x_ext, jnp.asarray(src_full), axis=0)          # [B_pad, Np, Cp]

    counts_full = np.zeros((B_pad, 1), np.int32)
    counts_full[:B, 0] = counts_np
    counts_arr = jnp.asarray(counts_full)

    # --- LSTM weights: fold W_hh into the q rows (exact: q == h every step), fuse, pad ---
    w_ih_t = jnp.asarray(w_ih, jnp.float32).T        # [2C, 4C]
    w_hh_t = jnp.asarray(w_hh, jnp.float32).T        # [C, 4C]
    bias = jnp.asarray(b_ih, jnp.float32) + jnp.asarray(b_hh, jnp.float32)   # [4C]

    def pad_gate_cols(w):   # [rows, 4C] -> [rows, 4Cp]; gate k -> cols [k*Cp, k*Cp+C)
        return jnp.concatenate(
            [jnp.pad(w[:, g * C:(g + 1) * C], ((0, 0), (0, Cp - C))) for g in range(4)],
            axis=1)

    def pad_rows(w):        # [C, 4Cp] -> [Cp, 4Cp]
        return jnp.pad(w, ((0, Cp - C), (0, 0)))

    wq = pad_rows(pad_gate_cols(w_ih_t[:C] + w_hh_t))    # acts on q (== h); exact fold
    wr = pad_rows(pad_gate_cols(w_ih_t[C:2 * C]))        # acts on r
    W2 = jnp.concatenate([wq, wr], axis=0)               # [2Cp, 4Cp]
    bias_p = pad_gate_cols(bias[None, :])                # [1, 4Cp]

    # --- VMEM budget from the actual (double-buffered) block sizes, v7x-safe clamp ---
    x_bytes = G * Np * Cp * x_pad.dtype.itemsize
    fixed_bytes = (2 * Cp * 4 * Cp + 4 * Cp + 2 * G * Cp) * 4 + G * 128 * 4
    vmem_limit = 2 * (x_bytes + fixed_bytes) + (16 << 20)            # + temporaries headroom
    vmem_limit = int(min(max(vmem_limit, 32 << 20), 64 << 20))       # 64 MiB = v7x physical

    kernel = functools.partial(_set2set_kernel, steps=int(processing_steps),
                               Cp=Cp, approx_recip=bool(fast_math))

    out = pl.pallas_call(
        kernel,
        out_shape=jax.ShapeDtypeStruct((B_pad, 2 * Cp), jnp.float32),
        grid=(B_pad // G,),                               # G graphs per grid block
        in_specs=[
            pl.BlockSpec((G, 1), lambda blk: (blk, 0)),            # per-graph node counts
            pl.BlockSpec((G, Np, Cp), lambda blk: (blk, 0, 0)),    # node features
            pl.BlockSpec((2 * Cp, 4 * Cp), lambda blk: (0, 0)),    # fused LSTM weights
            pl.BlockSpec((1, 4 * Cp), lambda blk: (0, 0)),         # fused LSTM bias
        ],
        out_specs=pl.BlockSpec((G, 2 * Cp), lambda blk: (blk, 0)),
        compiler_params=pltpu.CompilerParams(
            dimension_semantics=("parallel",),            # graph blocks are independent
            vmem_limit_bytes=vmem_limit,
        ),
    )(counts_arr, x_pad, W2, bias_p)

    # Un-pad: q lives in cols [0, C), r in cols [Cp, Cp + C); rows [0, B).
    return jnp.concatenate([out[:B, :C], out[:B, Cp:Cp + C]], axis=1)


def _reference(x, batch_num_nodes, w_ih, w_hh, b_ih, b_hh, processing_steps):
    """Pure-JAX reference of the PyTorch forward for correctness checking."""
    N, C = x.shape
    B = len(batch_num_nodes)
    batch = jnp.concatenate([jnp.full((n,), i, jnp.int32)
                             for i, n in enumerate(batch_num_nodes)])
    h = jnp.zeros((B, C), jnp.float32)
    c = jnp.zeros((B, C), jnp.float32)
    q_star = jnp.zeros((B, 2 * C), jnp.float32)
    for _ in range(processing_steps):
        gates = q_star @ w_ih.T + h @ w_hh.T + b_ih + b_hh
        i_g = jax.nn.sigmoid(gates[:, 0 * C:1 * C])
        f_g = jax.nn.sigmoid(gates[:, 1 * C:2 * C])
        g_g = jnp.tanh(gates[:, 2 * C:3 * C])
        o_g = jax.nn.sigmoid(gates[:, 3 * C:4 * C])
        c = f_g * c + i_g * g_g
        h = o_g * jnp.tanh(c)
        q = h
        e = jnp.sum(x * q[batch], axis=-1)                                   # [N]
        parts, off = [], 0
        for n in batch_num_nodes:
            if n > 0:
                parts.append(jax.nn.softmax(e[off:off + n]))
            off += n
        a = jnp.concatenate(parts) if parts else jnp.zeros((0,), jnp.float32)
        r = jax.ops.segment_sum(a[:, None] * x, batch, num_segments=B)       # [B, C]
        q_star = jnp.concatenate([q, r], axis=-1)
    return q_star


if __name__ == "__main__":
    in_channels = 32
    processing_steps = 3

    key = jax.random.PRNGKey(0)
    k_x, k_wi, k_wh, k_bi, k_bh, k_x2 = jax.random.split(key, 6)

    # Deterministic LSTM parameter init (PyTorch-style uniform(-1/sqrt(H), 1/sqrt(H))).
    bound = 1.0 / jnp.sqrt(jnp.float32(in_channels))
    w_ih = jax.random.uniform(k_wi, (4 * in_channels, 2 * in_channels),
                              jnp.float32, -bound, bound)
    w_hh = jax.random.uniform(k_wh, (4 * in_channels, in_channels),
                              jnp.float32, -bound, bound)
    b_ih = jax.random.uniform(k_bi, (4 * in_channels,), jnp.float32, -bound, bound)
    b_hh = jax.random.uniform(k_bh, (4 * in_channels,), jnp.float32, -bound, bound)

    # --- test 1: batch of 2 graphs (5 + 3 nodes) ---
    batch_num_nodes = [5, 3]
    N = sum(batch_num_nodes)
    x = jax.random.normal(k_x, (N, in_channels), jnp.float32)
    ref = _reference(x, batch_num_nodes, w_ih, w_hh, b_ih, b_hh, processing_steps)

    # Strict f32 path (f32 HBM x, exact reciprocal): tight tolerance.
    out_strict = jax.block_until_ready(
        set2set_forward(x, batch_num_nodes, w_ih, w_hh, b_ih, b_hh,
                        processing_steps, fast_math=False))
    assert out_strict.shape == (len(batch_num_nodes), 2 * in_channels)
    assert jnp.allclose(out_strict, ref, atol=3e-5, rtol=3e-5), (out_strict, ref)

    # Fast path (bf16 x in HBM, bf16 MXU feeds, approx EUP reciprocal): relaxed tolerance.
    out_fast = jax.block_until_ready(
        set2set_forward(x, batch_num_nodes, w_ih, w_hh, b_ih, b_hh,
                        processing_steps, fast_math=True))
    assert jnp.allclose(out_fast, ref, atol=5e-2, rtol=5e-2), (out_fast, ref)

    # --- test 2: batch containing an empty graph ---
    batch_num_nodes2 = [4, 0, 6]
    N2 = sum(batch_num_nodes2)
    x2 = jax.random.normal(k_x2, (N2, in_channels), jnp.float32)
    ref2 = _reference(x2, batch_num_nodes2, w_ih, w_hh, b_ih, b_hh, processing_steps)
    out2 = jax.block_until_ready(
        set2set_forward(x2, batch_num_nodes2, w_ih, w_hh, b_ih, b_hh,
                        processing_steps, fast_math=False))
    assert jnp.allclose(out2, ref2, atol=3e-5, rtol=3e-5), (out2, ref2)

    print("KERNEL_OK")
</pallas_src>

<mosaic_0001>
module attributes {stable_mosaic.version = 11 : i64} {
  func.func @_set2set_kernel(%arg0: i32, %arg1: memref<8x1xi32, #tpu.memory_space<vmem>>, %arg2: memref<8x128x128xf32, #tpu.memory_space<vmem>>, %arg3: memref<256x512xf32, #tpu.memory_space<vmem>>, %arg4: memref<1x512xf32, #tpu.memory_space<vmem>>, %arg5: memref<8x256xf32, #tpu.memory_space<vmem>>) attributes {dimension_semantics = [#tpu.dimension_semantics<parallel>], iteration_bounds = array<i64: 1>, scalar_prefetch = 0 : i64, scratch_operands = 0 : i64, tpu.core_type = #tpu.core_type<tc>, window_params = [{transform_indices = @transform_0, window_bounds = array<i64: 8, 1>}, {transform_indices = @transform_1, window_bounds = array<i64: 8, 128, 128>}, {pipeline_mode = #tpu.pipeline_mode<synchronous>, transform_indices = @transform_2, window_bounds = array<i64: 256, 512>}, {pipeline_mode = #tpu.pipeline_mode<synchronous>, transform_indices = @transform_3, window_bounds = array<i64: 1, 512>}, {transform_indices = @transform_4, window_bounds = array<i64: 8, 256>}]} {
    %c0 = arith.constant 0 : index
    %c0_0 = arith.constant 0 : index
    %c0_1 = arith.constant 0 : index
    %0 = vector.load %arg2[%c0, %c0_0, %c0_1] : memref<8x128x128xf32, #tpu.memory_space<vmem>>, vector<8x128x128xf32>
    %c0_2 = arith.constant 0 : index
    %c0_3 = arith.constant 0 : index
    %1 = vector.load %arg3[%c0_2, %c0_3] : memref<256x512xf32, #tpu.memory_space<vmem>>, vector<256x512xf32>
    %c0_4 = arith.constant 0 : index
    %c0_5 = arith.constant 0 : index
    %2 = vector.load %arg4[%c0_4, %c0_5] : memref<1x512xf32, #tpu.memory_space<vmem>>, vector<1x512xf32>
    %3 = vector.shape_cast %2 : vector<1x512xf32> to vector<1x512xf32>
    %4 = vector.broadcast %3 : vector<1x512xf32> to vector<8x512xf32>
    %c0_6 = arith.constant 0 : index
    %c0_7 = arith.constant 0 : index
    %5 = vector.load %arg1[%c0_6, %c0_7] : memref<8x1xi32, #tpu.memory_space<vmem>>, vector<8x1xi32>
    %6 = tpu.iota {dimensions = array<i32: 1>} : vector<8x128xi32>
    %7 = vector.broadcast %5 : vector<8x1xi32> to vector<8x128xi32>
    %8 = arith.cmpi slt, %6, %7 : vector<8x128xi32>
    %cst = arith.constant 0.000000e+00 : f32
    %cst_8 = arith.constant -1.000000e+30 : f32
    %9 = vector.broadcast %cst : f32 to vector<8x128xf32>
    %10 = vector.broadcast %cst_8 : f32 to vector<8x128xf32>
    %11 = arith.select %8, %9, %10 : vector<8x128xi1>, vector<8x128xf32>
    %cst_9 = arith.constant 0.000000e+00 : f32
    %12 = vector.broadcast %cst_9 : f32 to vector<8x128xf32>
    %cst_10 = arith.constant 0.000000e+00 : f32
    %13 = vector.broadcast %cst_10 : f32 to vector<8x128xf32>
    %cst_11 = arith.constant 0.000000e+00 : f32
    %14 = vector.broadcast %cst_11 : f32 to vector<8x128xf32>
    %15 = tpu.concatenate %12, %13 in 1 : vector<8x128xf32>, vector<8x128xf32> -> vector<8x256xf32>
    %cst_12 = arith.constant dense<0.000000e+00> : vector<8x512xf32>
    %16 = tpu.matmul %15, %1, %cst_12 {dimension_numbers = #tpu.dot_dimension_numbers<[1], [0], [0], [1], [0, 0, 1, 1], [], []>} : vector<8x256xf32>, vector<256x512xf32>, vector<8x512xf32> -> vector<8x512xf32>
    %17 = arith.addf %16, %4 : vector<8x512xf32>
    %18 = vector.extract_strided_slice %17 {offsets = [0, 0], sizes = [8, 128], strides = [1, 1]} : vector<8x512xf32> to vector<8x128xf32>
    %19 = arith.negf %18 : vector<8x128xf32>
    %20 = math.exp %19 : vector<8x128xf32>
    %cst_13 = arith.constant 1.000000e+00 : f32
    %21 = vector.broadcast %cst_13 : f32 to vector<8x128xf32>
    %22 = arith.addf %21, %20 : vector<8x128xf32>
    %23 = arith.divf %21, %22 : vector<8x128xf32>
    %24 = vector.extract_strided_slice %17 {offsets = [0, 128], sizes = [8, 128], strides = [1, 1]} : vector<8x512xf32> to vector<8x128xf32>
    %25 = arith.negf %24 : vector<8x128xf32>
    %26 = math.exp %25 : vector<8x128xf32>
    %cst_14 = arith.constant 1.000000e+00 : f32
    %27 = vector.broadcast %cst_14 : f32 to vector<8x128xf32>
    %28 = arith.addf %27, %26 : vector<8x128xf32>
    %29 = arith.divf %27, %28 : vector<8x128xf32>
    %30 = vector.extract_strided_slice %17 {offsets = [0, 256], sizes = [8, 128], strides = [1, 1]} : vector<8x512xf32> to vector<8x128xf32>
    %31 = math.tanh %30 : vector<8x128xf32>
    %32 = vector.extract_strided_slice %17 {offsets = [0, 384], sizes = [8, 128], strides = [1, 1]} : vector<8x512xf32> to vector<8x128xf32>
    %33 = arith.negf %32 : vector<8x128xf32>
    %34 = math.exp %33 : vector<8x128xf32>
    %cst_15 = arith.constant 1.000000e+00 : f32
    %35 = vector.broadcast %cst_15 : f32 to vector<8x128xf32>
    %36 = arith.addf %35, %34 : vector<8x128xf32>
    %37 = arith.divf %35, %36 : vector<8x128xf32>
    %38 = arith.mulf %29, %14 : vector<8x128xf32>
    %39 = arith.mulf %23, %31 : vector<8x128xf32>
    %40 = arith.addf %38, %39 : vector<8x128xf32>
    %41 = math.tanh %40 : vector<8x128xf32>
    %42 = arith.mulf %37, %41 : vector<8x128xf32>
    %43 = vector.shape_cast %42 : vector<8x128xf32> to vector<8x1x128xf32>
    %cst_16 = arith.constant dense<0.000000e+00> : vector<8x1x128xf32>
    %44 = tpu.matmul %43, %0, %cst_16 {dimension_numbers = #tpu.dot_dimension_numbers<[2], [2], [1], [1], [0, 0, 0, 1, 1, 1], [0], [0]>} : vector<8x1x128xf32>, vector<8x128x128xf32>, vector<8x1x128xf32> -> vector<8x1x128xf32>
    %45 = vector.shape_cast %44 : vector<8x1x128xf32> to vector<8x128xf32>
    %46 = arith.addf %45, %11 : vector<8x128xf32>
    %cst_17 = arith.constant dense<0xFF800000> : vector<8xf32>
    %47 = vector.multi_reduction <maximumf>, %46, %cst_17 [1] : vector<8x128xf32> to vector<8xf32>
    %48 = vector.shape_cast %47 : vector<8xf32> to vector<8x1xf32>
    %49 = vector.broadcast %48 : vector<8x1xf32> to vector<8x128xf32>
    %50 = arith.subf %46, %49 : vector<8x128xf32>
    %51 = math.exp %50 : vector<8x128xf32>
    %cst_18 = arith.constant dense<0.000000e+00> : vector<8xf32>
    %52 = vector.multi_reduction <add>, %51, %cst_18 [1] : vector<8x128xf32> to vector<8xf32>
    %53 = vector.shape_cast %52 : vector<8xf32> to vector<8x1xf32>
    %54 = tpu.reciprocal %53 : vector<8x1xf32> -> vector<8x1xf32>
    %55 = vector.broadcast %54 : vector<8x1xf32> to vector<8x128xf32>
    %56 = arith.mulf %51, %55 : vector<8x128xf32>
    %57 = vector.shape_cast %56 : vector<8x128xf32> to vector<8x1x128xf32>
    %cst_19 = arith.constant dense<0.000000e+00> : vector<8x1x128xf32>
    %58 = tpu.matmul %57, %0, %cst_19 {dimension_numbers = #tpu.dot_dimension_numbers<[2], [1], [1], [2], [0, 0, 0, 1, 1, 2], [0], [0]>} : vector<8x1x128xf32>, vector<8x128x128xf32>, vector<8x1x128xf32> -> vector<8x1x128xf32>
    %59 = vector.shape_cast %58 : vector<8x1x128xf32> to vector<8x128xf32>
    %60 = tpu.concatenate %42, %59 in 1 : vector<8x128xf32>, vector<8x128xf32> -> vector<8x256xf32>
    %cst_20 = arith.constant dense<0.000000e+00> : vector<8x512xf32>
    %61 = tpu.matmul %60, %1, %cst_20 {dimension_numbers = #tpu.dot_dimension_numbers<[1], [0], [0], [1], [0, 0, 1, 1], [], []>} : vector<8x256xf32>, vector<256x512xf32>, vector<8x512xf32> -> vector<8x512xf32>
    %62 = arith.addf %61, %4 : vector<8x512xf32>
    %63 = vector.extract_strided_slice %62 {offsets = [0, 0], sizes = [8, 128], strides = [1, 1]} : vector<8x512xf32> to vector<8x128xf32>
    %64 = arith.negf %63 : vector<8x128xf32>
    %65 = math.exp %64 : vector<8x128xf32>
    %cst_21 = arith.constant 1.000000e+00 : f32
    %66 = vector.broadcast %cst_21 : f32 to vector<8x128xf32>
    %67 = arith.addf %66, %65 : vector<8x128xf32>
    %68 = arith.divf %66, %67 : vector<8x128xf32>
    %69 = vector.extract_strided_slice %62 {offsets = [0, 128], sizes = [8, 128], strides = [1, 1]} : vector<8x512xf32> to vector<8x128xf32>
    %70 = arith.negf %69 : vector<8x128xf32>
    %71 = math.exp %70 : vector<8x128xf32>
    %cst_22 = arith.constant 1.000000e+00 : f32
    %72 = vector.broadcast %cst_22 : f32 to vector<8x128xf32>
    %73 = arith.addf %72, %71 : vector<8x128xf32>
    %74 = arith.divf %72, %73 : vector<8x128xf32>
    %75 = vector.extract_strided_slice %62 {offsets = [0, 256], sizes = [8, 128], strides = [1, 1]} : vector<8x512xf32> to vector<8x128xf32>
    %76 = math.tanh %75 : vector<8x128xf32>
    %77 = vector.extract_strided_slice %62 {offsets = [0, 384], sizes = [8, 128], strides = [1, 1]} : vector<8x512xf32> to vector<8x128xf32>
    %78 = arith.negf %77 : vector<8x128xf32>
    %79 = math.exp %78 : vector<8x128xf32>
    %cst_23 = arith.constant 1.000000e+00 : f32
    %80 = vector.broadcast %cst_23 : f32 to vector<8x128xf32>
    %81 = arith.addf %80, %79 : vector<8x128xf32>
    %82 = arith.divf %80, %81 : vector<8x128xf32>
    %83 = arith.mulf %74, %40 : vector<8x128xf32>
    %84 = arith.mulf %68, %76 : vector<8x128xf32>
    %85 = arith.addf %83, %84 : vector<8x128xf32>
    %86 = math.tanh %85 : vector<8x128xf32>
    %87 = arith.mulf %82, %86 : vector<8x128xf32>
    %88 = vector.shape_cast %87 : vector<8x128xf32> to vector<8x1x128xf32>
    %cst_24 = arith.constant dense<0.000000e+00> : vector<8x1x128xf32>
    %89 = tpu.matmul %88, %0, %cst_24 {dimension_numbers = #tpu.dot_dimension_numbers<[2], [2], [1], [1], [0, 0, 0, 1, 1, 1], [0], [0]>} : vector<8x1x128xf32>, vector<8x128x128xf32>, vector<8x1x128xf32> -> vector<8x1x128xf32>
    %90 = vector.shape_cast %89 : vector<8x1x128xf32> to vector<8x128xf32>
    %91 = arith.addf %90, %11 : vector<8x128xf32>
    %cst_25 = arith.constant dense<0xFF800000> : vector<8xf32>
    %92 = vector.multi_reduction <maximumf>, %91, %cst_25 [1] : vector<8x128xf32> to vector<8xf32>
    %93 = vector.shape_cast %92 : vector<8xf32> to vector<8x1xf32>
    %94 = vector.broadcast %93 : vector<8x1xf32> to vector<8x128xf32>
    %95 = arith.subf %91, %94 : vector<8x128xf32>
    %96 = math.exp %95 : vector<8x128xf32>
    %cst_26 = arith.constant dense<0.000000e+00> : vector<8xf32>
    %97 = vector.multi_reduction <add>, %96, %cst_26 [1] : vector<8x128xf32> to vector<8xf32>
    %98 = vector.shape_cast %97 : vector<8xf32> to vector<8x1xf32>
    %99 = tpu.reciprocal %98 : vector<8x1xf32> -> vector<8x1xf32>
    %100 = vector.broadcast %99 : vector<8x1xf32> to vector<8x128xf32>
    %101 = arith.mulf %96, %100 : vector<8x128xf32>
    %102 = vector.shape_cast %101 : vector<8x128xf32> to vector<8x1x128xf32>
    %cst_27 = arith.constant dense<0.000000e+00> : vector<8x1x128xf32>
    %103 = tpu.matmul %102, %0, %cst_27 {dimension_numbers = #tpu.dot_dimension_numbers<[2], [1], [1], [2], [0, 0, 0, 1, 1, 2], [0], [0]>} : vector<8x1x128xf32>, vector<8x128x128xf32>, vector<8x1x128xf32> -> vector<8x1x128xf32>
    %104 = vector.shape_cast %103 : vector<8x1x128xf32> to vector<8x128xf32>
    %105 = tpu.concatenate %87, %104 in 1 : vector<8x128xf32>, vector<8x128xf32> -> vector<8x256xf32>
    %cst_28 = arith.constant dense<0.000000e+00> : vector<8x512xf32>
    %106 = tpu.matmul %105, %1, %cst_28 {dimension_numbers = #tpu.dot_dimension_numbers<[1], [0], [0], [1], [0, 0, 1, 1], [], []>} : vector<8x256xf32>, vector<256x512xf32>, vector<8x512xf32> -> vector<8x512xf32>
    %107 = arith.addf %106, %4 : vector<8x512xf32>
    %108 = vector.extract_strided_slice %107 {offsets = [0, 0], sizes = [8, 128], strides = [1, 1]} : vector<8x512xf32> to vector<8x128xf32>
    %109 = arith.negf %108 : vector<8x128xf32>
    %110 = math.exp %109 : vector<8x128xf32>
    %cst_29 = arith.constant 1.000000e+00 : f32
    %111 = vector.broadcast %cst_29 : f32 to vector<8x128xf32>
    %112 = arith.addf %111, %110 : vector<8x128xf32>
    %113 = arith.divf %111, %112 : vector<8x128xf32>
    %114 = vector.extract_strided_slice %107 {offsets = [0, 128], sizes = [8, 128], strides = [1, 1]} : vector<8x512xf32> to vector<8x128xf32>
    %115 = arith.negf %114 : vector<8x128xf32>
    %116 = math.exp %115 : vector<8x128xf32>
    %cst_30 = arith.constant 1.000000e+00 : f32
    %117 = vector.broadcast %cst_30 : f32 to vector<8x128xf32>
    %118 = arith.addf %117, %116 : vector<8x128xf32>
    %119 = arith.divf %117, %118 : vector<8x128xf32>
    %120 = vector.extract_strided_slice %107 {offsets = [0, 256], sizes = [8, 128], strides = [1, 1]} : vector<8x512xf32> to vector<8x128xf32>
    %121 = math.tanh %120 : vector<8x128xf32>
    %122 = vector.extract_strided_slice %107 {offsets = [0, 384], sizes = [8, 128], strides = [1, 1]} : vector<8x512xf32> to vector<8x128xf32>
    %123 = arith.negf %122 : vector<8x128xf32>
    %124 = math.exp %123 : vector<8x128xf32>
    %cst_31 = arith.constant 1.000000e+00 : f32
    %125 = vector.broadcast %cst_31 : f32 to vector<8x128xf32>
    %126 = arith.addf %125, %124 : vector<8x128xf32>
    %127 = arith.divf %125, %126 : vector<8x128xf32>
    %128 = arith.mulf %119, %85 : vector<8x128xf32>
    %129 = arith.mulf %113, %121 : vector<8x128xf32>
    %130 = arith.addf %128, %129 : vector<8x128xf32>
    %131 = math.tanh %130 : vector<8x128xf32>
    %132 = arith.mulf %127, %131 : vector<8x128xf32>
    %133 = vector.shape_cast %132 : vector<8x128xf32> to vector<8x1x128xf32>
    %cst_32 = arith.constant dense<0.000000e+00> : vector<8x1x128xf32>
    %134 = tpu.matmul %133, %0, %cst_32 {dimension_numbers = #tpu.dot_dimension_numbers<[2], [2], [1], [1], [0, 0, 0, 1, 1, 1], [0], [0]>} : vector<8x1x128xf32>, vector<8x128x128xf32>, vector<8x1x128xf32> -> vector<8x1x128xf32>
    %135 = vector.shape_cast %134 : vector<8x1x128xf32> to vector<8x128xf32>
    %136 = arith.addf %135, %11 : vector<8x128xf32>
    %cst_33 = arith.constant dense<0xFF800000> : vector<8xf32>
    %137 = vector.multi_reduction <maximumf>, %136, %cst_33 [1] : vector<8x128xf32> to vector<8xf32>
    %138 = vector.shape_cast %137 : vector<8xf32> to vector<8x1xf32>
    %139 = vector.broadcast %138 : vector<8x1xf32> to vector<8x128xf32>
    %140 = arith.subf %136, %139 : vector<8x128xf32>
    %141 = math.exp %140 : vector<8x128xf32>
    %cst_34 = arith.constant dense<0.000000e+00> : vector<8xf32>
    %142 = vector.multi_reduction <add>, %141, %cst_34 [1] : vector<8x128xf32> to vector<8xf32>
    %143 = vector.shape_cast %142 : vector<8xf32> to vector<8x1xf32>
    %144 = tpu.reciprocal %143 : vector<8x1xf32> -> vector<8x1xf32>
    %145 = vector.broadcast %144 : vector<8x1xf32> to vector<8x128xf32>
    %146 = arith.mulf %141, %145 : vector<8x128xf32>
    %147 = vector.shape_cast %146 : vector<8x128xf32> to vector<8x1x128xf32>
    %cst_35 = arith.constant dense<0.000000e+00> : vector<8x1x128xf32>
    %148 = tpu.matmul %147, %0, %cst_35 {dimension_numbers = #tpu.dot_dimension_numbers<[2], [1], [1], [2], [0, 0, 0, 1, 1, 2], [0], [0]>} : vector<8x1x128xf32>, vector<8x128x128xf32>, vector<8x1x128xf32> -> vector<8x1x128xf32>
    %149 = vector.shape_cast %148 : vector<8x1x128xf32> to vector<8x128xf32>
    %c0_36 = arith.constant 0 : index
    %c0_37 = arith.constant 0 : index
    %150 = vector.load %arg5[%c0_36, %c0_37] : memref<8x256xf32, #tpu.memory_space<vmem>>, vector<8x128xf32>
    tpu.vector_store %arg5[%c0_36, %c0_37], %132 {strides = array<i32>} : memref<8x256xf32, #tpu.memory_space<vmem>>, vector<8x128xf32>,
    %c0_38 = arith.constant 0 : index
    %c128 = arith.constant 128 : index
    %151 = vector.load %arg5[%c0_38, %c128] : memref<8x256xf32, #tpu.memory_space<vmem>>, vector<8x128xf32>
    tpu.vector_store %arg5[%c0_38, %c128], %149 {strides = array<i32>} : memref<8x256xf32, #tpu.memory_space<vmem>>, vector<8x128xf32>,
    return
  }
  func.func @transform_0(%arg0: i32) -> (i32, i32) {
    %c0_i32 = arith.constant 0 : i32
    %c0_i32_0 = arith.constant 0 : i32
    return %arg0, %c0_i32 : i32, i32
  }
  func.func @transform_1(%arg0: i32) -> (i32, i32, i32) {
    %c0_i32 = arith.constant 0 : i32
    %c0_i32_0 = arith.constant 0 : i32
    %c0_i32_1 = arith.constant 0 : i32
    return %arg0, %c0_i32, %c0_i32_0 : i32, i32, i32
  }
  func.func @transform_2(%arg0: i32) -> (i32, i32) {
    %c0_i32 = arith.constant 0 : i32
    %c0_i32_0 = arith.constant 0 : i32
    %c0_i32_1 = arith.constant 0 : i32
    return %c0_i32, %c0_i32_0 : i32, i32
  }
  func.func @transform_3(%arg0: i32) -> (i32, i32) {
    %c0_i32 = arith.constant 0 : i32
    %c0_i32_0 = arith.constant 0 : i32
    %c0_i32_1 = arith.constant 0 : i32
    return %c0_i32, %c0_i32_0 : i32, i32
  }
  func.func @transform_4(%arg0: i32) -> (i32, i32) {
    %c0_i32 = arith.constant 0 : i32
    %c0_i32_0 = arith.constant 0 : i32
    return %arg0, %c0_i32 : i32, i32
  }
}

</mosaic_0001>

<llo_original>
// kernel: tpu_custom_call.1
$region0: #{tpu_custom_call.1}
  #allocation0 [shape = 'u32[]', space=smem, size = 0x4, offset = 0x4, fixed_abs, tag = 'smem constant byte address 0x4 - core index']
  #allocation1 [shape = 'u32[144,128]{1,0:T(1,128)}', space=vmem, size = 0x12000, scoped, tag = 'internal scratch']
  %s0 = inlined_call_operand.vmem [shape: s32[8,1], index: 0, kind: input, shape index: {}]
  %s1 = inlined_call_operand.hbm [shape: f32[8,128,128], index: 1, kind: input, shape index: {}]
  %s2 = inlined_call_operand.hbm [shape: f32[256,512], index: 2, kind: input, shape index: {}]
  %s3 = inlined_call_operand.vmem [shape: f32[1,512], index: 3, kind: input, shape index: {}]
  %s4 = inlined_call_operand.hbm [shape: f32[8,256], index: 4, kind: output, shape index: {}]
  %s5 = sld [smem:[#allocation0]]
  $region34: #{tpu_custom_call.1} parent=0
    _
  %s7 = ssub.s32 1, %s5
  %s8 = scalar_select 0, %s7, %s5
  $region1: #{tpu_custom_call.1} parent=0
    #allocation2 [shape = 'u8[524288]{0}', space=vmem, size = 0x80000, scoped, tag = 'input window, operand 1, single buffered']
    #allocation3 [shape = 's32[1]{0}', space=sflag, size = 0x4, scoped, tag = 'scoped memory for tpu_custom_call.1']
    #allocation4 [shape = 's32[1]{0}', space=sflag, size = 0x4, scoped, tag = 'scoped memory for tpu_custom_call.1']
    #allocation5 [shape = 'u8[524288]{0}', space=vmem, size = 0x80000, scoped, tag = 'input window, operand 2, single buffered']
    #allocation6 [shape = 's32[1]{0}', space=sflag, size = 0x4, scoped, tag = 'scoped memory for tpu_custom_call.1']
    #allocation7 [shape = 'u8[8192]{0}', space=vmem, size = 0x2000, scoped, tag = 'output window, operand 0, single buffered']
    %9 = vsyncpa [#allocation3], 0
    %10 = vsyncpa [#allocation6], 0
    %11 = vsyncpa [#allocation4], 0
    // Predicated region
    $region2: #{tpu_custom_call.1} parent=1 // pred_check
      _
    $region3: #{tpu_custom_call.1} parent=1 // pred_check_branch
      %13 = sbr.rel (0) target = $region5
    $region4: #{tpu_custom_call.1} parent=1 // pred_region
      _
    $region5: #{tpu_custom_call.1} parent=1 // pred_fallthru
      _
    // Predicated region
    $region6: #{tpu_custom_call.1} parent=1 // pred_check
      _
    $region7: #{tpu_custom_call.1} parent=1 // pred_check_branch
      %15 = sbr.rel (0) target = $region9
    $region8: #{tpu_custom_call.1} parent=1 // pred_region
      %s17 = ssub.s32 16384, 16384
      %18 = vsyncadd [#allocation3], %s17
      %s19 = sshll.u32 [#allocation2], 4
      %s20 = int_to_ptr.vmem [resolvable:$true] %s19
      %25 = dma.hbm_to_vmem [thread:$0]  %s1, 16384, %s20, [#allocation3], 128, 128, 8
    $region9: #{tpu_custom_call.1} parent=1 // pred_fallthru
      _
    // Predicated region
    $region10: #{tpu_custom_call.1} parent=1 // pred_check
      _
    $region11: #{tpu_custom_call.1} parent=1 // pred_check_branch
      %27 = sbr.rel (0) target = $region13
    $region12: #{tpu_custom_call.1} parent=1 // pred_region
      %s29 = ssub.s32 16384, 16384
      %30 = vsyncadd [#allocation6], %s29
      %s31 = sshll.u32 [#allocation5], 4
      %s32 = int_to_ptr.vmem [resolvable:$true] %s31
      %37 = dma.hbm_to_vmem [thread:$0]  %s2, 16384, %s32, [#allocation6], 512, 512, 32
    $region13: #{tpu_custom_call.1} parent=1 // pred_fallthru
      _
    // Predicated region
    $region14: #{tpu_custom_call.1} parent=1 // pred_check
      _
    $region15: #{tpu_custom_call.1} parent=1 // pred_check_branch
      %39 = sbr.rel (0) target = $region17
    $region16: #{tpu_custom_call.1} parent=1 // pred_region
      _
    $region17: #{tpu_custom_call.1} parent=1 // pred_fallthru
      _
    // Predicated region
    $region18: #{tpu_custom_call.1} parent=1 // pred_check
      _
    $region19: #{tpu_custom_call.1} parent=1 // pred_check_branch
      %41 = sbr.rel (0) target = $region21
    $region20: #{tpu_custom_call.1} parent=1 // pred_region
      %42 = dma.done [#allocation3], 16384
    $region21: #{tpu_custom_call.1} parent=1 // pred_fallthru
      _
    // Predicated region
    $region22: #{tpu_custom_call.1} parent=1 // pred_check
      _
    $region23: #{tpu_custom_call.1} parent=1 // pred_check_branch
      %44 = sbr.rel (0) target = $region25
    $region24: #{tpu_custom_call.1} parent=1 // pred_region
      %45 = dma.done [#allocation6], 16384
    $region25: #{tpu_custom_call.1} parent=1 // pred_fallthru
      _
    %v46 = vld [vmem:[#allocation2] sm:$0xff]
    %v47 = vld [vmem:[#allocation2 + $0x8] sm:$0xff]
    %v48 = vld [vmem:[#allocation2 + $0x10] sm:$0xff]
    %v49 = vld [vmem:[#allocation2 + $0x18] sm:$0xff]
    %v50 = vld [vmem:[#allocation2 + $0x20] sm:$0xff]
    %v51 = vld [vmem:[#allocation2 + $0x28] sm:$0xff]
    %v52 = vld [vmem:[#allocation2 + $0x30] sm:$0xff]
    %v53 = vld [vmem:[#allocation2 + $0x38] sm:$0xff]
    %v54 = vld [vmem:[#allocation2 + $0x40] sm:$0xff]
    %v55 = vld [vmem:[#allocation2 + $0x48] sm:$0xff]
    %v56 = vld [vmem:[#allocation2 + $0x50] sm:$0xff]
    %v57 = vld [vmem:[#allocation2 + $0x58] sm:$0xff]
    %v58 = vld [vmem:[#allocation2 + $0x60] sm:$0xff]
    %v59 = vld [vmem:[#allocation2 + $0x68] sm:$0xff]
    %v60 = vld [vmem:[#allocation2 + $0x70] sm:$0xff]
    %v61 = vld [vmem:[#allocation2 + $0x78] sm:$0xff]
    %v62 = vld [vmem:[#allocation2 + $0x80] sm:$0xff]
    %v63 = vld [vmem:[#allocation2 + $0x88] sm:$0xff]
    %v64 = vld [vmem:[#allocation2 + $0x90] sm:$0xff]
    %v65 = vld [vmem:[#allocation2 + $0x98] sm:$0xff]
    %v66 = vld [vmem:[#allocation2 + $0xa0] sm:$0xff]
    %v67 = vld [vmem:[#allocation2 + $0xa8] sm:$0xff]
    %v68 = vld [vmem:[#allocation2 + $0xb0] sm:$0xff]
    %v69 = vld [vmem:[#allocation2 + $0xb8] sm:$0xff]
    %v70 = vld [vmem:[#allocation2 + $0xc0] sm:$0xff]
    %v71 = vld [vmem:[#allocation2 + $0xc8] sm:$0xff]
    %v72 = vld [vmem:[#allocation2 + $0xd0] sm:$0xff]
    %v73 = vld [vmem:[#allocation2 + $0xd8] sm:$0xff]
    %v74 = vld [vmem:[#allocation2 + $0xe0] sm:$0xff]
    %v75 = vld [vmem:[#allocation2 + $0xe8] sm:$0xff]
    %v76 = vld [vmem:[#allocation2 + $0xf0] sm:$0xff]
    %v77 = vld [vmem:[#allocation2 + $0xf8] sm:$0xff]
    %v78 = vld [vmem:[#allocation2 + $0x100] sm:$0xff]
    %v79 = vld [vmem:[#allocation2 + $0x108] sm:$0xff]
    %v80 = vld [vmem:[#allocation2 + $0x110] sm:$0xff]
    %v81 = vld [vmem:[#allocation2 + $0x118] sm:$0xff]
    %v82 = vld [vmem:[#allocation2 + $0x120] sm:$0xff]
    %v83 = vld [vmem:[#allocation2 + $0x128] sm:$0xff]
    %v84 = vld [vmem:[#allocation2 + $0x130] sm:$0xff]
    %v85 = vld [vmem:[#allocation2 + $0x138] sm:$0xff]
    %v86 = vld [vmem:[#allocation2 + $0x140] sm:$0xff]
    %v87 = vld [vmem:[#allocation2 + $0x148] sm:$0xff]
    %v88 = vld [vmem:[#allocation2 + $0x150] sm:$0xff]
    %v89 = vld [vmem:[#allocation2 + $0x158] sm:$0xff]
    %v90 = vld [vmem:[#allocation2 + $0x160] sm:$0xff]
    %v91 = vld [vmem:[#allocation2 + $0x168] sm:$0xff]
    %v92 = vld [vmem:[#allocation2 + $0x170] sm:$0xff]
    %v93 = vld [vmem:[#allocation2 + $0x178] sm:$0xff]
    %v94 = vld [vmem:[#allocation2 + $0x180] sm:$0xff]
    %v95 = vld [vmem:[#allocation2 + $0x188] sm:$0xff]
    %v96 = vld [vmem:[#allocation2 + $0x190] sm:$0xff]
    %v97 = vld [vmem:[#allocation2 + $0x198] sm:$0xff]
    %v98 = vld [vmem:[#allocation2 + $0x1a0] sm:$0xff]
    %v99 = vld [vmem:[#allocation2 + $0x1a8] sm:$0xff]
    %v100 = vld [vmem:[#allocation2 + $0x1b0] sm:$0xff]
    %v101 = vld [vmem:[#allocation2 + $0x1b8] sm:$0xff]
    %v102 = vld [vmem:[#allocation2 + $0x1c0] sm:$0xff]
    %v103 = vld [vmem:[#allocation2 + $0x1c8] sm:$0xff]
    %v104 = vld [vmem:[#allocation2 + $0x1d0] sm:$0xff]
    %v105 = vld [vmem:[#allocation2 + $0x1d8] sm:$0xff]
    %v106 = vld [vmem:[#allocation2 + $0x1e0] sm:$0xff]
    %v107 = vld [vmem:[#allocation2 + $0x1e8] sm:$0xff]
    %v108 = vld [vmem:[#allocation2 + $0x1f0] sm:$0xff]
    %v109 = vld [vmem:[#allocation2 + $0x1f8] sm:$0xff]
    %v110 = vld [vmem:[#allocation2 + $0x200] sm:$0xff]
    %v111 = vld [vmem:[#allocation2 + $0x208] sm:$0xff]
    %v112 = vld [vmem:[#allocation2 + $0x210] sm:$0xff]
    %v113 = vld [vmem:[#allocation2 + $0x218] sm:$0xff]
    %v114 = vld [vmem:[#allocation2 + $0x220] sm:$0xff]
    %v115 = vld [vmem:[#allocation2 + $0x228] sm:$0xff]
    %v116 = vld [vmem:[#allocation2 + $0x230] sm:$0xff]
    %v117 = vld [vmem:[#allocation2 + $0x238] sm:$0xff]
    %v118 = vld [vmem:[#allocation2 + $0x240] sm:$0xff]
    %v119 = vld [vmem:[#allocation2 + $0x248] sm:$0xff]
    %v120 = vld [vmem:[#allocation2 + $0x250] sm:$0xff]
    %v121 = vld [vmem:[#allocation2 + $0x258] sm:$0xff]
    %v122 = vld [vmem:[#allocation2 + $0x260] sm:$0xff]
    %v123 = vld [vmem:[#allocation2 + $0x268] sm:$0xff]
    %v124 = vld [vmem:[#allocation2 + $0x270] sm:$0xff]
    %v125 = vld [vmem:[#allocation2 + $0x278] sm:$0xff]
    %v126 = vld [vmem:[#allocation2 + $0x280] sm:$0xff]
    %v127 = vld [vmem:[#allocation2 + $0x288] sm:$0xff]
    %v128 = vld [vmem:[#allocation2 + $0x290] sm:$0xff]
    %v129 = vld [vmem:[#allocation2 + $0x298] sm:$0xff]
    %v130 = vld [vmem:[#allocation2 + $0x2a0] sm:$0xff]
    %v131 = vld [vmem:[#allocation2 + $0x2a8] sm:$0xff]
    %v132 = vld [vmem:[#allocation2 + $0x2b0] sm:$0xff]
    %v133 = vld [vmem:[#allocation2 + $0x2b8] sm:$0xff]
    %v134 = vld [vmem:[#allocation2 + $0x2c0] sm:$0xff]
    %v135 = vld [vmem:[#allocation2 + $0x2c8] sm:$0xff]
    %v136 = vld [vmem:[#allocation2 + $0x2d0] sm:$0xff]
    %v137 = vld [vmem:[#allocation2 + $0x2d8] sm:$0xff]
    %v138 = vld [vmem:[#allocation2 + $0x2e0] sm:$0xff]
    %v139 = vld [vmem:[#allocation2 + $0x2e8] sm:$0xff]
    %v140 = vld [vmem:[#allocation2 + $0x2f0] sm:$0xff]
    %v141 = vld [vmem:[#allocation2 + $0x2f8] sm:$0xff]
    %v142 = vld [vmem:[#allocation2 + $0x300] sm:$0xff]
    %v143 = vld [vmem:[#allocation2 + $0x308] sm:$0xff]
    %v144 = vld [vmem:[#allocation2 + $0x310] sm:$0xff]
    %v145 = vld [vmem:[#allocation2 + $0x318] sm:$0xff]
    %v146 = vld [vmem:[#allocation2 + $0x320] sm:$0xff]
    %v147 = vld [vmem:[#allocation2 + $0x328] sm:$0xff]
    %v148 = vld [vmem:[#allocation2 + $0x330] sm:$0xff]
    %v149 = vld [vmem:[#allocation2 + $0x338] sm:$0xff]
    %v150 = vld [vmem:[#allocation2 + $0x340] sm:$0xff]
    %v151 = vld [vmem:[#allocation2 + $0x348] sm:$0xff]
    %v152 = vld [vmem:[#allocation2 + $0x350] sm:$0xff]
    %v153 = vld [vmem:[#allocation2 + $0x358] sm:$0xff]
    %v154 = vld [vmem:[#allocation2 + $0x360] sm:$0xff]
    %v155 = vld [vmem:[#allocation2 + $0x368] sm:$0xff]
    %v156 = vld [vmem:[#allocation2 + $0x370] sm:$0xff]
    %v157 = vld [vmem:[#allocation2 + $0x378] sm:$0xff]
    %v158 = vld [vmem:[#allocation2 + $0x380] sm:$0xff]
    %v159 = vld [vmem:[#allocation2 + $0x388] sm:$0xff]
    %v160 = vld [vmem:[#allocation2 + $0x390] sm:$0xff]
    %v161 = vld [vmem:[#allocation2 + $0x398] sm:$0xff]
    %v162 = vld [vmem:[#allocation2 + $0x3a0] sm:$0xff]
    %v163 = vld [vmem:[#allocation2 + $0x3a8] sm:$0xff]
    %v164 = vld [vmem:[#allocation2 + $0x3b0] sm:$0xff]
    %v165 = vld [vmem:[#allocation2 + $0x3b8] sm:$0xff]
    %v166 = vld [vmem:[#allocation2 + $0x3c0] sm:$0xff]
    %v167 = vld [vmem:[#allocation2 + $0x3c8] sm:$0xff]
    %v168 = vld [vmem:[#allocation2 + $0x3d0] sm:$0xff]
    %v169 = vld [vmem:[#allocation2 + $0x3d8] sm:$0xff]
    %v170 = vld [vmem:[#allocation2 + $0x3e0] sm:$0xff]
    %v171 = vld [vmem:[#allocation2 + $0x3e8] sm:$0xff]
    %v172 = vld [vmem:[#allocation2 + $0x3f0] sm:$0xff]
    %v173 = vld [vmem:[#allocation2 + $0x3f8] sm:$0xff]
    %v174 = vld [vmem:[#allocation5] sm:$0xff]
    %v175 = vld [vmem:[#allocation5 + $0x8] sm:$0xff]
    %v176 = vld [vmem:[#allocation5 + $0x10] sm:$0xff]
    %v177 = vld [vmem:[#allocation5 + $0x18] sm:$0xff]
    %v178 = vld [vmem:[#allocation5 + $0x20] sm:$0xff]
    %v179 = vld [vmem:[#allocation5 + $0x28] sm:$0xff]
    %v180 = vld [vmem:[#allocation5 + $0x30] sm:$0xff]
    %v181 = vld [vmem:[#allocation5 + $0x38] sm:$0xff]
    %v182 = vld [vmem:[#allocation5 + $0x40] sm:$0xff]
    %v183 = vld [vmem:[#allocation5 + $0x48] sm:$0xff]
    %v184 = vld [vmem:[#allocation5 + $0x50] sm:$0xff]
    %v185 = vld [vmem:[#allocation5 + $0x58] sm:$0xff]
    %v186 = vld [vmem:[#allocation5 + $0x60] sm:$0xff]
    %v187 = vld [vmem:[#allocation5 + $0x68] sm:$0xff]
    %v188 = vld [vmem:[#allocation5 + $0x70] sm:$0xff]
    %v189 = vld [vmem:[#allocation5 + $0x78] sm:$0xff]
    %v190 = vld [vmem:[#allocation5 + $0x80] sm:$0xff]
    %v191 = vld [vmem:[#allocation5 + $0x88] sm:$0xff]
    %v192 = vld [vmem:[#allocation5 + $0x90] sm:$0xff]
    %v193 = vld [vmem:[#allocation5 + $0x98] sm:$0xff]
    %v194 = vld [vmem:[#allocation5 + $0xa0] sm:$0xff]
    %v195 = vld [vmem:[#allocation5 + $0xa8] sm:$0xff]
    %v196 = vld [vmem:[#allocation5 + $0xb0] sm:$0xff]
    %v197 = vld [vmem:[#allocation5 + $0xb8] sm:$0xff]
    %v198 = vld [vmem:[#allocation5 + $0xc0] sm:$0xff]
    %v199 = vld [vmem:[#allocation5 + $0xc8] sm:$0xff]
    %v200 = vld [vmem:[#allocation5 + $0xd0] sm:$0xff]
    %v201 = vld [vmem:[#allocation5 + $0xd8] sm:$0xff]
    %v202 = vld [vmem:[#allocation5 + $0xe0] sm:$0xff]
    %v203 = vld [vmem:[#allocation5 + $0xe8] sm:$0xff]
    %v204 = vld [vmem:[#allocation5 + $0xf0] sm:$0xff]
    %v205 = vld [vmem:[#allocation5 + $0xf8] sm:$0xff]
    %v206 = vld [vmem:[#allocation5 + $0x100] sm:$0xff]
    %v207 = vld [vmem:[#allocation5 + $0x108] sm:$0xff]
    %v208 = vld [vmem:[#allocation5 + $0x110] sm:$0xff]
    %v209 = vld [vmem:[#allocation5 + $0x118] sm:$0xff]
    %v210 = vld [vmem:[#allocation5 + $0x120] sm:$0xff]
    %v211 = vld [vmem:[#allocation5 + $0x128] sm:$0xff]
    %v212 = vld [vmem:[#allocation5 + $0x130] sm:$0xff]
    %v213 = vld [vmem:[#allocation5 + $0x138] sm:$0xff]
    %v214 = vld [vmem:[#allocation5 + $0x140] sm:$0xff]
    %v215 = vld [vmem:[#allocation5 + $0x148] sm:$0xff]
    %v216 = vld [vmem:[#allocation5 + $0x150] sm:$0xff]
    %v217 = vld [vmem:[#allocation5 + $0x158] sm:$0xff]
    %v218 = vld [vmem:[#allocation5 + $0x160] sm:$0xff]
    %v219 = vld [vmem:[#allocation5 + $0x168] sm:$0xff]
    %v220 = vld [vmem:[#allocation5 + $0x170] sm:$0xff]
    %v221 = vld [vmem:[#allocation5 + $0x178] sm:$0xff]
    %v222 = vld [vmem:[#allocation5 + $0x180] sm:$0xff]
    %v223 = vld [vmem:[#allocation5 + $0x188] sm:$0xff]
    %v224 = vld [vmem:[#allocation5 + $0x190] sm:$0xff]
    %v225 = vld [vmem:[#allocation5 + $0x198] sm:$0xff]
    %v226 = vld [vmem:[#allocation5 + $0x1a0] sm:$0xff]
    %v227 = vld [vmem:[#allocation5 + $0x1a8] sm:$0xff]
    %v228 = vld [vmem:[#allocation5 + $0x1b0] sm:$0xff]
    %v229 = vld [vmem:[#allocation5 + $0x1b8] sm:$0xff]
    %v230 = vld [vmem:[#allocation5 + $0x1c0] sm:$0xff]
    %v231 = vld [vmem:[#allocation5 + $0x1c8] sm:$0xff]
    %v232 = vld [vmem:[#allocation5 + $0x1d0] sm:$0xff]
    %v233 = vld [vmem:[#allocation5 + $0x1d8] sm:$0xff]
    %v234 = vld [vmem:[#allocation5 + $0x1e0] sm:$0xff]
    %v235 = vld [vmem:[#allocation5 + $0x1e8] sm:$0xff]
    %v236 = vld [vmem:[#allocation5 + $0x1f0] sm:$0xff]
    %v237 = vld [vmem:[#allocation5 + $0x1f8] sm:$0xff]
    %v238 = vld [vmem:[#allocation5 + $0x200] sm:$0xff]
    %v239 = vld [vmem:[#allocation5 + $0x208] sm:$0xff]
    %v240 = vld [vmem:[#allocation5 + $0x210] sm:$0xff]
    %v241 = vld [vmem:[#allocation5 + $0x218] sm:$0xff]
    %v242 = vld [vmem:[#allocation5 + $0x220] sm:$0xff]
    %v243 = vld [vmem:[#allocation5 + $0x228] sm:$0xff]
    %v244 = vld [vmem:[#allocation5 + $0x230] sm:$0xff]
    %v245 = vld [vmem:[#allocation5 + $0x238] sm:$0xff]
    %v246 = vld [vmem:[#allocation5 + $0x240] sm:$0xff]
    %v247 = vld [vmem:[#allocation5 + $0x248] sm:$0xff]
    %v248 = vld [vmem:[#allocation5 + $0x250] sm:$0xff]
    %v249 = vld [vmem:[#allocation5 + $0x258] sm:$0xff]
    %v250 = vld [vmem:[#allocation5 + $0x260] sm:$0xff]
    %v251 = vld [vmem:[#allocation5 + $0x268] sm:$0xff]
    %v252 = vld [vmem:[#allocation5 + $0x270] sm:$0xff]
    %v253 = vld [vmem:[#allocation5 + $0x278] sm:$0xff]
    %v254 = vld [vmem:[#allocation5 + $0x280] sm:$0xff]
    %v255 = vld [vmem:[#allocation5 + $0x288] sm:$0xff]
    %v256 = vld [vmem:[#allocation5 + $0x290] sm:$0xff]
    %v257 = vld [vmem:[#allocation5 + $0x298] sm:$0xff]
    %v258 = vld [vmem:[#allocation5 + $0x2a0] sm:$0xff]
    %v259 = vld [vmem:[#allocation5 + $0x2a8] sm:$0xff]
    %v260 = vld [vmem:[#allocation5 + $0x2b0] sm:$0xff]
    %v261 = vld [vmem:[#allocation5 + $0x2b8] sm:$0xff]
    %v262 = vld [vmem:[#allocation5 + $0x2c0] sm:$0xff]
    %v263 = vld [vmem:[#allocation5 + $0x2c8] sm:$0xff]
    %v264 = vld [vmem:[#allocation5 + $0x2d0] sm:$0xff]
    %v265 = vld [vmem:[#allocation5 + $0x2d8] sm:$0xff]
    %v266 = vld [vmem:[#allocation5 + $0x2e0] sm:$0xff]
    %v267 = vld [vmem:[#allocation5 + $0x2e8] sm:$0xff]
    %v268 = vld [vmem:[#allocation5 + $0x2f0] sm:$0xff]
    %v269 = vld [vmem:[#allocation5 + $0x2f8] sm:$0xff]
    %v270 = vld [vmem:[#allocation5 + $0x300] sm:$0xff]
    %v271 = vld [vmem:[#allocation5 + $0x308] sm:$0xff]
    %v272 = vld [vmem:[#allocation5 + $0x310] sm:$0xff]
    %v273 = vld [vmem:[#allocation5 + $0x318] sm:$0xff]
    %v274 = vld [vmem:[#allocation5 + $0x320] sm:$0xff]
    %v275 = vld [vmem:[#allocation5 + $0x328] sm:$0xff]
    %v276 = vld [vmem:[#allocation5 + $0x330] sm:$0xff]
    %v277 = vld [vmem:[#allocation5 + $0x338] sm:$0xff]
    %v278 = vld [vmem:[#allocation5 + $0x340] sm:$0xff]
    %v279 = vld [vmem:[#allocation5 + $0x348] sm:$0xff]
    %v280 = vld [vmem:[#allocation5 + $0x350] sm:$0xff]
    %v281 = vld [vmem:[#allocation5 + $0x358] sm:$0xff]
    %v282 = vld [vmem:[#allocation5 + $0x360] sm:$0xff]
    %v283 = vld [vmem:[#allocation5 + $0x368] sm:$0xff]
    %v284 = vld [vmem:[#allocation5 + $0x370] sm:$0xff]
    %v285 = vld [vmem:[#allocation5 + $0x378] sm:$0xff]
    %v286 = vld [vmem:[#allocation5 + $0x380] sm:$0xff]
    %v287 = vld [vmem:[#allocation5 + $0x388] sm:$0xff]
    %v288 = vld [vmem:[#allocation5 + $0x390] sm:$0xff]
    %v289 = vld [vmem:[#allocation5 + $0x398] sm:$0xff]
    %v290 = vld [vmem:[#allocation5 + $0x3a0] sm:$0xff]
    %v291 = vld [vmem:[#allocation5 + $0x3a8] sm:$0xff]
    %v292 = vld [vmem:[#allocation5 + $0x3b0] sm:$0xff]
    %v293 = vld [vmem:[#allocation5 + $0x3b8] sm:$0xff]
    %v294 = vld [vmem:[#allocation5 + $0x3c0] sm:$0xff]
    %v295 = vld [vmem:[#allocation5 + $0x3c8] sm:$0xff]
    %v296 = vld [vmem:[#allocation5 + $0x3d0] sm:$0xff]
    %v297 = vld [vmem:[#allocation5 + $0x3d8] sm:$0xff]
    %v298 = vld [vmem:[#allocation5 + $0x3e0] sm:$0xff]
    %v299 = vld [vmem:[#allocation5 + $0x3e8] sm:$0xff]
    %v300 = vld [vmem:[#allocation5 + $0x3f0] sm:$0xff]
    %v301 = vld [vmem:[#allocation5 + $0x3f8] sm:$0xff]
    %v302 = vld [vmem:[%s3] sm:$0xf]
    %v304 = vlaneseq
    %v305 = vshrl.u32 %v304, 7
    %v306 = vsub.s32 0, %v305
    %v307 = vrot.slane %v302, %v306
    %v308 = vlaneseq
    %v309 = vshrl.u32 %v308, 7
    %v310 = vsub.s32 1, %v309
    %v311 = vrot.slane %v302, %v310
    %v312 = vlaneseq
    %v313 = vshrl.u32 %v312, 7
    %v314 = vsub.s32 2, %v313
    %v315 = vrot.slane %v302, %v314
    %v316 = vlaneseq
    %v317 = vshrl.u32 %v316, 7
    %v318 = vsub.s32 3, %v317
    %v319 = vrot.slane %v302, %v318
    %v324 = vld [vmem:[%s0] sm:$0xff]
    %v325 = vlaneseq
    %v326 = vand.u32 %v325, 127
    %327 = vset.pattern.permute.xlu0 0
    %328 = vperm.xlu0 %327, %v324
    %v329 = vpop.permute.xlu0 %328
    %vm330 = vcmp.lt.s32.totalorder %v326, %v329
    %v331 = vsel %vm330, 0.0, -1e+30
    %332 = vmatprep.subr.mxu0 %v175
    %333 = vmatpush1.msra.mxu0 %v174
    %334 = vmatprep.subr.mxu0 %v179
    %335 = vmatpush1.msra.mxu0 %v178
    %336 = vmatprep.subr.mxu0 %v183
    %337 = vmatpush1.msra.mxu0 %v182
    %338 = vmatprep.subr.mxu0 %v187
    %339 = vmatpush1.msra.mxu0 %v186
    %340 = vmatprep.subr.mxu0 %v191
    %341 = vmatpush1.msra.mxu0 %v190
    %342 = vmatprep.subr.mxu0 %v195
    %343 = vmatpush1.msra.mxu0 %v194
    %344 = vmatprep.subr.mxu0 %v199
    %345 = vmatpush1.msra.mxu0 %v198
    %346 = vmatprep.subr.mxu0 %v203
    %347 = vmatpush1.msra.mxu0 %v202
    %348 = vmatprep.subr.mxu0 %v207
    %349 = vmatpush1.msra.mxu0 %v206
    %350 = vmatprep.subr.mxu0 %v211
    %351 = vmatpush1.msra.mxu0 %v210
    %352 = vmatprep.subr.mxu0 %v215
    %353 = vmatpush1.msra.mxu0 %v214
    %354 = vmatprep.subr.mxu0 %v219
    %355 = vmatpush1.msra.mxu0 %v218
    %356 = vmatprep.subr.mxu0 %v223
    %357 = vmatpush1.msra.mxu0 %v222
    %358 = vmatprep.subr.mxu0 %v227
    %359 = vmatpush1.msra.mxu0 %v226
    %360 = vmatprep.subr.mxu0 %v231
    %361 = vmatpush1.msra.mxu0 %v230
    %362 = vmatprep.subr.mxu0 %v235
    %363 = vmatpush1.msra.mxu0 %v234
    %364 = vmatprep.subr.mxu0 %v239
    %365 = vmatpush1.msra.mxu0 %v238
    %366 = vmatprep.subr.mxu0 %v243
    %367 = vmatpush1.msra.mxu0 %v242
    %368 = vmatprep.subr.mxu0 %v247
    %369 = vmatpush1.msra.mxu0 %v246
    %370 = vmatprep.subr.mxu0 %v251
    %371 = vmatpush1.msra.mxu0 %v250
    %372 = vmatprep.subr.mxu0 %v255
    %373 = vmatpush1.msra.mxu0 %v254
    %374 = vmatprep.subr.mxu0 %v259
    %375 = vmatpush1.msra.mxu0 %v258
    %376 = vmatprep.subr.mxu0 %v263
    %377 = vmatpush1.msra.mxu0 %v262
    %378 = vmatprep.subr.mxu0 %v267
    %379 = vmatpush1.msra.mxu0 %v266
    %380 = vmatprep.subr.mxu0 %v271
    %381 = vmatpush1.msra.mxu0 %v270
    %382 = vmatprep.subr.mxu0 %v275
    %383 = vmatpush1.msra.mxu0 %v274
    %384 = vmatprep.subr.mxu0 %v279
    %385 = vmatpush1.msra.mxu0 %v278
    %386 = vmatprep.subr.mxu0 %v283
    %387 = vmatpush1.msra.mxu0 %v282
    %388 = vmatprep.subr.mxu0 %v287
    %389 = vmatpush1.msra.mxu0 %v286
    %390 = vmatprep.subr.mxu0 %v291
    %391 = vmatpush1.msra.mxu0 %v290
    %392 = vmatprep.subr.mxu0 %v295
    %393 = vmatpush1.msra.mxu0 %v294
    %394 = vmatprep.subr.mxu0 %v299
    %395 = vmatpush1.msra.mxu0 %v298
    %396 = vmatprep.mubr.f32.mxu0 0.0
    %397 = vmatmul.mubr.f32.gmra.mrb[0].mxu0 0.0
    %v398 = vpop.f32.mrb[0].mxu0
    %v399 = vadd.f32 %v307, %v398
    %v400 = vpop.f32.mrb[0].mxu0
    %v401 = vadd.f32 %v311, %v400
    %402 = vdwg.mxu0
    %403 = vmatprep.subr.mxu0 %v177
    %404 = vmatpush1.msra.mxu0 %v176
    %405 = vmatprep.subr.mxu0 %v181
    %406 = vmatpush1.msra.mxu0 %v180
    %407 = vmatprep.subr.mxu0 %v185
    %408 = vmatpush1.msra.mxu0 %v184
    %409 = vmatprep.subr.mxu0 %v189
    %410 = vmatpush1.msra.mxu0 %v188
    %411 = vmatprep.subr.mxu0 %v193
    %412 = vmatpush1.msra.mxu0 %v192
    %413 = vmatprep.subr.mxu0 %v197
    %414 = vmatpush1.msra.mxu0 %v196
    %415 = vmatprep.subr.mxu0 %v201
    %416 = vmatpush1.msra.mxu0 %v200
    %417 = vmatprep.subr.mxu0 %v205
    %418 = vmatpush1.msra.mxu0 %v204
    %419 = vmatprep.subr.mxu0 %v209
    %420 = vmatpush1.msra.mxu0 %v208
    %421 = vmatprep.subr.mxu0 %v213
    %422 = vmatpush1.msra.mxu0 %v212
    %423 = vmatprep.subr.mxu0 %v217
    %424 = vmatpush1.msra.mxu0 %v216
    %425 = vmatprep.subr.mxu0 %v221
    %426 = vmatpush1.msra.mxu0 %v220
    %427 = vmatprep.subr.mxu0 %v225
    %428 = vmatpush1.msra.mxu0 %v224
    %429 = vmatprep.subr.mxu0 %v229
    %430 = vmatpush1.msra.mxu0 %v228
    %431 = vmatprep.subr.mxu0 %v233
    %432 = vmatpush1.msra.mxu0 %v232
    %433 = vmatprep.subr.mxu0 %v237
    %434 = vmatpush1.msra.mxu0 %v236
    %435 = vmatprep.subr.mxu0 %v241
    %436 = vmatpush1.msra.mxu0 %v240
    %437 = vmatprep.subr.mxu0 %v245
    %438 = vmatpush1.msra.mxu0 %v244
    %439 = vmatprep.subr.mxu0 %v249
    %440 = vmatpush1.msra.mxu0 %v248
    %441 = vmatprep.subr.mxu0 %v253
    %442 = vmatpush1.msra.mxu0 %v252
    %443 = vmatprep.subr.mxu0 %v257
    %444 = vmatpush1.msra.mxu0 %v256
    %445 = vmatprep.subr.mxu0 %v261
    %446 = vmatpush1.msra.mxu0 %v260
    %447 = vmatprep.subr.mxu0 %v265
    %448 = vmatpush1.msra.mxu0 %v264
    %449 = vmatprep.subr.mxu0 %v269
    %450 = vmatpush1.msra.mxu0 %v268
    %451 = vmatprep.subr.mxu0 %v273
    %452 = vmatpush1.msra.mxu0 %v272
    %453 = vmatprep.subr.mxu0 %v277
    %454 = vmatpush1.msra.mxu0 %v276
    %455 = vmatprep.subr.mxu0 %v281
    %456 = vmatpush1.msra.mxu0 %v280
    %457 = vmatprep.subr.mxu0 %v285
    %458 = vmatpush1.msra.mxu0 %v284
    %459 = vmatprep.subr.mxu0 %v289
    %460 = vmatpush1.msra.mxu0 %v288
    %461 = vmatprep.subr.mxu0 %v293
    %462 = vmatpush1.msra.mxu0 %v292
    %463 = vmatprep.subr.mxu0 %v297
    %464 = vmatpush1.msra.mxu0 %v296
    %465 = vmatprep.subr.mxu0 %v301
    %466 = vmatpush1.msra.mxu0 %v300
    %467 = vmatprep.mubr.f32.mxu0 0.0
    %468 = vmatmul.mubr.f32.gmra.mrb[0].mxu0 0.0
    %v469 = vpop.f32.mrb[0].mxu0
    %v470 = vadd.f32 %v315, %v469
    %v471 = vpop.f32.mrb[0].mxu0
    %v472 = vadd.f32 %v319, %v471
    %473 = vdwg.mxu0
    %v474 = vxor.u32 %v399, 2147483648
    %v475 = vmul.f32 %v474, 1.442695
    %v476 = vpow.pop %v475
    %v477 = vadd.f32 %v476, 1.0
    %v478 = vrcp.pop %v477
    %v479 = vmul.f32 1.0, %v478
    %v480 = vxor.u32 %v401, 2147483648
    %v481 = vmul.f32 %v480, 1.442695
    %v482 = vpow.pop %v481
    %v483 = vadd.f32 %v482, 1.0
    %v484 = vrcp.pop %v483
    %v485 = vmul.f32 1.0, %v484
    %v486 = vtanh.pop %v470
    %v487 = vxor.u32 %v472, 2147483648
    %v488 = vmul.f32 %v487, 1.442695
    %v489 = vpow.pop %v488
    %v490 = vadd.f32 %v489, 1.0
    %v491 = vrcp.pop %v490
    %v492 = vmul.f32 1.0, %v491
    %v493 = vmul.f32 %v485, 0.0
    %v494 = vmul.f32 %v479, %v486
    %v495 = vadd.f32 %v493, %v494
    %v496 = vtanh.pop %v495
    %v497 = vmul.f32 %v492, %v496
    %v499 = vcombine.high %v497, %v497
    %v501 = vunpack.c.l.s4 1966171168
    %v502 = vunpack.c.0.s8 %v501
    %v503 = vlaneseq
    %v504 = vshrl.u32 %v503, 7
    %v505 = vsub.s32 %v502, %v504
    %v506 = vrot.slane %v497, %v505
    %v508 = vunpack.c.l.s4 1966171168
    %v509 = vunpack.c.0.s8 %v508
    %v510 = vlaneseq
    %v511 = vshrl.u32 %v510, 7
    %v512 = vsub.s32 %v509, %v511
    %v513 = vrot.slane %v499, %v512
    %v514 = vcombine.high %v506, %v506
    %v515 = vcombine.high %v513, %v513
    %v517 = vunpack.c.l.s4 1966171168
    %v518 = vunpack.c.0.s8 %v517
    %v519 = vlaneseq
    %v520 = vshrl.u32 %v519, 7
    %v521 = vsub.s32 %v518, %v520
    %v522 = vrot.slane %v506, %v521
    %v524 = vunpack.c.l.s4 1966171168
    %v525 = vunpack.c.0.s8 %v524
    %v526 = vlaneseq
    %v527 = vshrl.u32 %v526, 7
    %v528 = vsub.s32 %v525, %v527
    %v529 = vrot.slane %v513, %v528
    %v531 = vunpack.c.l.s4 1966171168
    %v532 = vunpack.c.0.s8 %v531
    %v533 = vlaneseq
    %v534 = vshrl.u32 %v533, 7
    %v535 = vsub.s32 %v532, %v534
    %v536 = vrot.slane %v514, %v535
    %v538 = vunpack.c.l.s4 1966171168
    %v539 = vunpack.c.0.s8 %v538
    %v540 = vlaneseq
    %v541 = vshrl.u32 %v540, 7
    %v542 = vsub.s32 %v539, %v541
    %v543 = vrot.slane %v515, %v542
    %v544 = vcombine.high %v522, %v522
    %v545 = vcombine.high %v529, %v529
    %v546 = vcombine.high %v536, %v536
    %v547 = vcombine.high %v543, %v543
    %556 = vmatprep.subr.mxu0 0.0
    %557 = vmatpush1.xpose.msra.mxu0 %v46
    %558 = vmatprep.subr.mxu0 0.0
    %559 = vmatpush1.xpose.msra.mxu0 %v47
    %560 = vmatprep.subr.mxu0 0.0
    %561 = vmatpush1.xpose.msra.mxu0 %v48
    %562 = vmatprep.subr.mxu0 0.0
    %563 = vmatpush1.xpose.msra.mxu0 %v49
    %564 = vmatprep.subr.mxu0 0.0
    %565 = vmatpush1.xpose.msra.mxu0 %v50
    %566 = vmatprep.subr.mxu0 0.0
    %567 = vmatpush1.xpose.msra.mxu0 %v51
    %568 = vmatprep.subr.mxu0 0.0
    %569 = vmatpush1.xpose.msra.mxu0 %v52
    %570 = vmatprep.subr.mxu0 0.0
    %571 = vmatpush1.xpose.msra.mxu0 %v53
    %572 = vmatprep.subr.mxu0 0.0
    %573 = vmatpush1.xpose.msra.mxu0 %v54
    %574 = vmatprep.subr.mxu0 0.0
    %575 = vmatpush1.xpose.msra.mxu0 %v55
    %576 = vmatprep.subr.mxu0 0.0
    %577 = vmatpush1.xpose.msra.mxu0 %v56
    %578 = vmatprep.subr.mxu0 0.0
    %579 = vmatpush1.xpose.msra.mxu0 %v57
    %580 = vmatprep.subr.mxu0 0.0
    %581 = vmatpush1.xpose.msra.mxu0 %v58
    %582 = vmatprep.subr.mxu0 0.0
    %583 = vmatpush1.xpose.msra.mxu0 %v59
    %584 = vmatprep.subr.mxu0 0.0
    %585 = vmatpush1.xpose.msra.mxu0 %v60
    %586 = vmatprep.subr.mxu0 0.0
    %587 = vmatpush1.xpose.msra.mxu0 %v61
    %588 = vmatprep.subr.mxu0 0.0
    %589 = vmatpush1.xpose.msra.mxu0 0.0
    %590 = vmatprep.subr.mxu0 0.0
    %591 = vmatpush1.xpose.msra.mxu0 0.0
    %592 = vmatprep.subr.mxu0 0.0
    %593 = vmatpush1.xpose.msra.mxu0 0.0
    %594 = vmatprep.subr.mxu0 0.0
    %595 = vmatpush1.xpose.msra.mxu0 0.0
    %596 = vmatprep.subr.mxu0 0.0
    %597 = vmatpush1.xpose.msra.mxu0 0.0
    %598 = vmatprep.subr.mxu0 0.0
    %599 = vmatpush1.xpose.msra.mxu0 0.0
    %600 = vmatprep.subr.mxu0 0.0
    %601 = vmatpush1.xpose.msra.mxu0 0.0
    %602 = vmatprep.subr.mxu0 0.0
    %603 = vmatpush1.xpose.msra.mxu0 0.0
    %604 = vmatprep.subr.mxu0 0.0
    %605 = vmatpush1.xpose.msra.mxu0 0.0
    %606 = vmatprep.subr.mxu0 0.0
    %607 = vmatpush1.xpose.msra.mxu0 0.0
    %608 = vmatprep.subr.mxu0 0.0
    %609 = vmatpush1.xpose.msra.mxu0 0.0
    %610 = vmatprep.subr.mxu0 0.0
    %611 = vmatpush1.xpose.msra.mxu0 0.0
    %612 = vmatprep.subr.mxu0 0.0
    %613 = vmatpush1.xpose.msra.mxu0 0.0
    %614 = vmatprep.subr.mxu0 0.0
    %615 = vmatpush1.xpose.msra.mxu0 0.0
    %616 = vmatprep.subr.mxu0 0.0
    %617 = vmatpush1.xpose.msra.mxu0 0.0
    %618 = vmatprep.subr.mxu0 0.0
    %619 = vmatpush1.xpose.msra.mxu0 0.0
    %620 = vmatprep.mubr.f32.mxu0 0.0
    %621 = vmatmul.mubr.f32.gmra.mrb[0].mxu0 %v522
    %v622 = vpop.f32.mrb[0].mxu0
    %v623 = vadd.f32 0.0, %v622
    %v624 = vpop.f32.mrb[0].mxu0
    %625 = vdwg.mxu0
    %626 = vmatprep.subr.mxu0 0.0
    %627 = vmatpush1.xpose.msra.mxu0 %v62
    %628 = vmatprep.subr.mxu0 0.0
    %629 = vmatpush1.xpose.msra.mxu0 %v63
    %630 = vmatprep.subr.mxu0 0.0
    %631 = vmatpush1.xpose.msra.mxu0 %v64
    %632 = vmatprep.subr.mxu0 0.0
    %633 = vmatpush1.xpose.msra.mxu0 %v65
    %634 = vmatprep.subr.mxu0 0.0
    %635 = vmatpush1.xpose.msra.mxu0 %v66
    %636 = vmatprep.subr.mxu0 0.0
    %637 = vmatpush1.xpose.msra.mxu0 %v67
    %638 = vmatprep.subr.mxu0 0.0
    %639 = vmatpush1.xpose.msra.mxu0 %v68
    %640 = vmatprep.subr.mxu0 0.0
    %641 = vmatpush1.xpose.msra.mxu0 %v69
    %642 = vmatprep.subr.mxu0 0.0
    %643 = vmatpush1.xpose.msra.mxu0 %v70
    %644 = vmatprep.subr.mxu0 0.0
    %645 = vmatpush1.xpose.msra.mxu0 %v71
    %646 = vmatprep.subr.mxu0 0.0
    %647 = vmatpush1.xpose.msra.mxu0 %v72
    %648 = vmatprep.subr.mxu0 0.0
    %649 = vmatpush1.xpose.msra.mxu0 %v73
    %650 = vmatprep.subr.mxu0 0.0
    %651 = vmatpush1.xpose.msra.mxu0 %v74
    %652 = vmatprep.subr.mxu0 0.0
    %653 = vmatpush1.xpose.msra.mxu0 %v75
    %654 = vmatprep.subr.mxu0 0.0
    %655 = vmatpush1.xpose.msra.mxu0 %v76
    %656 = vmatprep.subr.mxu0 0.0
    %657 = vmatpush1.xpose.msra.mxu0 %v77
    %658 = vmatprep.subr.mxu0 0.0
    %659 = vmatpush1.xpose.msra.mxu0 0.0
    %660 = vmatprep.subr.mxu0 0.0
    %661 = vmatpush1.xpose.msra.mxu0 0.0
    %662 = vmatprep.subr.mxu0 0.0
    %663 = vmatpush1.xpose.msra.mxu0 0.0
    %664 = vmatprep.subr.mxu0 0.0
    %665 = vmatpush1.xpose.msra.mxu0 0.0
    %666 = vmatprep.subr.mxu0 0.0
    %667 = vmatpush1.xpose.msra.mxu0 0.0
    %668 = vmatprep.subr.mxu0 0.0
    %669 = vmatpush1.xpose.msra.mxu0 0.0
    %670 = vmatprep.subr.mxu0 0.0
    %671 = vmatpush1.xpose.msra.mxu0 0.0
    %672 = vmatprep.subr.mxu0 0.0
    %673 = vmatpush1.xpose.msra.mxu0 0.0
    %674 = vmatprep.subr.mxu0 0.0
    %675 = vmatpush1.xpose.msra.mxu0 0.0
    %676 = vmatprep.subr.mxu0 0.0
    %677 = vmatpush1.xpose.msra.mxu0 0.0
    %678 = vmatprep.subr.mxu0 0.0
    %679 = vmatpush1.xpose.msra.mxu0 0.0
    %680 = vmatprep.subr.mxu0 0.0
    %681 = vmatpush1.xpose.msra.mxu0 0.0
    %682 = vmatprep.subr.mxu0 0.0
    %683 = vmatpush1.xpose.msra.mxu0 0.0
    %684 = vmatprep.subr.mxu0 0.0
    %685 = vmatpush1.xpose.msra.mxu0 0.0
    %686 = vmatprep.subr.mxu0 0.0
    %687 = vmatpush1.xpose.msra.mxu0 0.0
    %688 = vmatprep.subr.mxu0 0.0
    %689 = vmatpush1.xpose.msra.mxu0 0.0
    %690 = vmatprep.mubr.f32.mxu0 0.0
    %691 = vmatmul.mubr.f32.gmra.mrb[0].mxu0 %v536
    %v692 = vpop.f32.mrb[0].mxu0
    %v693 = vadd.f32 0.0, %v692
    %v694 = vpop.f32.mrb[0].mxu0
    %695 = vdwg.mxu0
    %696 = vmatprep.subr.mxu0 0.0
    %697 = vmatpush1.xpose.msra.mxu0 %v78
    %698 = vmatprep.subr.mxu0 0.0
    %699 = vmatpush1.xpose.msra.mxu0 %v79
    %700 = vmatprep.subr.mxu0 0.0
    %701 = vmatpush1.xpose.msra.mxu0 %v80
    %702 = vmatprep.subr.mxu0 0.0
    %703 = vmatpush1.xpose.msra.mxu0 %v81
    %704 = vmatprep.subr.mxu0 0.0
    %705 = vmatpush1.xpose.msra.mxu0 %v82
    %706 = vmatprep.subr.mxu0 0.0
    %707 = vmatpush1.xpose.msra.mxu0 %v83
    %708 = vmatprep.subr.mxu0 0.0
    %709 = vmatpush1.xpose.msra.mxu0 %v84
    %710 = vmatprep.subr.mxu0 0.0
    %711 = vmatpush1.xpose.msra.mxu0 %v85
    %712 = vmatprep.subr.mxu0 0.0
    %713 = vmatpush1.xpose.msra.mxu0 %v86
    %714 = vmatprep.subr.mxu0 0.0
    %715 = vmatpush1.xpose.msra.mxu0 %v87
    %716 = vmatprep.subr.mxu0 0.0
    %717 = vmatpush1.xpose.msra.mxu0 %v88
    %718 = vmatprep.subr.mxu0 0.0
    %719 = vmatpush1.xpose.msra.mxu0 %v89
    %720 = vmatprep.subr.mxu0 0.0
    %721 = vmatpush1.xpose.msra.mxu0 %v90
    %722 = vmatprep.subr.mxu0 0.0
    %723 = vmatpush1.xpose.msra.mxu0 %v91
    %724 = vmatprep.subr.mxu0 0.0
    %725 = vmatpush1.xpose.msra.mxu0 %v92
    %726 = vmatprep.subr.mxu0 0.0
    %727 = vmatpush1.xpose.msra.mxu0 %v93
    %728 = vmatprep.subr.mxu0 0.0
    %729 = vmatpush1.xpose.msra.mxu0 0.0
    %730 = vmatprep.subr.mxu0 0.0
    %731 = vmatpush1.xpose.msra.mxu0 0.0
    %732 = vmatprep.subr.mxu0 0.0
    %733 = vmatpush1.xpose.msra.mxu0 0.0
    %734 = vmatprep.subr.mxu0 0.0
    %735 = vmatpush1.xpose.msra.mxu0 0.0
    %736 = vmatprep.subr.mxu0 0.0
    %737 = vmatpush1.xpose.msra.mxu0 0.0
    %738 = vmatprep.subr.mxu0 0.0
    %739 = vmatpush1.xpose.msra.mxu0 0.0
    %740 = vmatprep.subr.mxu0 0.0
    %741 = vmatpush1.xpose.msra.mxu0 0.0
    %742 = vmatprep.subr.mxu0 0.0
    %743 = vmatpush1.xpose.msra.mxu0 0.0
    %744 = vmatprep.subr.mxu0 0.0
    %745 = vmatpush1.xpose.msra.mxu0 0.0
    %746 = vmatprep.subr.mxu0 0.0
    %747 = vmatpush1.xpose.msra.mxu0 0.0
    %748 = vmatprep.subr.mxu0 0.0
    %749 = vmatpush1.xpose.msra.mxu0 0.0
    %750 = vmatprep.subr.mxu0 0.0
    %751 = vmatpush1.xpose.msra.mxu0 0.0
    %752 = vmatprep.subr.mxu0 0.0
    %753 = vmatpush1.xpose.msra.mxu0 0.0
    %754 = vmatprep.subr.mxu0 0.0
    %755 = vmatpush1.xpose.msra.mxu0 0.0
    %756 = vmatprep.subr.mxu0 0.0
    %757 = vmatpush1.xpose.msra.mxu0 0.0
    %758 = vmatprep.subr.mxu0 0.0
    %759 = vmatpush1.xpose.msra.mxu0 0.0
    %760 = vmatprep.mubr.f32.mxu0 0.0
    %761 = vmatmul.mubr.f32.gmra.mrb[0].mxu0 %v544
    %v762 = vpop.f32.mrb[0].mxu0
    %v763 = vadd.f32 0.0, %v762
    %v764 = vpop.f32.mrb[0].mxu0
    %765 = vdwg.mxu0
    %766 = vmatprep.subr.mxu0 0.0
    %767 = vmatpush1.xpose.msra.mxu0 %v94
    %768 = vmatprep.subr.mxu0 0.0
    %769 = vmatpush1.xpose.msra.mxu0 %v95
    %770 = vmatprep.subr.mxu0 0.0
    %771 = vmatpush1.xpose.msra.mxu0 %v96
    %772 = vmatprep.subr.mxu0 0.0
    %773 = vmatpush1.xpose.msra.mxu0 %v97
    %774 = vmatprep.subr.mxu0 0.0
    %775 = vmatpush1.xpose.msra.mxu0 %v98
    %776 = vmatprep.subr.mxu0 0.0
    %777 = vmatpush1.xpose.msra.mxu0 %v99
    %778 = vmatprep.subr.mxu0 0.0
    %779 = vmatpush1.xpose.msra.mxu0 %v100
    %780 = vmatprep.subr.mxu0 0.0
    %781 = vmatpush1.xpose.msra.mxu0 %v101
    %782 = vmatprep.subr.mxu0 0.0
    %783 = vmatpush1.xpose.msra.mxu0 %v102
    %784 = vmatprep.subr.mxu0 0.0
    %785 = vmatpush1.xpose.msra.mxu0 %v103
    %786 = vmatprep.subr.mxu0 0.0
    %787 = vmatpush1.xpose.msra.mxu0 %v104
    %788 = vmatprep.subr.mxu0 0.0
    %789 = vmatpush1.xpose.msra.mxu0 %v105
    %790 = vmatprep.subr.mxu0 0.0
    %791 = vmatpush1.xpose.msra.mxu0 %v106
    %792 = vmatprep.subr.mxu0 0.0
    %793 = vmatpush1.xpose.msra.mxu0 %v107
    %794 = vmatprep.subr.mxu0 0.0
    %795 = vmatpush1.xpose.msra.mxu0 %v108
    %796 = vmatprep.subr.mxu0 0.0
    %797 = vmatpush1.xpose.msra.mxu0 %v109
    %798 = vmatprep.subr.mxu0 0.0
    %799 = vmatpush1.xpose.msra.mxu0 0.0
    %800 = vmatprep.subr.mxu0 0.0
    %801 = vmatpush1.xpose.msra.mxu0 0.0
    %802 = vmatprep.subr.mxu0 0.0
    %803 = vmatpush1.xpose.msra.mxu0 0.0
    %804 = vmatprep.subr.mxu0 0.0
    %805 = vmatpush1.xpose.msra.mxu0 0.0
    %806 = vmatprep.subr.mxu0 0.0
    %807 = vmatpush1.xpose.msra.mxu0 0.0
    %808 = vmatprep.subr.mxu0 0.0
    %809 = vmatpush1.xpose.msra.mxu0 0.0
    %810 = vmatprep.subr.mxu0 0.0
    %811 = vmatpush1.xpose.msra.mxu0 0.0
    %812 = vmatprep.subr.mxu0 0.0
    %813 = vmatpush1.xpose.msra.mxu0 0.0
    %814 = vmatprep.subr.mxu0 0.0
    %815 = vmatpush1.xpose.msra.mxu0 0.0
    %816 = vmatprep.subr.mxu0 0.0
    %817 = vmatpush1.xpose.msra.mxu0 0.0
    %818 = vmatprep.subr.mxu0 0.0
    %819 = vmatpush1.xpose.msra.mxu0 0.0
    %820 = vmatprep.subr.mxu0 0.0
    %821 = vmatpush1.xpose.msra.mxu0 0.0
    %822 = vmatprep.subr.mxu0 0.0
    %823 = vmatpush1.xpose.msra.mxu0 0.0
    %824 = vmatprep.subr.mxu0 0.0
    %825 = vmatpush1.xpose.msra.mxu0 0.0
    %826 = vmatprep.subr.mxu0 0.0
    %827 = vmatpush1.xpose.msra.mxu0 0.0
    %828 = vmatprep.subr.mxu0 0.0
    %829 = vmatpush1.xpose.msra.mxu0 0.0
    %830 = vmatprep.mubr.f32.mxu0 0.0
    %831 = vmatmul.mubr.f32.gmra.mrb[0].mxu0 %v546
    %v832 = vpop.f32.mrb[0].mxu0
    %v833 = vadd.f32 0.0, %v832
    %v834 = vpop.f32.mrb[0].mxu0
    %835 = vdwg.mxu0
    %836 = vmatprep.subr.mxu0 0.0
    %837 = vmatpush1.xpose.msra.mxu0 %v110
    %838 = vmatprep.subr.mxu0 0.0
    %839 = vmatpush1.xpose.msra.mxu0 %v111
    %840 = vmatprep.subr.mxu0 0.0
    %841 = vmatpush1.xpose.msra.mxu0 %v112
    %842 = vmatprep.subr.mxu0 0.0
    %843 = vmatpush1.xpose.msra.mxu0 %v113
    %844 = vmatprep.subr.mxu0 0.0
    %845 = vmatpush1.xpose.msra.mxu0 %v114
    %846 = vmatprep.subr.mxu0 0.0
    %847 = vmatpush1.xpose.msra.mxu0 %v115
    %848 = vmatprep.subr.mxu0 0.0
    %849 = vmatpush1.xpose.msra.mxu0 %v116
    %850 = vmatprep.subr.mxu0 0.0
    %851 = vmatpush1.xpose.msra.mxu0 %v117
    %852 = vmatprep.subr.mxu0 0.0
    %853 = vmatpush1.xpose.msra.mxu0 %v118
    %854 = vmatprep.subr.mxu0 0.0
    %855 = vmatpush1.xpose.msra.mxu0 %v119
    %856 = vmatprep.subr.mxu0 0.0
    %857 = vmatpush1.xpose.msra.mxu0 %v120
    %858 = vmatprep.subr.mxu0 0.0
    %859 = vmatpush1.xpose.msra.mxu0 %v121
    %860 = vmatprep.subr.mxu0 0.0
    %861 = vmatpush1.xpose.msra.mxu0 %v122
    %862 = vmatprep.subr.mxu0 0.0
    %863 = vmatpush1.xpose.msra.mxu0 %v123
    %864 = vmatprep.subr.mxu0 0.0
    %865 = vmatpush1.xpose.msra.mxu0 %v124
    %866 = vmatprep.subr.mxu0 0.0
    %867 = vmatpush1.xpose.msra.mxu0 %v125
    %868 = vmatprep.subr.mxu0 0.0
    %869 = vmatpush1.xpose.msra.mxu0 0.0
    %870 = vmatprep.subr.mxu0 0.0
    %871 = vmatpush1.xpose.msra.mxu0 0.0
    %872 = vmatprep.subr.mxu0 0.0
    %873 = vmatpush1.xpose.msra.mxu0 0.0
    %874 = vmatprep.subr.mxu0 0.0
    %875 = vmatpush1.xpose.msra.mxu0 0.0
    %876 = vmatprep.subr.mxu0 0.0
    %877 = vmatpush1.xpose.msra.mxu0 0.0
    %878 = vmatprep.subr.mxu0 0.0
    %879 = vmatpush1.xpose.msra.mxu0 0.0
    %880 = vmatprep.subr.mxu0 0.0
    %881 = vmatpush1.xpose.msra.mxu0 0.0
    %882 = vmatprep.subr.mxu0 0.0
    %883 = vmatpush1.xpose.msra.mxu0 0.0
    %884 = vmatprep.subr.mxu0 0.0
    %885 = vmatpush1.xpose.msra.mxu0 0.0
    %886 = vmatprep.subr.mxu0 0.0
    %887 = vmatpush1.xpose.msra.mxu0 0.0
    %888 = vmatprep.subr.mxu0 0.0
    %889 = vmatpush1.xpose.msra.mxu0 0.0
    %890 = vmatprep.subr.mxu0 0.0
    %891 = vmatpush1.xpose.msra.mxu0 0.0
    %892 = vmatprep.subr.mxu0 0.0
    %893 = vmatpush1.xpose.msra.mxu0 0.0
    %894 = vmatprep.subr.mxu0 0.0
    %895 = vmatpush1.xpose.msra.mxu0 0.0
    %896 = vmatprep.subr.mxu0 0.0
    %897 = vmatpush1.xpose.msra.mxu0 0.0
    %898 = vmatprep.subr.mxu0 0.0
    %899 = vmatpush1.xpose.msra.mxu0 0.0
    %900 = vmatprep.mubr.f32.mxu0 0.0
    %901 = vmatmul.mubr.f32.gmra.mrb[0].mxu0 %v529
    %v902 = vpop.f32.mrb[0].mxu0
    %v903 = vadd.f32 0.0, %v902
    %v904 = vpop.f32.mrb[0].mxu0
    %905 = vdwg.mxu0
    %906 = vmatprep.subr.mxu0 0.0
    %907 = vmatpush1.xpose.msra.mxu0 %v126
    %908 = vmatprep.subr.mxu0 0.0
    %909 = vmatpush1.xpose.msra.mxu0 %v127
    %910 = vmatprep.subr.mxu0 0.0
    %911 = vmatpush1.xpose.msra.mxu0 %v128
    %912 = vmatprep.subr.mxu0 0.0
    %913 = vmatpush1.xpose.msra.mxu0 %v129
    %914 = vmatprep.subr.mxu0 0.0
    %915 = vmatpush1.xpose.msra.mxu0 %v130
    %916 = vmatprep.subr.mxu0 0.0
    %917 = vmatpush1.xpose.msra.mxu0 %v131
    %918 = vmatprep.subr.mxu0 0.0
    %919 = vmatpush1.xpose.msra.mxu0 %v132
    %920 = vmatprep.subr.mxu0 0.0
    %921 = vmatpush1.xpose.msra.mxu0 %v133
    %922 = vmatprep.subr.mxu0 0.0
    %923 = vmatpush1.xpose.msra.mxu0 %v134
    %924 = vmatprep.subr.mxu0 0.0
    %925 = vmatpush1.xpose.msra.mxu0 %v135
    %926 = vmatprep.subr.mxu0 0.0
    %927 = vmatpush1.xpose.msra.mxu0 %v136
    %928 = vmatprep.subr.mxu0 0.0
    %929 = vmatpush1.xpose.msra.mxu0 %v137
    %930 = vmatprep.subr.mxu0 0.0
    %931 = vmatpush1.xpose.msra.mxu0 %v138
    %932 = vmatprep.subr.mxu0 0.0
    %933 = vmatpush1.xpose.msra.mxu0 %v139
    %934 = vmatprep.subr.mxu0 0.0
    %935 = vmatpush1.xpose.msra.mxu0 %v140
    %936 = vmatprep.subr.mxu0 0.0
    %937 = vmatpush1.xpose.msra.mxu0 %v141
    %938 = vmatprep.subr.mxu0 0.0
    %939 = vmatpush1.xpose.msra.mxu0 0.0
    %940 = vmatprep.subr.mxu0 0.0
    %941 = vmatpush1.xpose.msra.mxu0 0.0
    %942 = vmatprep.subr.mxu0 0.0
    %943 = vmatpush1.xpose.msra.mxu0 0.0
    %944 = vmatprep.subr.mxu0 0.0
    %945 = vmatpush1.xpose.msra.mxu0 0.0
    %946 = vmatprep.subr.mxu0 0.0
    %947 = vmatpush1.xpose.msra.mxu0 0.0
    %948 = vmatprep.subr.mxu0 0.0
    %949 = vmatpush1.xpose.msra.mxu0 0.0
    %950 = vmatprep.subr.mxu0 0.0
    %951 = vmatpush1.xpose.msra.mxu0 0.0
    %952 = vmatprep.subr.mxu0 0.0
    %953 = vmatpush1.xpose.msra.mxu0 0.0
    %954 = vmatprep.subr.mxu0 0.0
    %955 = vmatpush1.xpose.msra.mxu0 0.0
    %956 = vmatprep.subr.mxu0 0.0
    %957 = vmatpush1.xpose.msra.mxu0 0.0
    %958 = vmatprep.subr.mxu0 0.0
    %959 = vmatpush1.xpose.msra.mxu0 0.0
    %960 = vmatprep.subr.mxu0 0.0
    %961 = vmatpush1.xpose.msra.mxu0 0.0
    %962 = vmatprep.subr.mxu0 0.0
    %963 = vmatpush1.xpose.msra.mxu0 0.0
    %964 = vmatprep.subr.mxu0 0.0
    %965 = vmatpush1.xpose.msra.mxu0 0.0
    %966 = vmatprep.subr.mxu0 0.0
    %967 = vmatpush1.xpose.msra.mxu0 0.0
    %968 = vmatprep.subr.mxu0 0.0
    %969 = vmatpush1.xpose.msra.mxu0 0.0
    %970 = vmatprep.mubr.f32.mxu0 0.0
    %971 = vmatmul.mubr.f32.gmra.mrb[0].mxu0 %v543
    %v972 = vpop.f32.mrb[0].mxu0
    %v973 = vadd.f32 0.0, %v972
    %v974 = vpop.f32.mrb[0].mxu0
    %975 = vdwg.mxu0
    %976 = vmatprep.subr.mxu0 0.0
    %977 = vmatpush1.xpose.msra.mxu0 %v142
    %978 = vmatprep.subr.mxu0 0.0
    %979 = vmatpush1.xpose.msra.mxu0 %v143
    %980 = vmatprep.subr.mxu0 0.0
    %981 = vmatpush1.xpose.msra.mxu0 %v144
    %982 = vmatprep.subr.mxu0 0.0
    %983 = vmatpush1.xpose.msra.mxu0 %v145
    %984 = vmatprep.subr.mxu0 0.0
    %985 = vmatpush1.xpose.msra.mxu0 %v146
    %986 = vmatprep.subr.mxu0 0.0
    %987 = vmatpush1.xpose.msra.mxu0 %v147
    %988 = vmatprep.subr.mxu0 0.0
    %989 = vmatpush1.xpose.msra.mxu0 %v148
    %990 = vmatprep.subr.mxu0 0.0
    %991 = vmatpush1.xpose.msra.mxu0 %v149
    %992 = vmatprep.subr.mxu0 0.0
    %993 = vmatpush1.xpose.msra.mxu0 %v150
    %994 = vmatprep.subr.mxu0 0.0
    %995 = vmatpush1.xpose.msra.mxu0 %v151
    %996 = vmatprep.subr.mxu0 0.0
    %997 = vmatpush1.xpose.msra.mxu0 %v152
    %998 = vmatprep.subr.mxu0 0.0
    %999 = vmatpush1.xpose.msra.mxu0 %v153
    %1000 = vmatprep.subr.mxu0 0.0
    %1001 = vmatpush1.xpose.msra.mxu0 %v154
    %1002 = vmatprep.subr.mxu0 0.0
    %1003 = vmatpush1.xpose.msra.mxu0 %v155
    %1004 = vmatprep.subr.mxu0 0.0
    %1005 = vmatpush1.xpose.msra.mxu0 %v156
    %1006 = vmatprep.subr.mxu0 0.0
    %1007 = vmatpush1.xpose.msra.mxu0 %v157
    %1008 = vmatprep.subr.mxu0 0.0
    %1009 = vmatpush1.xpose.msra.mxu0 0.0
    %1010 = vmatprep.subr.mxu0 0.0
    %1011 = vmatpush1.xpose.msra.mxu0 0.0
    %1012 = vmatprep.subr.mxu0 0.0
    %1013 = vmatpush1.xpose.msra.mxu0 0.0
    %1014 = vmatprep.subr.mxu0 0.0
    %1015 = vmatpush1.xpose.msra.mxu0 0.0
    %1016 = vmatprep.subr.mxu0 0.0
    %1017 = vmatpush1.xpose.msra.mxu0 0.0
    %1018 = vmatprep.subr.mxu0 0.0
    %1019 = vmatpush1.xpose.msra.mxu0 0.0
    %1020 = vmatprep.subr.mxu0 0.0
    %1021 = vmatpush1.xpose.msra.mxu0 0.0
    %1022 = vmatprep.subr.mxu0 0.0
    %1023 = vmatpush1.xpose.msra.mxu0 0.0
    %1024 = vmatprep.subr.mxu0 0.0
    %1025 = vmatpush1.xpose.msra.mxu0 0.0
    %1026 = vmatprep.subr.mxu0 0.0
    %1027 = vmatpush1.xpose.msra.mxu0 0.0
    %1028 = vmatprep.subr.mxu0 0.0
    %1029 = vmatpush1.xpose.msra.mxu0 0.0
    %1030 = vmatprep.subr.mxu0 0.0
    %1031 = vmatpush1.xpose.msra.mxu0 0.0
    %1032 = vmatprep.subr.mxu0 0.0
    %1033 = vmatpush1.xpose.msra.mxu0 0.0
    %1034 = vmatprep.subr.mxu0 0.0
    %1035 = vmatpush1.xpose.msra.mxu0 0.0
    %1036 = vmatprep.subr.mxu0 0.0
    %1037 = vmatpush1.xpose.msra.mxu0 0.0
    %1038 = vmatprep.subr.mxu0 0.0
    %1039 = vmatpush1.xpose.msra.mxu0 0.0
    %1040 = vmatprep.mubr.f32.mxu0 0.0
    %1041 = vmatmul.mubr.f32.gmra.mrb[0].mxu0 %v545
    %v1042 = vpop.f32.mrb[0].mxu0
    %v1043 = vadd.f32 0.0, %v1042
    %v1044 = vpop.f32.mrb[0].mxu0
    %1045 = vdwg.mxu0
    %1046 = vmatprep.subr.mxu0 0.0
    %1047 = vmatpush1.xpose.msra.mxu0 %v158
    %1048 = vmatprep.subr.mxu0 0.0
    %1049 = vmatpush1.xpose.msra.mxu0 %v159
    %1050 = vmatprep.subr.mxu0 0.0
    %1051 = vmatpush1.xpose.msra.mxu0 %v160
    %1052 = vmatprep.subr.mxu0 0.0
    %1053 = vmatpush1.xpose.msra.mxu0 %v161
    %1054 = vmatprep.subr.mxu0 0.0
    %1055 = vmatpush1.xpose.msra.mxu0 %v162
    %1056 = vmatprep.subr.mxu0 0.0
    %1057 = vmatpush1.xpose.msra.mxu0 %v163
    %1058 = vmatprep.subr.mxu0 0.0
    %1059 = vmatpush1.xpose.msra.mxu0 %v164
    %1060 = vmatprep.subr.mxu0 0.0
    %1061 = vmatpush1.xpose.msra.mxu0 %v165
    %1062 = vmatprep.subr.mxu0 0.0
    %1063 = vmatpush1.xpose.msra.mxu0 %v166
    %1064 = vmatprep.subr.mxu0 0.0
    %1065 = vmatpush1.xpose.msra.mxu0 %v167
    %1066 = vmatprep.subr.mxu0 0.0
    %1067 = vmatpush1.xpose.msra.mxu0 %v168
    %1068 = vmatprep.subr.mxu0 0.0
    %1069 = vmatpush1.xpose.msra.mxu0 %v169
    %1070 = vmatprep.subr.mxu0 0.0
    %1071 = vmatpush1.xpose.msra.mxu0 %v170
    %1072 = vmatprep.subr.mxu0 0.0
    %1073 = vmatpush1.xpose.msra.mxu0 %v171
    %1074 = vmatprep.subr.mxu0 0.0
    %1075 = vmatpush1.xpose.msra.mxu0 %v172
    %1076 = vmatprep.subr.mxu0 0.0
    %1077 = vmatpush1.xpose.msra.mxu0 %v173
    %1078 = vmatprep.subr.mxu0 0.0
    %1079 = vmatpush1.xpose.msra.mxu0 0.0
    %1080 = vmatprep.subr.mxu0 0.0
    %1081 = vmatpush1.xpose.msra.mxu0 0.0
    %1082 = vmatprep.subr.mxu0 0.0
    %1083 = vmatpush1.xpose.msra.mxu0 0.0
    %1084 = vmatprep.subr.mxu0 0.0
    %1085 = vmatpush1.xpose.msra.mxu0 0.0
    %1086 = vmatprep.subr.mxu0 0.0
    %1087 = vmatpush1.xpose.msra.mxu0 0.0
    %1088 = vmatprep.subr.mxu0 0.0
    %1089 = vmatpush1.xpose.msra.mxu0 0.0
    %1090 = vmatprep.subr.mxu0 0.0
    %1091 = vmatpush1.xpose.msra.mxu0 0.0
    %1092 = vmatprep.subr.mxu0 0.0
    %1093 = vmatpush1.xpose.msra.mxu0 0.0
    %1094 = vmatprep.subr.mxu0 0.0
    %1095 = vmatpush1.xpose.msra.mxu0 0.0
    %1096 = vmatprep.subr.mxu0 0.0
    %1097 = vmatpush1.xpose.msra.mxu0 0.0
    %1098 = vmatprep.subr.mxu0 0.0
    %1099 = vmatpush1.xpose.msra.mxu0 0.0
    %1100 = vmatprep.subr.mxu0 0.0
    %1101 = vmatpush1.xpose.msra.mxu0 0.0
    %1102 = vmatprep.subr.mxu0 0.0
    %1103 = vmatpush1.xpose.msra.mxu0 0.0
    %1104 = vmatprep.subr.mxu0 0.0
    %1105 = vmatpush1.xpose.msra.mxu0 0.0
    %1106 = vmatprep.subr.mxu0 0.0
    %1107 = vmatpush1.xpose.msra.mxu0 0.0
    %1108 = vmatprep.subr.mxu0 0.0
    %1109 = vmatpush1.xpose.msra.mxu0 0.0
    %1110 = vmatprep.mubr.f32.mxu0 0.0
    %1111 = vmatmul.mubr.f32.gmra.mrb[0].mxu0 %v547
    %v1112 = vpop.f32.mrb[0].mxu0
    %v1113 = vadd.f32 0.0, %v1112
    %v1114 = vpop.f32.mrb[0].mxu0
    %1115 = vdwg.mxu0
    %v1117 = vrot.slane %v331, 1
    %v1118 = vrot.slane %v331, 2
    %v1119 = vrot.slane %v331, 3
    %v1120 = vrot.slane %v331, 4
    %v1121 = vrot.slane %v331, 5
    %v1122 = vrot.slane %v331, 6
    %v1123 = vrot.slane %v331, 7
    %v1132 = vadd.f32 %v623, %v331
    %v1133 = vadd.f32 %v693, %v1117
    %v1134 = vadd.f32 %v763, %v1118
    %v1135 = vadd.f32 %v833, %v1119
    %v1136 = vadd.f32 %v903, %v1120
    %v1137 = vadd.f32 %v973, %v1121
    %v1138 = vadd.f32 %v1043, %v1122
    %v1139 = vadd.f32 %v1113, %v1123
    %v1148 = vrot.slane %v1133, 7
    %vm1149 = vcmask 1041409
    %v1150 = vsel %vm1149, %v1148, %v1132
    %v1151 = vrot.slane %v1134, 6
    %vm1152 = vcmask 1042434
    %v1153 = vsel %vm1152, %v1151, %v1150
    %v1154 = vrot.slane %v1135, 5
    %vm1155 = vcmask 1043459
    %v1156 = vsel %vm1155, %v1154, %v1153
    %v1157 = vrot.slane %v1136, 4
    %vm1158 = vcmask 1044484
    %v1159 = vsel %vm1158, %v1157, %v1156
    %v1160 = vrot.slane %v1137, 3
    %vm1161 = vcmask 1045509
    %v1162 = vsel %vm1161, %v1160, %v1159
    %v1163 = vrot.slane %v1138, 2
    %vm1164 = vcmask 1046534
    %v1165 = vsel %vm1164, %v1163, %v1162
    %v1166 = vrot.slane %v1139, 1
    %vm1167 = vcmask 1047559
    %v1168 = vsel %vm1167, %v1166, %v1165
    %1170 = vmax.xlane.f32.xlu0 %v1168
    %v1171 = vpop.xlane.xlu0 %1170
    %v1173 = vrot.slane %v1171, 1
    %v1174 = vrot.slane %v1171, 2
    %v1175 = vrot.slane %v1171, 3
    %v1176 = vrot.slane %v1171, 4
    %v1177 = vrot.slane %v1171, 5
    %v1178 = vrot.slane %v1171, 6
    %v1179 = vrot.slane %v1171, 7
    %v1188 = vsub.f32 %v1132, %v1171
    %v1189 = vsub.f32 %v1133, %v1173
    %v1190 = vsub.f32 %v1134, %v1174
    %v1191 = vsub.f32 %v1135, %v1175
    %v1192 = vsub.f32 %v1136, %v1176
    %v1193 = vsub.f32 %v1137, %v1177
    %v1194 = vsub.f32 %v1138, %v1178
    %v1195 = vsub.f32 %v1139, %v1179
    %v1196 = vmul.f32 %v1188, 1.442695
    %v1197 = vpow.pop %v1196
    %v1198 = vmul.f32 %v1189, 1.442695
    %v1199 = vpow.pop %v1198
    %v1200 = vmul.f32 %v1190, 1.442695
    %v1201 = vpow.pop %v1200
    %v1202 = vmul.f32 %v1191, 1.442695
    %v1203 = vpow.pop %v1202
    %v1204 = vmul.f32 %v1192, 1.442695
    %v1205 = vpow.pop %v1204
    %v1206 = vmul.f32 %v1193, 1.442695
    %v1207 = vpow.pop %v1206
    %v1208 = vmul.f32 %v1194, 1.442695
    %v1209 = vpow.pop %v1208
    %v1210 = vmul.f32 %v1195, 1.442695
    %v1211 = vpow.pop %v1210
    %v1220 = vrot.slane %v1199, 7
    %v1221 = vsel %vm1149, %v1220, %v1197
    %v1222 = vrot.slane %v1201, 6
    %v1223 = vsel %vm1152, %v1222, %v1221
    %v1224 = vrot.slane %v1203, 5
    %v1225 = vsel %vm1155, %v1224, %v1223
    %v1226 = vrot.slane %v1205, 4
    %v1227 = vsel %vm1158, %v1226, %v1225
    %v1228 = vrot.slane %v1207, 3
    %v1229 = vsel %vm1161, %v1228, %v1227
    %v1230 = vrot.slane %v1209, 2
    %v1231 = vsel %vm1164, %v1230, %v1229
    %v1232 = vrot.slane %v1211, 1
    %v1233 = vsel %vm1167, %v1232, %v1231
    %1235 = vadd.xlane.f32.xlu0 %v1233
    %v1236 = vpop.xlane.xlu0 %1235
    %v1237 = vrcp.pop %v1236
    %v1239 = vrot.slane %v1237, 1
    %v1240 = vrot.slane %v1237, 2
    %v1241 = vrot.slane %v1237, 3
    %v1242 = vrot.slane %v1237, 4
    %v1243 = vrot.slane %v1237, 5
    %v1244 = vrot.slane %v1237, 6
    %v1245 = vrot.slane %v1237, 7
    %v1254 = vmul.f32 %v1197, %v1237
    %v1255 = vmul.f32 %v1199, %v1239
    %v1256 = vmul.f32 %v1201, %v1240
    %v1257 = vmul.f32 %v1203, %v1241
    %v1258 = vmul.f32 %v1205, %v1242
    %v1259 = vmul.f32 %v1207, %v1243
    %v1260 = vmul.f32 %v1209, %v1244
    %v1261 = vmul.f32 %v1211, %v1245
    %1262 = vmatprep.subr.mxu0 0.0
    %1263 = vmatpush1.msra.mxu0 %v46
    %1264 = vmatprep.subr.mxu0 0.0
    %1265 = vmatpush1.msra.mxu0 %v47
    %1266 = vmatprep.subr.mxu0 0.0
    %1267 = vmatpush1.msra.mxu0 %v48
    %1268 = vmatprep.subr.mxu0 0.0
    %1269 = vmatpush1.msra.mxu0 %v49
    %1270 = vmatprep.subr.mxu0 0.0
    %1271 = vmatpush1.msra.mxu0 %v50
    %1272 = vmatprep.subr.mxu0 0.0
    %1273 = vmatpush1.msra.mxu0 %v51
    %1274 = vmatprep.subr.mxu0 0.0
    %1275 = vmatpush1.msra.mxu0 %v52
    %1276 = vmatprep.subr.mxu0 0.0
    %1277 = vmatpush1.msra.mxu0 %v53
    %1278 = vmatprep.subr.mxu0 0.0
    %1279 = vmatpush1.msra.mxu0 %v54
    %1280 = vmatprep.subr.mxu0 0.0
    %1281 = vmatpush1.msra.mxu0 %v55
    %1282 = vmatprep.subr.mxu0 0.0
    %1283 = vmatpush1.msra.mxu0 %v56
    %1284 = vmatprep.subr.mxu0 0.0
    %1285 = vmatpush1.msra.mxu0 %v57
    %1286 = vmatprep.subr.mxu0 0.0
    %1287 = vmatpush1.msra.mxu0 %v58
    %1288 = vmatprep.subr.mxu0 0.0
    %1289 = vmatpush1.msra.mxu0 %v59
    %1290 = vmatprep.subr.mxu0 0.0
    %1291 = vmatpush1.msra.mxu0 %v60
    %1292 = vmatprep.subr.mxu0 0.0
    %1293 = vmatpush1.msra.mxu0 %v61
    %1294 = vmatprep.subr.mxu0 0.0
    %1295 = vmatpush1.msra.mxu0 0.0
    %1296 = vmatprep.subr.mxu0 0.0
    %1297 = vmatpush1.msra.mxu0 0.0
    %1298 = vmatprep.subr.mxu0 0.0
    %1299 = vmatpush1.msra.mxu0 0.0
    %1300 = vmatprep.subr.mxu0 0.0
    %1301 = vmatpush1.msra.mxu0 0.0
    %1302 = vmatprep.subr.mxu0 0.0
    %1303 = vmatpush1.msra.mxu0 0.0
    %1304 = vmatprep.subr.mxu0 0.0
    %1305 = vmatpush1.msra.mxu0 0.0
    %1306 = vmatprep.subr.mxu0 0.0
    %1307 = vmatpush1.msra.mxu0 0.0
    %1308 = vmatprep.subr.mxu0 0.0
    %1309 = vmatpush1.msra.mxu0 0.0
    %1310 = vmatprep.subr.mxu0 0.0
    %1311 = vmatpush1.msra.mxu0 0.0
    %1312 = vmatprep.subr.mxu0 0.0
    %1313 = vmatpush1.msra.mxu0 0.0
    %1314 = vmatprep.subr.mxu0 0.0
    %1315 = vmatpush1.msra.mxu0 0.0
    %1316 = vmatprep.subr.mxu0 0.0
    %1317 = vmatpush1.msra.mxu0 0.0
    %1318 = vmatprep.subr.mxu0 0.0
    %1319 = vmatpush1.msra.mxu0 0.0
    %1320 = vmatprep.subr.mxu0 0.0
    %1321 = vmatpush1.msra.mxu0 0.0
    %1322 = vmatprep.subr.mxu0 0.0
    %1323 = vmatpush1.msra.mxu0 0.0
    %1324 = vmatprep.subr.mxu0 0.0
    %1325 = vmatpush1.msra.mxu0 0.0
    %1326 = vmatprep.mubr.f32.mxu0 0.0
    %1327 = vmatmul.mubr.f32.gmra.mrb[0].mxu0 %v1254
    %v1328 = vpop.f32.mrb[0].mxu0
    %v1329 = vadd.f32 0.0, %v1328
    %v1330 = vpop.f32.mrb[0].mxu0
    %1331 = vdwg.mxu0
    %1332 = vmatprep.subr.mxu0 0.0
    %1333 = vmatpush1.msra.mxu0 %v62
    %1334 = vmatprep.subr.mxu0 0.0
    %1335 = vmatpush1.msra.mxu0 %v63
    %1336 = vmatprep.subr.mxu0 0.0
    %1337 = vmatpush1.msra.mxu0 %v64
    %1338 = vmatprep.subr.mxu0 0.0
    %1339 = vmatpush1.msra.mxu0 %v65
    %1340 = vmatprep.subr.mxu0 0.0
    %1341 = vmatpush1.msra.mxu0 %v66
    %1342 = vmatprep.subr.mxu0 0.0
    %1343 = vmatpush1.msra.mxu0 %v67
    %1344 = vmatprep.subr.mxu0 0.0
    %1345 = vmatpush1.msra.mxu0 %v68
    %1346 = vmatprep.subr.mxu0 0.0
    %1347 = vmatpush1.msra.mxu0 %v69
    %1348 = vmatprep.subr.mxu0 0.0
    %1349 = vmatpush1.msra.mxu0 %v70
    %1350 = vmatprep.subr.mxu0 0.0
    %1351 = vmatpush1.msra.mxu0 %v71
    %1352 = vmatprep.subr.mxu0 0.0
    %1353 = vmatpush1.msra.mxu0 %v72
    %1354 = vmatprep.subr.mxu0 0.0
    %1355 = vmatpush1.msra.mxu0 %v73
    %1356 = vmatprep.subr.mxu0 0.0
    %1357 = vmatpush1.msra.mxu0 %v74
    %1358 = vmatprep.subr.mxu0 0.0
    %1359 = vmatpush1.msra.mxu0 %v75
    %1360 = vmatprep.subr.mxu0 0.0
    %1361 = vmatpush1.msra.mxu0 %v76
    %1362 = vmatprep.subr.mxu0 0.0
    %1363 = vmatpush1.msra.mxu0 %v77
    %1364 = vmatprep.subr.mxu0 0.0
    %1365 = vmatpush1.msra.mxu0 0.0
    %1366 = vmatprep.subr.mxu0 0.0
    %1367 = vmatpush1.msra.mxu0 0.0
    %1368 = vmatprep.subr.mxu0 0.0
    %1369 = vmatpush1.msra.mxu0 0.0
    %1370 = vmatprep.subr.mxu0 0.0
    %1371 = vmatpush1.msra.mxu0 0.0
    %1372 = vmatprep.subr.mxu0 0.0
    %1373 = vmatpush1.msra.mxu0 0.0
    %1374 = vmatprep.subr.mxu0 0.0
    %1375 = vmatpush1.msra.mxu0 0.0
    %1376 = vmatprep.subr.mxu0 0.0
    %1377 = vmatpush1.msra.mxu0 0.0
    %1378 = vmatprep.subr.mxu0 0.0
    %1379 = vmatpush1.msra.mxu0 0.0
    %1380 = vmatprep.subr.mxu0 0.0
    %1381 = vmatpush1.msra.mxu0 0.0
    %1382 = vmatprep.subr.mxu0 0.0
    %1383 = vmatpush1.msra.mxu0 0.0
    %1384 = vmatprep.subr.mxu0 0.0
    %1385 = vmatpush1.msra.mxu0 0.0
    %1386 = vmatprep.subr.mxu0 0.0
    %1387 = vmatpush1.msra.mxu0 0.0
    %1388 = vmatprep.subr.mxu0 0.0
    %1389 = vmatpush1.msra.mxu0 0.0
    %1390 = vmatprep.subr.mxu0 0.0
    %1391 = vmatpush1.msra.mxu0 0.0
    %1392 = vmatprep.subr.mxu0 0.0
    %1393 = vmatpush1.msra.mxu0 0.0
    %1394 = vmatprep.subr.mxu0 0.0
    %1395 = vmatpush1.msra.mxu0 0.0
    %1396 = vmatprep.mubr.f32.mxu0 0.0
    %1397 = vmatmul.mubr.f32.gmra.mrb[0].mxu0 %v1255
    %v1398 = vpop.f32.mrb[0].mxu0
    %v1399 = vadd.f32 0.0, %v1398
    %v1400 = vpop.f32.mrb[0].mxu0
    %1401 = vdwg.mxu0
    %1402 = vmatprep.subr.mxu0 0.0
    %1403 = vmatpush1.msra.mxu0 %v78
    %1404 = vmatprep.subr.mxu0 0.0
    %1405 = vmatpush1.msra.mxu0 %v79
    %1406 = vmatprep.subr.mxu0 0.0
    %1407 = vmatpush1.msra.mxu0 %v80
    %1408 = vmatprep.subr.mxu0 0.0
    %1409 = vmatpush1.msra.mxu0 %v81
    %1410 = vmatprep.subr.mxu0 0.0
    %1411 = vmatpush1.msra.mxu0 %v82
    %1412 = vmatprep.subr.mxu0 0.0
    %1413 = vmatpush1.msra.mxu0 %v83
    %1414 = vmatprep.subr.mxu0 0.0
    %1415 = vmatpush1.msra.mxu0 %v84
    %1416 = vmatprep.subr.mxu0 0.0
    %1417 = vmatpush1.msra.mxu0 %v85
    %1418 = vmatprep.subr.mxu0 0.0
    %1419 = vmatpush1.msra.mxu0 %v86
    %1420 = vmatprep.subr.mxu0 0.0
    %1421 = vmatpush1.msra.mxu0 %v87
    %1422 = vmatprep.subr.mxu0 0.0
    %1423 = vmatpush1.msra.mxu0 %v88
    %1424 = vmatprep.subr.mxu0 0.0
    %1425 = vmatpush1.msra.mxu0 %v89
    %1426 = vmatprep.subr.mxu0 0.0
    %1427 = vmatpush1.msra.mxu0 %v90
    %1428 = vmatprep.subr.mxu0 0.0
    %1429 = vmatpush1.msra.mxu0 %v91
    %1430 = vmatprep.subr.mxu0 0.0
    %1431 = vmatpush1.msra.mxu0 %v92
    %1432 = vmatprep.subr.mxu0 0.0
    %1433 = vmatpush1.msra.mxu0 %v93
    %1434 = vmatprep.subr.mxu0 0.0
    %1435 = vmatpush1.msra.mxu0 0.0
    %1436 = vmatprep.subr.mxu0 0.0
    %1437 = vmatpush1.msra.mxu0 0.0
    %1438 = vmatprep.subr.mxu0 0.0
    %1439 = vmatpush1.msra.mxu0 0.0
    %1440 = vmatprep.subr.mxu0 0.0
    %1441 = vmatpush1.msra.mxu0 0.0
    %1442 = vmatprep.subr.mxu0 0.0
    %1443 = vmatpush1.msra.mxu0 0.0
    %1444 = vmatprep.subr.mxu0 0.0
    %1445 = vmatpush1.msra.mxu0 0.0
    %1446 = vmatprep.subr.mxu0 0.0
    %1447 = vmatpush1.msra.mxu0 0.0
    %1448 = vmatprep.subr.mxu0 0.0
    %1449 = vmatpush1.msra.mxu0 0.0
    %1450 = vmatprep.subr.mxu0 0.0
    %1451 = vmatpush1.msra.mxu0 0.0
    %1452 = vmatprep.subr.mxu0 0.0
    %1453 = vmatpush1.msra.mxu0 0.0
    %1454 = vmatprep.subr.mxu0 0.0
    %1455 = vmatpush1.msra.mxu0 0.0
    %1456 = vmatprep.subr.mxu0 0.0
    %1457 = vmatpush1.msra.mxu0 0.0
    %1458 = vmatprep.subr.mxu0 0.0
    %1459 = vmatpush1.msra.mxu0 0.0
    %1460 = vmatprep.subr.mxu0 0.0
    %1461 = vmatpush1.msra.mxu0 0.0
    %1462 = vmatprep.subr.mxu0 0.0
    %1463 = vmatpush1.msra.mxu0 0.0
    %1464 = vmatprep.subr.mxu0 0.0
    %1465 = vmatpush1.msra.mxu0 0.0
    %1466 = vmatprep.mubr.f32.mxu0 0.0
    %1467 = vmatmul.mubr.f32.gmra.mrb[0].mxu0 %v1256
    %v1468 = vpop.f32.mrb[0].mxu0
    %v1469 = vadd.f32 0.0, %v1468
    %v1470 = vpop.f32.mrb[0].mxu0
    %1471 = vdwg.mxu0
    %1472 = vmatprep.subr.mxu0 0.0
    %1473 = vmatpush1.msra.mxu0 %v94
    %1474 = vmatprep.subr.mxu0 0.0
    %1475 = vmatpush1.msra.mxu0 %v95
    %1476 = vmatprep.subr.mxu0 0.0
    %1477 = vmatpush1.msra.mxu0 %v96
    %1478 = vmatprep.subr.mxu0 0.0
    %1479 = vmatpush1.msra.mxu0 %v97
    %1480 = vmatprep.subr.mxu0 0.0
    %1481 = vmatpush1.msra.mxu0 %v98
    %1482 = vmatprep.subr.mxu0 0.0
    %1483 = vmatpush1.msra.mxu0 %v99
    %1484 = vmatprep.subr.mxu0 0.0
    %1485 = vmatpush1.msra.mxu0 %v100
    %1486 = vmatprep.subr.mxu0 0.0
    %1487 = vmatpush1.msra.mxu0 %v101
    %1488 = vmatprep.subr.mxu0 0.0
    %1489 = vmatpush1.msra.mxu0 %v102
    %1490 = vmatprep.subr.mxu0 0.0
    %1491 = vmatpush1.msra.mxu0 %v103
    %1492 = vmatprep.subr.mxu0 0.0
    %1493 = vmatpush1.msra.mxu0 %v104
    %1494 = vmatprep.subr.mxu0 0.0
    %1495 = vmatpush1.msra.mxu0 %v105
    %1496 = vmatprep.subr.mxu0 0.0
    %1497 = vmatpush1.msra.mxu0 %v106
    %1498 = vmatprep.subr.mxu0 0.0
    %1499 = vmatpush1.msra.mxu0 %v107
    %1500 = vmatprep.subr.mxu0 0.0
    %1501 = vmatpush1.msra.mxu0 %v108
    %1502 = vmatprep.subr.mxu0 0.0
    %1503 = vmatpush1.msra.mxu0 %v109
    %1504 = vmatprep.subr.mxu0 0.0
    %1505 = vmatpush1.msra.mxu0 0.0
    %1506 = vmatprep.subr.mxu0 0.0
    %1507 = vmatpush1.msra.mxu0 0.0
    %1508 = vmatprep.subr.mxu0 0.0
    %1509 = vmatpush1.msra.mxu0 0.0
    %1510 = vmatprep.subr.mxu0 0.0
    %1511 = vmatpush1.msra.mxu0 0.0
    %1512 = vmatprep.subr.mxu0 0.0
    %1513 = vmatpush1.msra.mxu0 0.0
    %1514 = vmatprep.subr.mxu0 0.0
    %1515 = vmatpush1.msra.mxu0 0.0
    %1516 = vmatprep.subr.mxu0 0.0
    %1517 = vmatpush1.msra.mxu0 0.0
    %1518 = vmatprep.subr.mxu0 0.0
    %1519 = vmatpush1.msra.mxu0 0.0
    %1520 = vmatprep.subr.mxu0 0.0
    %1521 = vmatpush1.msra.mxu0 0.0
    %1522 = vmatprep.subr.mxu0 0.0
    %1523 = vmatpush1.msra.mxu0 0.0
    %1524 = vmatprep.subr.mxu0 0.0
    %1525 = vmatpush1.msra.mxu0 0.0
    %1526 = vmatprep.subr.mxu0 0.0
    %1527 = vmatpush1.msra.mxu0 0.0
    %1528 = vmatprep.subr.mxu0 0.0
    %1529 = vmatpush1.msra.mxu0 0.0
    %1530 = vmatprep.subr.mxu0 0.0
    %1531 = vmatpush1.msra.mxu0 0.0
    %1532 = vmatprep.subr.mxu0 0.0
    %1533 = vmatpush1.msra.mxu0 0.0
    %1534 = vmatprep.subr.mxu0 0.0
    %1535 = vmatpush1.msra.mxu0 0.0
    %1536 = vmatprep.mubr.f32.mxu0 0.0
    %1537 = vmatmul.mubr.f32.gmra.mrb[0].mxu0 %v1257
    %v1538 = vpop.f32.mrb[0].mxu0
    %v1539 = vadd.f32 0.0, %v1538
    %v1540 = vpop.f32.mrb[0].mxu0
    %1541 = vdwg.mxu0
    %1542 = vmatprep.subr.mxu0 0.0
    %1543 = vmatpush1.msra.mxu0 %v110
    %1544 = vmatprep.subr.mxu0 0.0
    %1545 = vmatpush1.msra.mxu0 %v111
    %1546 = vmatprep.subr.mxu0 0.0
    %1547 = vmatpush1.msra.mxu0 %v112
    %1548 = vmatprep.subr.mxu0 0.0
    %1549 = vmatpush1.msra.mxu0 %v113
    %1550 = vmatprep.subr.mxu0 0.0
    %1551 = vmatpush1.msra.mxu0 %v114
    %1552 = vmatprep.subr.mxu0 0.0
    %1553 = vmatpush1.msra.mxu0 %v115
    %1554 = vmatprep.subr.mxu0 0.0
    %1555 = vmatpush1.msra.mxu0 %v116
    %1556 = vmatprep.subr.mxu0 0.0
    %1557 = vmatpush1.msra.mxu0 %v117
    %1558 = vmatprep.subr.mxu0 0.0
    %1559 = vmatpush1.msra.mxu0 %v118
    %1560 = vmatprep.subr.mxu0 0.0
    %1561 = vmatpush1.msra.mxu0 %v119
    %1562 = vmatprep.subr.mxu0 0.0
    %1563 = vmatpush1.msra.mxu0 %v120
    %1564 = vmatprep.subr.mxu0 0.0
    %1565 = vmatpush1.msra.mxu0 %v121
    %1566 = vmatprep.subr.mxu0 0.0
    %1567 = vmatpush1.msra.mxu0 %v122
    %1568 = vmatprep.subr.mxu0 0.0
    %1569 = vmatpush1.msra.mxu0 %v123
    %1570 = vmatprep.subr.mxu0 0.0
    %1571 = vmatpush1.msra.mxu0 %v124
    %1572 = vmatprep.subr.mxu0 0.0
    %1573 = vmatpush1.msra.mxu0 %v125
    %1574 = vmatprep.subr.mxu0 0.0
    %1575 = vmatpush1.msra.mxu0 0.0
    %1576 = vmatprep.subr.mxu0 0.0
    %1577 = vmatpush1.msra.mxu0 0.0
    %1578 = vmatprep.subr.mxu0 0.0
    %1579 = vmatpush1.msra.mxu0 0.0
    %1580 = vmatprep.subr.mxu0 0.0
    %1581 = vmatpush1.msra.mxu0 0.0
    %1582 = vmatprep.subr.mxu0 0.0
    %1583 = vmatpush1.msra.mxu0 0.0
    %1584 = vmatprep.subr.mxu0 0.0
    %1585 = vmatpush1.msra.mxu0 0.0
    %1586 = vmatprep.subr.mxu0 0.0
    %1587 = vmatpush1.msra.mxu0 0.0
    %1588 = vmatprep.subr.mxu0 0.0
    %1589 = vmatpush1.msra.mxu0 0.0
    %1590 = vmatprep.subr.mxu0 0.0
    %1591 = vmatpush1.msra.mxu0 0.0
    %1592 = vmatprep.subr.mxu0 0.0
    %1593 = vmatpush1.msra.mxu0 0.0
    %1594 = vmatprep.subr.mxu0 0.0
    %1595 = vmatpush1.msra.mxu0 0.0
    %1596 = vmatprep.subr.mxu0 0.0
    %1597 = vmatpush1.msra.mxu0 0.0
    %1598 = vmatprep.subr.mxu0 0.0
    %1599 = vmatpush1.msra.mxu0 0.0
    %1600 = vmatprep.subr.mxu0 0.0
    %1601 = vmatpush1.msra.mxu0 0.0
    %1602 = vmatprep.subr.mxu0 0.0
    %1603 = vmatpush1.msra.mxu0 0.0
    %1604 = vmatprep.subr.mxu0 0.0
    %1605 = vmatpush1.msra.mxu0 0.0
    %1606 = vmatprep.mubr.f32.mxu0 0.0
    %1607 = vmatmul.mubr.f32.gmra.mrb[0].mxu0 %v1258
    %v1608 = vpop.f32.mrb[0].mxu0
    %v1609 = vadd.f32 0.0, %v1608
    %v1610 = vpop.f32.mrb[0].mxu0
    %1611 = vdwg.mxu0
    %1612 = vmatprep.subr.mxu0 0.0
    %1613 = vmatpush1.msra.mxu0 %v126
    %1614 = vmatprep.subr.mxu0 0.0
    %1615 = vmatpush1.msra.mxu0 %v127
    %1616 = vmatprep.subr.mxu0 0.0
    %1617 = vmatpush1.msra.mxu0 %v128
    %1618 = vmatprep.subr.mxu0 0.0
    %1619 = vmatpush1.msra.mxu0 %v129
    %1620 = vmatprep.subr.mxu0 0.0
    %1621 = vmatpush1.msra.mxu0 %v130
    %1622 = vmatprep.subr.mxu0 0.0
    %1623 = vmatpush1.msra.mxu0 %v131
    %1624 = vmatprep.subr.mxu0 0.0
    %1625 = vmatpush1.msra.mxu0 %v132
    %1626 = vmatprep.subr.mxu0 0.0
    %1627 = vmatpush1.msra.mxu0 %v133
    %1628 = vmatprep.subr.mxu0 0.0
    %1629 = vmatpush1.msra.mxu0 %v134
    %1630 = vmatprep.subr.mxu0 0.0
    %1631 = vmatpush1.msra.mxu0 %v135
    %1632 = vmatprep.subr.mxu0 0.0
    %1633 = vmatpush1.msra.mxu0 %v136
    %1634 = vmatprep.subr.mxu0 0.0
    %1635 = vmatpush1.msra.mxu0 %v137
    %1636 = vmatprep.subr.mxu0 0.0
    %1637 = vmatpush1.msra.mxu0 %v138
    %1638 = vmatprep.subr.mxu0 0.0
    %1639 = vmatpush1.msra.mxu0 %v139
    %1640 = vmatprep.subr.mxu0 0.0
    %1641 = vmatpush1.msra.mxu0 %v140
    %1642 = vmatprep.subr.mxu0 0.0
    %1643 = vmatpush1.msra.mxu0 %v141
    %1644 = vmatprep.subr.mxu0 0.0
    %1645 = vmatpush1.msra.mxu0 0.0
    %1646 = vmatprep.subr.mxu0 0.0
    %1647 = vmatpush1.msra.mxu0 0.0
    %1648 = vmatprep.subr.mxu0 0.0
    %1649 = vmatpush1.msra.mxu0 0.0
    %1650 = vmatprep.subr.mxu0 0.0
    %1651 = vmatpush1.msra.mxu0 0.0
    %1652 = vmatprep.subr.mxu0 0.0
    %1653 = vmatpush1.msra.mxu0 0.0
    %1654 = vmatprep.subr.mxu0 0.0
    %1655 = vmatpush1.msra.mxu0 0.0
    %1656 = vmatprep.subr.mxu0 0.0
    %1657 = vmatpush1.msra.mxu0 0.0
    %1658 = vmatprep.subr.mxu0 0.0
    %1659 = vmatpush1.msra.mxu0 0.0
    %1660 = vmatprep.subr.mxu0 0.0
    %1661 = vmatpush1.msra.mxu0 0.0
    %1662 = vmatprep.subr.mxu0 0.0
    %1663 = vmatpush1.msra.mxu0 0.0
    %1664 = vmatprep.subr.mxu0 0.0
    %1665 = vmatpush1.msra.mxu0 0.0
    %1666 = vmatprep.subr.mxu0 0.0
    %1667 = vmatpush1.msra.mxu0 0.0
    %1668 = vmatprep.subr.mxu0 0.0
    %1669 = vmatpush1.msra.mxu0 0.0
    %1670 = vmatprep.subr.mxu0 0.0
    %1671 = vmatpush1.msra.mxu0 0.0
    %1672 = vmatprep.subr.mxu0 0.0
    %1673 = vmatpush1.msra.mxu0 0.0
    %1674 = vmatprep.subr.mxu0 0.0
    %1675 = vmatpush1.msra.mxu0 0.0
    %1676 = vmatprep.mubr.f32.mxu0 0.0
    %1677 = vmatmul.mubr.f32.gmra.mrb[0].mxu0 %v1259
    %v1678 = vpop.f32.mrb[0].mxu0
    %v1679 = vadd.f32 0.0, %v1678
    %v1680 = vpop.f32.mrb[0].mxu0
    %1681 = vdwg.mxu0
    %1682 = vmatprep.subr.mxu0 0.0
    %1683 = vmatpush1.msra.mxu0 %v142
    %1684 = vmatprep.subr.mxu0 0.0
    %1685 = vmatpush1.msra.mxu0 %v143
    %1686 = vmatprep.subr.mxu0 0.0
    %1687 = vmatpush1.msra.mxu0 %v144
    %1688 = vmatprep.subr.mxu0 0.0
    %1689 = vmatpush1.msra.mxu0 %v145
    %1690 = vmatprep.subr.mxu0 0.0
    %1691 = vmatpush1.msra.mxu0 %v146
    %1692 = vmatprep.subr.mxu0 0.0
    %1693 = vmatpush1.msra.mxu0 %v147
    %1694 = vmatprep.subr.mxu0 0.0
    %1695 = vmatpush1.msra.mxu0 %v148
    %1696 = vmatprep.subr.mxu0 0.0
    %1697 = vmatpush1.msra.mxu0 %v149
    %1698 = vmatprep.subr.mxu0 0.0
    %1699 = vmatpush1.msra.mxu0 %v150
    %1700 = vmatprep.subr.mxu0 0.0
    %1701 = vmatpush1.msra.mxu0 %v151
    %1702 = vmatprep.subr.mxu0 0.0
    %1703 = vmatpush1.msra.mxu0 %v152
    %1704 = vmatprep.subr.mxu0 0.0
    %1705 = vmatpush1.msra.mxu0 %v153
    %1706 = vmatprep.subr.mxu0 0.0
    %1707 = vmatpush1.msra.mxu0 %v154
    %1708 = vmatprep.subr.mxu0 0.0
    %1709 = vmatpush1.msra.mxu0 %v155
    %1710 = vmatprep.subr.mxu0 0.0
    %1711 = vmatpush1.msra.mxu0 %v156
    %1712 = vmatprep.subr.mxu0 0.0
    %1713 = vmatpush1.msra.mxu0 %v157
    %1714 = vmatprep.subr.mxu0 0.0
    %1715 = vmatpush1.msra.mxu0 0.0
    %1716 = vmatprep.subr.mxu0 0.0
    %1717 = vmatpush1.msra.mxu0 0.0
    %1718 = vmatprep.subr.mxu0 0.0
    %1719 = vmatpush1.msra.mxu0 0.0
    %1720 = vmatprep.subr.mxu0 0.0
    %1721 = vmatpush1.msra.mxu0 0.0
    %1722 = vmatprep.subr.mxu0 0.0
    %1723 = vmatpush1.msra.mxu0 0.0
    %1724 = vmatprep.subr.mxu0 0.0
    %1725 = vmatpush1.msra.mxu0 0.0
    %1726 = vmatprep.subr.mxu0 0.0
    %1727 = vmatpush1.msra.mxu0 0.0
    %1728 = vmatprep.subr.mxu0 0.0
    %1729 = vmatpush1.msra.mxu0 0.0
    %1730 = vmatprep.subr.mxu0 0.0
    %1731 = vmatpush1.msra.mxu0 0.0
    %1732 = vmatprep.subr.mxu0 0.0
    %1733 = vmatpush1.msra.mxu0 0.0
    %1734 = vmatprep.subr.mxu0 0.0
    %1735 = vmatpush1.msra.mxu0 0.0
    %1736 = vmatprep.subr.mxu0 0.0
    %1737 = vmatpush1.msra.mxu0 0.0
    %1738 = vmatprep.subr.mxu0 0.0
    %1739 = vmatpush1.msra.mxu0 0.0
    %1740 = vmatprep.subr.mxu0 0.0
    %1741 = vmatpush1.msra.mxu0 0.0
    %1742 = vmatprep.subr.mxu0 0.0
    %1743 = vmatpush1.msra.mxu0 0.0
    %1744 = vmatprep.subr.mxu0 0.0
    %1745 = vmatpush1.msra.mxu0 0.0
    %1746 = vmatprep.mubr.f32.mxu0 0.0
    %1747 = vmatmul.mubr.f32.gmra.mrb[0].mxu0 %v1260
    %v1748 = vpop.f32.mrb[0].mxu0
    %v1749 = vadd.f32 0.0, %v1748
    %v1750 = vpop.f32.mrb[0].mxu0
    %1751 = vdwg.mxu0
    %1752 = vmatprep.subr.mxu0 0.0
    %1753 = vmatpush1.msra.mxu0 %v158
    %1754 = vmatprep.subr.mxu0 0.0
    %1755 = vmatpush1.msra.mxu0 %v159
    %1756 = vmatprep.subr.mxu0 0.0
    %1757 = vmatpush1.msra.mxu0 %v160
    %1758 = vmatprep.subr.mxu0 0.0
    %1759 = vmatpush1.msra.mxu0 %v161
    %1760 = vmatprep.subr.mxu0 0.0
    %1761 = vmatpush1.msra.mxu0 %v162
    %1762 = vmatprep.subr.mxu0 0.0
    %1763 = vmatpush1.msra.mxu0 %v163
    %1764 = vmatprep.subr.mxu0 0.0
    %1765 = vmatpush1.msra.mxu0 %v164
    %1766 = vmatprep.subr.mxu0 0.0
    %1767 = vmatpush1.msra.mxu0 %v165
    %1768 = vmatprep.subr.mxu0 0.0
    %1769 = vmatpush1.msra.mxu0 %v166
    %1770 = vmatprep.subr.mxu0 0.0
    %1771 = vmatpush1.msra.mxu0 %v167
    %1772 = vmatprep.subr.mxu0 0.0
    %1773 = vmatpush1.msra.mxu0 %v168
    %1774 = vmatprep.subr.mxu0 0.0
    %1775 = vmatpush1.msra.mxu0 %v169
    %1776 = vmatprep.subr.mxu0 0.0
    %1777 = vmatpush1.msra.mxu0 %v170
    %1778 = vmatprep.subr.mxu0 0.0
    %1779 = vmatpush1.msra.mxu0 %v171
    %1780 = vmatprep.subr.mxu0 0.0
    %1781 = vmatpush1.msra.mxu0 %v172
    %1782 = vmatprep.subr.mxu0 0.0
    %1783 = vmatpush1.msra.mxu0 %v173
    %1784 = vmatprep.subr.mxu0 0.0
    %1785 = vmatpush1.msra.mxu0 0.0
    %1786 = vmatprep.subr.mxu0 0.0
    %1787 = vmatpush1.msra.mxu0 0.0
    %1788 = vmatprep.subr.mxu0 0.0
    %1789 = vmatpush1.msra.mxu0 0.0
    %1790 = vmatprep.subr.mxu0 0.0
    %1791 = vmatpush1.msra.mxu0 0.0
    %1792 = vmatprep.subr.mxu0 0.0
    %1793 = vmatpush1.msra.mxu0 0.0
    %1794 = vmatprep.subr.mxu0 0.0
    %1795 = vmatpush1.msra.mxu0 0.0
    %1796 = vmatprep.subr.mxu0 0.0
    %1797 = vmatpush1.msra.mxu0 0.0
    %1798 = vmatprep.subr.mxu0 0.0
    %1799 = vmatpush1.msra.mxu0 0.0
    %1800 = vmatprep.subr.mxu0 0.0
    %1801 = vmatpush1.msra.mxu0 0.0
    %1802 = vmatprep.subr.mxu0 0.0
    %1803 = vmatpush1.msra.mxu0 0.0
    %1804 = vmatprep.subr.mxu0 0.0
    %1805 = vmatpush1.msra.mxu0 0.0
    %1806 = vmatprep.subr.mxu0 0.0
    %1807 = vmatpush1.msra.mxu0 0.0
    %1808 = vmatprep.subr.mxu0 0.0
    %1809 = vmatpush1.msra.mxu0 0.0
    %1810 = vmatprep.subr.mxu0 0.0
    %1811 = vmatpush1.msra.mxu0 0.0
    %1812 = vmatprep.subr.mxu0 0.0
    %1813 = vmatpush1.msra.mxu0 0.0
    %1814 = vmatprep.subr.mxu0 0.0
    %1815 = vmatpush1.msra.mxu0 0.0
    %1816 = vmatprep.mubr.f32.mxu0 0.0
    %1817 = vmatmul.mubr.f32.gmra.mrb[0].mxu0 %v1261
    %v1818 = vpop.f32.mrb[0].mxu0
    %v1819 = vadd.f32 0.0, %v1818
    %v1820 = vpop.f32.mrb[0].mxu0
    %1821 = vdwg.mxu0
    %v1830 = vrot.slane %v1399, 7
    %v1831 = vsel %vm1149, %v1830, %v1329
    %v1832 = vrot.slane %v1469, 6
    %v1833 = vsel %vm1152, %v1832, %v1831
    %v1834 = vrot.slane %v1539, 5
    %v1835 = vsel %vm1155, %v1834, %v1833
    %v1836 = vrot.slane %v1609, 4
    %v1837 = vsel %vm1158, %v1836, %v1835
    %v1838 = vrot.slane %v1679, 3
    %v1839 = vsel %vm1161, %v1838, %v1837
    %v1840 = vrot.slane %v1749, 2
    %v1841 = vsel %vm1164, %v1840, %v1839
    %v1842 = vrot.slane %v1819, 1
    %v1843 = vsel %vm1167, %v1842, %v1841
    %1845 = vmatprep.subr.mxu0 %v175
    %1846 = vmatpush1.msra.mxu0 %v174
    %1847 = vmatprep.subr.mxu0 %v179
    %1848 = vmatpush1.msra.mxu0 %v178
    %1849 = vmatprep.subr.mxu0 %v183
    %1850 = vmatpush1.msra.mxu0 %v182
    %1851 = vmatprep.subr.mxu0 %v187
    %1852 = vmatpush1.msra.mxu0 %v186
    %1853 = vmatprep.subr.mxu0 %v191
    %1854 = vmatpush1.msra.mxu0 %v190
    %1855 = vmatprep.subr.mxu0 %v195
    %1856 = vmatpush1.msra.mxu0 %v194
    %1857 = vmatprep.subr.mxu0 %v199
    %1858 = vmatpush1.msra.mxu0 %v198
    %1859 = vmatprep.subr.mxu0 %v203
    %1860 = vmatpush1.msra.mxu0 %v202
    %1861 = vmatprep.subr.mxu0 %v207
    %1862 = vmatpush1.msra.mxu0 %v206
    %1863 = vmatprep.subr.mxu0 %v211
    %1864 = vmatpush1.msra.mxu0 %v210
    %1865 = vmatprep.subr.mxu0 %v215
    %1866 = vmatpush1.msra.mxu0 %v214
    %1867 = vmatprep.subr.mxu0 %v219
    %1868 = vmatpush1.msra.mxu0 %v218
    %1869 = vmatprep.subr.mxu0 %v223
    %1870 = vmatpush1.msra.mxu0 %v222
    %1871 = vmatprep.subr.mxu0 %v227
    %1872 = vmatpush1.msra.mxu0 %v226
    %1873 = vmatprep.subr.mxu0 %v231
    %1874 = vmatpush1.msra.mxu0 %v230
    %1875 = vmatprep.subr.mxu0 %v235
    %1876 = vmatpush1.msra.mxu0 %v234
    %1877 = vmatprep.subr.mxu0 %v239
    %1878 = vmatpush1.msra.mxu0 %v238
    %1879 = vmatprep.subr.mxu0 %v243
    %1880 = vmatpush1.msra.mxu0 %v242
    %1881 = vmatprep.subr.mxu0 %v247
    %1882 = vmatpush1.msra.mxu0 %v246
    %1883 = vmatprep.subr.mxu0 %v251
    %1884 = vmatpush1.msra.mxu0 %v250
    %1885 = vmatprep.subr.mxu0 %v255
    %1886 = vmatpush1.msra.mxu0 %v254
    %1887 = vmatprep.subr.mxu0 %v259
    %1888 = vmatpush1.msra.mxu0 %v258
    %1889 = vmatprep.subr.mxu0 %v263
    %1890 = vmatpush1.msra.mxu0 %v262
    %1891 = vmatprep.subr.mxu0 %v267
    %1892 = vmatpush1.msra.mxu0 %v266
    %1893 = vmatprep.subr.mxu0 %v271
    %1894 = vmatpush1.msra.mxu0 %v270
    %1895 = vmatprep.subr.mxu0 %v275
    %1896 = vmatpush1.msra.mxu0 %v274
    %1897 = vmatprep.subr.mxu0 %v279
    %1898 = vmatpush1.msra.mxu0 %v278
    %1899 = vmatprep.subr.mxu0 %v283
    %1900 = vmatpush1.msra.mxu0 %v282
    %1901 = vmatprep.subr.mxu0 %v287
    %1902 = vmatpush1.msra.mxu0 %v286
    %1903 = vmatprep.subr.mxu0 %v291
    %1904 = vmatpush1.msra.mxu0 %v290
    %1905 = vmatprep.subr.mxu0 %v295
    %1906 = vmatpush1.msra.mxu0 %v294
    %1907 = vmatprep.subr.mxu0 %v299
    %1908 = vmatpush1.msra.mxu0 %v298
    %1909 = vmatprep.mubr.f32.mxu0 %v1843
    %1910 = vmatmul.mubr.f32.gmra.mrb[0].mxu0 %v497
    %v1911 = vpop.f32.mrb[0].mxu0
    %v1912 = vadd.f32 %v307, %v1911
    %v1913 = vpop.f32.mrb[0].mxu0
    %v1914 = vadd.f32 %v311, %v1913
    %1915 = vdwg.mxu0
    %1916 = vmatprep.subr.mxu0 %v177
    %1917 = vmatpush1.msra.mxu0 %v176
    %1918 = vmatprep.subr.mxu0 %v181
    %1919 = vmatpush1.msra.mxu0 %v180
    %1920 = vmatprep.subr.mxu0 %v185
    %1921 = vmatpush1.msra.mxu0 %v184
    %1922 = vmatprep.subr.mxu0 %v189
    %1923 = vmatpush1.msra.mxu0 %v188
    %1924 = vmatprep.subr.mxu0 %v193
    %1925 = vmatpush1.msra.mxu0 %v192
    %1926 = vmatprep.subr.mxu0 %v197
    %1927 = vmatpush1.msra.mxu0 %v196
    %1928 = vmatprep.subr.mxu0 %v201
    %1929 = vmatpush1.msra.mxu0 %v200
    %1930 = vmatprep.subr.mxu0 %v205
    %1931 = vmatpush1.msra.mxu0 %v204
    %1932 = vmatprep.subr.mxu0 %v209
    %1933 = vmatpush1.msra.mxu0 %v208
    %1934 = vmatprep.subr.mxu0 %v213
    %1935 = vmatpush1.msra.mxu0 %v212
    %1936 = vmatprep.subr.mxu0 %v217
    %1937 = vmatpush1.msra.mxu0 %v216
    %1938 = vmatprep.subr.mxu0 %v221
    %1939 = vmatpush1.msra.mxu0 %v220
    %1940 = vmatprep.subr.mxu0 %v225
    %1941 = vmatpush1.msra.mxu0 %v224
    %1942 = vmatprep.subr.mxu0 %v229
    %1943 = vmatpush1.msra.mxu0 %v228
    %1944 = vmatprep.subr.mxu0 %v233
    %1945 = vmatpush1.msra.mxu0 %v232
    %1946 = vmatprep.subr.mxu0 %v237
    %1947 = vmatpush1.msra.mxu0 %v236
    %1948 = vmatprep.subr.mxu0 %v241
    %1949 = vmatpush1.msra.mxu0 %v240
    %1950 = vmatprep.subr.mxu0 %v245
    %1951 = vmatpush1.msra.mxu0 %v244
    %1952 = vmatprep.subr.mxu0 %v249
    %1953 = vmatpush1.msra.mxu0 %v248
    %1954 = vmatprep.subr.mxu0 %v253
    %1955 = vmatpush1.msra.mxu0 %v252
    %1956 = vmatprep.subr.mxu0 %v257
    %1957 = vmatpush1.msra.mxu0 %v256
    %1958 = vmatprep.subr.mxu0 %v261
    %1959 = vmatpush1.msra.mxu0 %v260
    %1960 = vmatprep.subr.mxu0 %v265
    %1961 = vmatpush1.msra.mxu0 %v264
    %1962 = vmatprep.subr.mxu0 %v269
    %1963 = vmatpush1.msra.mxu0 %v268
    %1964 = vmatprep.subr.mxu0 %v273
    %1965 = vmatpush1.msra.mxu0 %v272
    %1966 = vmatprep.subr.mxu0 %v277
    %1967 = vmatpush1.msra.mxu0 %v276
    %1968 = vmatprep.subr.mxu0 %v281
    %1969 = vmatpush1.msra.mxu0 %v280
    %1970 = vmatprep.subr.mxu0 %v285
    %1971 = vmatpush1.msra.mxu0 %v284
    %1972 = vmatprep.subr.mxu0 %v289
    %1973 = vmatpush1.msra.mxu0 %v288
    %1974 = vmatprep.subr.mxu0 %v293
    %1975 = vmatpush1.msra.mxu0 %v292
    %1976 = vmatprep.subr.mxu0 %v297
    %1977 = vmatpush1.msra.mxu0 %v296
    %1978 = vmatprep.subr.mxu0 %v301
    %1979 = vmatpush1.msra.mxu0 %v300
    %1980 = vmatprep.mubr.f32.mxu0 %v1843
    %1981 = vmatmul.mubr.f32.gmra.mrb[0].mxu0 %v497
    %v1982 = vpop.f32.mrb[0].mxu0
    %v1983 = vadd.f32 %v315, %v1982
    %v1984 = vpop.f32.mrb[0].mxu0
    %v1985 = vadd.f32 %v319, %v1984
    %1986 = vdwg.mxu0
    %v1987 = vxor.u32 %v1912, 2147483648
    %v1988 = vmul.f32 %v1987, 1.442695
    %v1989 = vpow.pop %v1988
    %v1990 = vadd.f32 %v1989, 1.0
    %v1991 = vrcp.pop %v1990
    %v1992 = vmul.f32 1.0, %v1991
    %v1993 = vxor.u32 %v1914, 2147483648
    %v1994 = vmul.f32 %v1993, 1.442695
    %v1995 = vpow.pop %v1994
    %v1996 = vadd.f32 %v1995, 1.0
    %v1997 = vrcp.pop %v1996
    %v1998 = vmul.f32 1.0, %v1997
    %v1999 = vtanh.pop %v1983
    %v2000 = vxor.u32 %v1985, 2147483648
    %v2001 = vmul.f32 %v2000, 1.442695
    %v2002 = vpow.pop %v2001
    %v2003 = vadd.f32 %v2002, 1.0
    %v2004 = vrcp.pop %v2003
    %v2005 = vmul.f32 1.0, %v2004
    %v2006 = vmul.f32 %v1998, %v495
    %v2007 = vmul.f32 %v1992, %v1999
    %v2008 = vadd.f32 %v2006, %v2007
    %v2009 = vtanh.pop %v2008
    %v2010 = vmul.f32 %v2005, %v2009
    %v2012 = vcombine.high %v2010, %v2010
    %v2014 = vunpack.c.l.s4 1966171168
    %v2015 = vunpack.c.0.s8 %v2014
    %v2016 = vlaneseq
    %v2017 = vshrl.u32 %v2016, 7
    %v2018 = vsub.s32 %v2015, %v2017
    %v2019 = vrot.slane %v2010, %v2018
    %v2021 = vunpack.c.l.s4 1966171168
    %v2022 = vunpack.c.0.s8 %v2021
    %v2023 = vlaneseq
    %v2024 = vshrl.u32 %v2023, 7
    %v2025 = vsub.s32 %v2022, %v2024
    %v2026 = vrot.slane %v2012, %v2025
    %v2027 = vcombine.high %v2019, %v2019
    %v2028 = vcombine.high %v2026, %v2026
    %v2030 = vunpack.c.l.s4 1966171168
    %v2031 = vunpack.c.0.s8 %v2030
    %v2032 = vlaneseq
    %v2033 = vshrl.u32 %v2032, 7
    %v2034 = vsub.s32 %v2031, %v2033
    %v2035 = vrot.slane %v2019, %v2034
    %v2037 = vunpack.c.l.s4 1966171168
    %v2038 = vunpack.c.0.s8 %v2037
    %v2039 = vlaneseq
    %v2040 = vshrl.u32 %v2039, 7
    %v2041 = vsub.s32 %v2038, %v2040
    %v2042 = vrot.slane %v2026, %v2041
    %v2044 = vunpack.c.l.s4 1966171168
    %v2045 = vunpack.c.0.s8 %v2044
    %v2046 = vlaneseq
    %v2047 = vshrl.u32 %v2046, 7
    %v2048 = vsub.s32 %v2045, %v2047
    %v2049 = vrot.slane %v2027, %v2048
    %v2051 = vunpack.c.l.s4 1966171168
    %v2052 = vunpack.c.0.s8 %v2051
    %v2053 = vlaneseq
    %v2054 = vshrl.u32 %v2053, 7
    %v2055 = vsub.s32 %v2052, %v2054
    %v2056 = vrot.slane %v2028, %v2055
    %v2057 = vcombine.high %v2035, %v2035
    %v2058 = vcombine.high %v2042, %v2042
    %v2059 = vcombine.high %v2049, %v2049
    %v2060 = vcombine.high %v2056, %v2056
    %2069 = vmatprep.subr.mxu0 0.0
    %2070 = vmatpush1.xpose.msra.mxu0 %v46
    %2071 = vmatprep.subr.mxu0 0.0
    %2072 = vmatpush1.xpose.msra.mxu0 %v47
    %2073 = vmatprep.subr.mxu0 0.0
    %2074 = vmatpush1.xpose.msra.mxu0 %v48
    %2075 = vmatprep.subr.mxu0 0.0
    %2076 = vmatpush1.xpose.msra.mxu0 %v49
    %2077 = vmatprep.subr.mxu0 0.0
    %2078 = vmatpush1.xpose.msra.mxu0 %v50
    %2079 = vmatprep.subr.mxu0 0.0
    %2080 = vmatpush1.xpose.msra.mxu0 %v51
    %2081 = vmatprep.subr.mxu0 0.0
    %2082 = vmatpush1.xpose.msra.mxu0 %v52
    %2083 = vmatprep.subr.mxu0 0.0
    %2084 = vmatpush1.xpose.msra.mxu0 %v53
    %2085 = vmatprep.subr.mxu0 0.0
    %2086 = vmatpush1.xpose.msra.mxu0 %v54
    %2087 = vmatprep.subr.mxu0 0.0
    %2088 = vmatpush1.xpose.msra.mxu0 %v55
    %2089 = vmatprep.subr.mxu0 0.0
    %2090 = vmatpush1.xpose.msra.mxu0 %v56
    %2091 = vmatprep.subr.mxu0 0.0
    %2092 = vmatpush1.xpose.msra.mxu0 %v57
    %2093 = vmatprep.subr.mxu0 0.0
    %2094 = vmatpush1.xpose.msra.mxu0 %v58
    %2095 = vmatprep.subr.mxu0 0.0
    %2096 = vmatpush1.xpose.msra.mxu0 %v59
    %2097 = vmatprep.subr.mxu0 0.0
    %2098 = vmatpush1.xpose.msra.mxu0 %v60
    %2099 = vmatprep.subr.mxu0 0.0
    %2100 = vmatpush1.xpose.msra.mxu0 %v61
    %2101 = vmatprep.subr.mxu0 0.0
    %2102 = vmatpush1.xpose.msra.mxu0 0.0
    %2103 = vmatprep.subr.mxu0 0.0
    %2104 = vmatpush1.xpose.msra.mxu0 0.0
    %2105 = vmatprep.subr.mxu0 0.0
    %2106 = vmatpush1.xpose.msra.mxu0 0.0
    %2107 = vmatprep.subr.mxu0 0.0
    %2108 = vmatpush1.xpose.msra.mxu0 0.0
    %2109 = vmatprep.subr.mxu0 0.0
    %2110 = vmatpush1.xpose.msra.mxu0 0.0
    %2111 = vmatprep.subr.mxu0 0.0
    %2112 = vmatpush1.xpose.msra.mxu0 0.0
    %2113 = vmatprep.subr.mxu0 0.0
    %2114 = vmatpush1.xpose.msra.mxu0 0.0
    %2115 = vmatprep.subr.mxu0 0.0
    %2116 = vmatpush1.xpose.msra.mxu0 0.0
    %2117 = vmatprep.subr.mxu0 0.0
    %2118 = vmatpush1.xpose.msra.mxu0 0.0
    %2119 = vmatprep.subr.mxu0 0.0
    %2120 = vmatpush1.xpose.msra.mxu0 0.0
    %2121 = vmatprep.subr.mxu0 0.0
    %2122 = vmatpush1.xpose.msra.mxu0 0.0
    %2123 = vmatprep.subr.mxu0 0.0
    %2124 = vmatpush1.xpose.msra.mxu0 0.0
    %2125 = vmatprep.subr.mxu0 0.0
    %2126 = vmatpush1.xpose.msra.mxu0 0.0
    %2127 = vmatprep.subr.mxu0 0.0
    %2128 = vmatpush1.xpose.msra.mxu0 0.0
    %2129 = vmatprep.subr.mxu0 0.0
    %2130 = vmatpush1.xpose.msra.mxu0 0.0
    %2131 = vmatprep.subr.mxu0 0.0
    %2132 = vmatpush1.xpose.msra.mxu0 0.0
    %2133 = vmatprep.mubr.f32.mxu0 0.0
    %2134 = vmatmul.mubr.f32.gmra.mrb[0].mxu0 %v2035
    %v2135 = vpop.f32.mrb[0].mxu0
    %v2136 = vadd.f32 0.0, %v2135
    %v2137 = vpop.f32.mrb[0].mxu0
    %2138 = vdwg.mxu0
    %2139 = vmatprep.subr.mxu0 0.0
    %2140 = vmatpush1.xpose.msra.mxu0 %v62
    %2141 = vmatprep.subr.mxu0 0.0
    %2142 = vmatpush1.xpose.msra.mxu0 %v63
    %2143 = vmatprep.subr.mxu0 0.0
    %2144 = vmatpush1.xpose.msra.mxu0 %v64
    %2145 = vmatprep.subr.mxu0 0.0
    %2146 = vmatpush1.xpose.msra.mxu0 %v65
    %2147 = vmatprep.subr.mxu0 0.0
    %2148 = vmatpush1.xpose.msra.mxu0 %v66
    %2149 = vmatprep.subr.mxu0 0.0
    %2150 = vmatpush1.xpose.msra.mxu0 %v67
    %2151 = vmatprep.subr.mxu0 0.0
    %2152 = vmatpush1.xpose.msra.mxu0 %v68
    %2153 = vmatprep.subr.mxu0 0.0
    %2154 = vmatpush1.xpose.msra.mxu0 %v69
    %2155 = vmatprep.subr.mxu0 0.0
    %2156 = vmatpush1.xpose.msra.mxu0 %v70
    %2157 = vmatprep.subr.mxu0 0.0
    %2158 = vmatpush1.xpose.msra.mxu0 %v71
    %2159 = vmatprep.subr.mxu0 0.0
    %2160 = vmatpush1.xpose.msra.mxu0 %v72
    %2161 = vmatprep.subr.mxu0 0.0
    %2162 = vmatpush1.xpose.msra.mxu0 %v73
    %2163 = vmatprep.subr.mxu0 0.0
    %2164 = vmatpush1.xpose.msra.mxu0 %v74
    %2165 = vmatprep.subr.mxu0 0.0
    %2166 = vmatpush1.xpose.msra.mxu0 %v75
    %2167 = vmatprep.subr.mxu0 0.0
    %2168 = vmatpush1.xpose.msra.mxu0 %v76
    %2169 = vmatprep.subr.mxu0 0.0
    %2170 = vmatpush1.xpose.msra.mxu0 %v77
    %2171 = vmatprep.subr.mxu0 0.0
    %2172 = vmatpush1.xpose.msra.mxu0 0.0
    %2173 = vmatprep.subr.mxu0 0.0
    %2174 = vmatpush1.xpose.msra.mxu0 0.0
    %2175 = vmatprep.subr.mxu0 0.0
    %2176 = vmatpush1.xpose.msra.mxu0 0.0
    %2177 = vmatprep.subr.mxu0 0.0
    %2178 = vmatpush1.xpose.msra.mxu0 0.0
    %2179 = vmatprep.subr.mxu0 0.0
    %2180 = vmatpush1.xpose.msra.mxu0 0.0
    %2181 = vmatprep.subr.mxu0 0.0
    %2182 = vmatpush1.xpose.msra.mxu0 0.0
    %2183 = vmatprep.subr.mxu0 0.0
    %2184 = vmatpush1.xpose.msra.mxu0 0.0
    %2185 = vmatprep.subr.mxu0 0.0
    %2186 = vmatpush1.xpose.msra.mxu0 0.0
    %2187 = vmatprep.subr.mxu0 0.0
    %2188 = vmatpush1.xpose.msra.mxu0 0.0
    %2189 = vmatprep.subr.mxu0 0.0
    %2190 = vmatpush1.xpose.msra.mxu0 0.0
    %2191 = vmatprep.subr.mxu0 0.0
    %2192 = vmatpush1.xpose.msra.mxu0 0.0
    %2193 = vmatprep.subr.mxu0 0.0
    %2194 = vmatpush1.xpose.msra.mxu0 0.0
    %2195 = vmatprep.subr.mxu0 0.0
    %2196 = vmatpush1.xpose.msra.mxu0 0.0
    %2197 = vmatprep.subr.mxu0 0.0
    %2198 = vmatpush1.xpose.msra.mxu0 0.0
    %2199 = vmatprep.subr.mxu0 0.0
    %2200 = vmatpush1.xpose.msra.mxu0 0.0
    %2201 = vmatprep.subr.mxu0 0.0
    %2202 = vmatpush1.xpose.msra.mxu0 0.0
    %2203 = vmatprep.mubr.f32.mxu0 0.0
    %2204 = vmatmul.mubr.f32.gmra.mrb[0].mxu0 %v2049
    %v2205 = vpop.f32.mrb[0].mxu0
    %v2206 = vadd.f32 0.0, %v2205
    %v2207 = vpop.f32.mrb[0].mxu0
    %2208 = vdwg.mxu0
    %2209 = vmatprep.subr.mxu0 0.0
    %2210 = vmatpush1.xpose.msra.mxu0 %v78
    %2211 = vmatprep.subr.mxu0 0.0
    %2212 = vmatpush1.xpose.msra.mxu0 %v79
    %2213 = vmatprep.subr.mxu0 0.0
    %2214 = vmatpush1.xpose.msra.mxu0 %v80
    %2215 = vmatprep.subr.mxu0 0.0
    %2216 = vmatpush1.xpose.msra.mxu0 %v81
    %2217 = vmatprep.subr.mxu0 0.0
    %2218 = vmatpush1.xpose.msra.mxu0 %v82
    %2219 = vmatprep.subr.mxu0 0.0
    %2220 = vmatpush1.xpose.msra.mxu0 %v83
    %2221 = vmatprep.subr.mxu0 0.0
    %2222 = vmatpush1.xpose.msra.mxu0 %v84
    %2223 = vmatprep.subr.mxu0 0.0
    %2224 = vmatpush1.xpose.msra.mxu0 %v85
    %2225 = vmatprep.subr.mxu0 0.0
    %2226 = vmatpush1.xpose.msra.mxu0 %v86
    %2227 = vmatprep.subr.mxu0 0.0
    %2228 = vmatpush1.xpose.msra.mxu0 %v87
    %2229 = vmatprep.subr.mxu0 0.0
    %2230 = vmatpush1.xpose.msra.mxu0 %v88
    %2231 = vmatprep.subr.mxu0 0.0
    %2232 = vmatpush1.xpose.msra.mxu0 %v89
    %2233 = vmatprep.subr.mxu0 0.0
    %2234 = vmatpush1.xpose.msra.mxu0 %v90
    %2235 = vmatprep.subr.mxu0 0.0
    %2236 = vmatpush1.xpose.msra.mxu0 %v91
    %2237 = vmatprep.subr.mxu0 0.0
    %2238 = vmatpush1.xpose.msra.mxu0 %v92
    %2239 = vmatprep.subr.mxu0 0.0
    %2240 = vmatpush1.xpose.msra.mxu0 %v93
    %2241 = vmatprep.subr.mxu0 0.0
    %2242 = vmatpush1.xpose.msra.mxu0 0.0
    %2243 = vmatprep.subr.mxu0 0.0
    %2244 = vmatpush1.xpose.msra.mxu0 0.0
    %2245 = vmatprep.subr.mxu0 0.0
    %2246 = vmatpush1.xpose.msra.mxu0 0.0
    %2247 = vmatprep.subr.mxu0 0.0
    %2248 = vmatpush1.xpose.msra.mxu0 0.0
    %2249 = vmatprep.subr.mxu0 0.0
    %2250 = vmatpush1.xpose.msra.mxu0 0.0
    %2251 = vmatprep.subr.mxu0 0.0
    %2252 = vmatpush1.xpose.msra.mxu0 0.0
    %2253 = vmatprep.subr.mxu0 0.0
    %2254 = vmatpush1.xpose.msra.mxu0 0.0
    %2255 = vmatprep.subr.mxu0 0.0
    %2256 = vmatpush1.xpose.msra.mxu0 0.0
    %2257 = vmatprep.subr.mxu0 0.0
    %2258 = vmatpush1.xpose.msra.mxu0 0.0
    %2259 = vmatprep.subr.mxu0 0.0
    %2260 = vmatpush1.xpose.msra.mxu0 0.0
    %2261 = vmatprep.subr.mxu0 0.0
    %2262 = vmatpush1.xpose.msra.mxu0 0.0
    %2263 = vmatprep.subr.mxu0 0.0
    %2264 = vmatpush1.xpose.msra.mxu0 0.0
    %2265 = vmatprep.subr.mxu0 0.0
    %2266 = vmatpush1.xpose.msra.mxu0 0.0
    %2267 = vmatprep.subr.mxu0 0.0
    %2268 = vmatpush1.xpose.msra.mxu0 0.0
    %2269 = vmatprep.subr.mxu0 0.0
    %2270 = vmatpush1.xpose.msra.mxu0 0.0
    %2271 = vmatprep.subr.mxu0 0.0
    %2272 = vmatpush1.xpose.msra.mxu0 0.0
    %2273 = vmatprep.mubr.f32.mxu0 0.0
    %2274 = vmatmul.mubr.f32.gmra.mrb[0].mxu0 %v2057
    %v2275 = vpop.f32.mrb[0].mxu0
    %v2276 = vadd.f32 0.0, %v2275
    %v2277 = vpop.f32.mrb[0].mxu0
    %2278 = vdwg.mxu0
    %2279 = vmatprep.subr.mxu0 0.0
    %2280 = vmatpush1.xpose.msra.mxu0 %v94
    %2281 = vmatprep.subr.mxu0 0.0
    %2282 = vmatpush1.xpose.msra.mxu0 %v95
    %2283 = vmatprep.subr.mxu0 0.0
    %2284 = vmatpush1.xpose.msra.mxu0 %v96
    %2285 = vmatprep.subr.mxu0 0.0
    %2286 = vmatpush1.xpose.msra.mxu0 %v97
    %2287 = vmatprep.subr.mxu0 0.0
    %2288 = vmatpush1.xpose.msra.mxu0 %v98
    %2289 = vmatprep.subr.mxu0 0.0
    %2290 = vmatpush1.xpose.msra.mxu0 %v99
    %2291 = vmatprep.subr.mxu0 0.0
    %2292 = vmatpush1.xpose.msra.mxu0 %v100
    %2293 = vmatprep.subr.mxu0 0.0
    %2294 = vmatpush1.xpose.msra.mxu0 %v101
    %2295 = vmatprep.subr.mxu0 0.0
    %2296 = vmatpush1.xpose.msra.mxu0 %v102
    %2297 = vmatprep.subr.mxu0 0.0
    %2298 = vmatpush1.xpose.msra.mxu0 %v103
    %2299 = vmatprep.subr.mxu0 0.0
    %2300 = vmatpush1.xpose.msra.mxu0 %v104
    %2301 = vmatprep.subr.mxu0 0.0
    %2302 = vmatpush1.xpose.msra.mxu0 %v105
    %2303 = vmatprep.subr.mxu0 0.0
    %2304 = vmatpush1.xpose.msra.mxu0 %v106
    %2305 = vmatprep.subr.mxu0 0.0
    %2306 = vmatpush1.xpose.msra.mxu0 %v107
    %2307 = vmatprep.subr.mxu0 0.0
    %2308 = vmatpush1.xpose.msra.mxu0 %v108
    %2309 = vmatprep.subr.mxu0 0.0
    %2310 = vmatpush1.xpose.msra.mxu0 %v109
    %2311 = vmatprep.subr.mxu0 0.0
    %2312 = vmatpush1.xpose.msra.mxu0 0.0
    %2313 = vmatprep.subr.mxu0 0.0
    %2314 = vmatpush1.xpose.msra.mxu0 0.0
    %2315 = vmatprep.subr.mxu0 0.0
    %2316 = vmatpush1.xpose.msra.mxu0 0.0
    %2317 = vmatprep.subr.mxu0 0.0
    %2318 = vmatpush1.xpose.msra.mxu0 0.0
    %2319 = vmatprep.subr.mxu0 0.0
    %2320 = vmatpush1.xpose.msra.mxu0 0.0
    %2321 = vmatprep.subr.mxu0 0.0
    %2322 = vmatpush1.xpose.msra.mxu0 0.0
    %2323 = vmatprep.subr.mxu0 0.0
    %2324 = vmatpush1.xpose.msra.mxu0 0.0
    %2325 = vmatprep.subr.mxu0 0.0
    %2326 = vmatpush1.xpose.msra.mxu0 0.0
    %2327 = vmatprep.subr.mxu0 0.0
    %2328 = vmatpush1.xpose.msra.mxu0 0.0
    %2329 = vmatprep.subr.mxu0 0.0
    %2330 = vmatpush1.xpose.msra.mxu0 0.0
    %2331 = vmatprep.subr.mxu0 0.0
    %2332 = vmatpush1.xpose.msra.mxu0 0.0
    %2333 = vmatprep.subr.mxu0 0.0
    %2334 = vmatpush1.xpose.msra.mxu0 0.0
    %2335 = vmatprep.subr.mxu0 0.0
    %2336 = vmatpush1.xpose.msra.mxu0 0.0
    %2337 = vmatprep.subr.mxu0 0.0
    %2338 = vmatpush1.xpose.msra.mxu0 0.0
    %2339 = vmatprep.subr.mxu0 0.0
    %2340 = vmatpush1.xpose.msra.mxu0 0.0
    %2341 = vmatprep.subr.mxu0 0.0
    %2342 = vmatpush1.xpose.msra.mxu0 0.0
    %2343 = vmatprep.mubr.f32.mxu0 0.0
    %2344 = vmatmul.mubr.f32.gmra.mrb[0].mxu0 %v2059
    %v2345 = vpop.f32.mrb[0].mxu0
    %v2346 = vadd.f32 0.0, %v2345
    %v2347 = vpop.f32.mrb[0].mxu0
    %2348 = vdwg.mxu0
    %2349 = vmatprep.subr.mxu0 0.0
    %2350 = vmatpush1.xpose.msra.mxu0 %v110
    %2351 = vmatprep.subr.mxu0 0.0
    %2352 = vmatpush1.xpose.msra.mxu0 %v111
    %2353 = vmatprep.subr.mxu0 0.0
    %2354 = vmatpush1.xpose.msra.mxu0 %v112
    %2355 = vmatprep.subr.mxu0 0.0
    %2356 = vmatpush1.xpose.msra.mxu0 %v113
    %2357 = vmatprep.subr.mxu0 0.0
    %2358 = vmatpush1.xpose.msra.mxu0 %v114
    %2359 = vmatprep.subr.mxu0 0.0
    %2360 = vmatpush1.xpose.msra.mxu0 %v115
    %2361 = vmatprep.subr.mxu0 0.0
    %2362 = vmatpush1.xpose.msra.mxu0 %v116
    %2363 = vmatprep.subr.mxu0 0.0
    %2364 = vmatpush1.xpose.msra.mxu0 %v117
    %2365 = vmatprep.subr.mxu0 0.0
    %2366 = vmatpush1.xpose.msra.mxu0 %v118
    %2367 = vmatprep.subr.mxu0 0.0
    %2368 = vmatpush1.xpose.msra.mxu0 %v119
    %2369 = vmatprep.subr.mxu0 0.0
    %2370 = vmatpush1.xpose.msra.mxu0 %v120
    %2371 = vmatprep.subr.mxu0 0.0
    %2372 = vmatpush1.xpose.msra.mxu0 %v121
    %2373 = vmatprep.subr.mxu0 0.0
    %2374 = vmatpush1.xpose.msra.mxu0 %v122
    %2375 = vmatprep.subr.mxu0 0.0
    %2376 = vmatpush1.xpose.msra.mxu0 %v123
    %2377 = vmatprep.subr.mxu0 0.0
    %2378 = vmatpush1.xpose.msra.mxu0 %v124
    %2379 = vmatprep.subr.mxu0 0.0
    %2380 = vmatpush1.xpose.msra.mxu0 %v125
    %2381 = vmatprep.subr.mxu0 0.0
    %2382 = vmatpush1.xpose.msra.mxu0 0.0
    %2383 = vmatprep.subr.mxu0 0.0
    %2384 = vmatpush1.xpose.msra.mxu0 0.0
    %2385 = vmatprep.subr.mxu0 0.0
    %2386 = vmatpush1.xpose.msra.mxu0 0.0
    %2387 = vmatprep.subr.mxu0 0.0
    %2388 = vmatpush1.xpose.msra.mxu0 0.0
    %2389 = vmatprep.subr.mxu0 0.0
    %2390 = vmatpush1.xpose.msra.mxu0 0.0
    %2391 = vmatprep.subr.mxu0 0.0
    %2392 = vmatpush1.xpose.msra.mxu0 0.0
    %2393 = vmatprep.subr.mxu0 0.0
    %2394 = vmatpush1.xpose.msra.mxu0 0.0
    %2395 = vmatprep.subr.mxu0 0.0
    %2396 = vmatpush1.xpose.msra.mxu0 0.0
    %2397 = vmatprep.subr.mxu0 0.0
    %2398 = vmatpush1.xpose.msra.mxu0 0.0
    %2399 = vmatprep.subr.mxu0 0.0
    %2400 = vmatpush1.xpose.msra.mxu0 0.0
    %2401 = vmatprep.subr.mxu0 0.0
    %2402 = vmatpush1.xpose.msra.mxu0 0.0
    %2403 = vmatprep.subr.mxu0 0.0
    %2404 = vmatpush1.xpose.msra.mxu0 0.0
    %2405 = vmatprep.subr.mxu0 0.0
    %2406 = vmatpush1.xpose.msra.mxu0 0.0
    %2407 = vmatprep.subr.mxu0 0.0
    %2408 = vmatpush1.xpose.msra.mxu0 0.0
    %2409 = vmatprep.subr.mxu0 0.0
    %2410 = vmatpush1.xpose.msra.mxu0 0.0
    %2411 = vmatprep.subr.mxu0 0.0
    %2412 = vmatpush1.xpose.msra.mxu0 0.0
    %2413 = vmatprep.mubr.f32.mxu0 0.0
    %2414 = vmatmul.mubr.f32.gmra.mrb[0].mxu0 %v2042
    %v2415 = vpop.f32.mrb[0].mxu0
    %v2416 = vadd.f32 0.0, %v2415
    %v2417 = vpop.f32.mrb[0].mxu0
    %2418 = vdwg.mxu0
    %2419 = vmatprep.subr.mxu0 0.0
    %2420 = vmatpush1.xpose.msra.mxu0 %v126
    %2421 = vmatprep.subr.mxu0 0.0
    %2422 = vmatpush1.xpose.msra.mxu0 %v127
    %2423 = vmatprep.subr.mxu0 0.0
    %2424 = vmatpush1.xpose.msra.mxu0 %v128
    %2425 = vmatprep.subr.mxu0 0.0
    %2426 = vmatpush1.xpose.msra.mxu0 %v129
    %2427 = vmatprep.subr.mxu0 0.0
    %2428 = vmatpush1.xpose.msra.mxu0 %v130
    %2429 = vmatprep.subr.mxu0 0.0
    %2430 = vmatpush1.xpose.msra.mxu0 %v131
    %2431 = vmatprep.subr.mxu0 0.0
    %2432 = vmatpush1.xpose.msra.mxu0 %v132
    %2433 = vmatprep.subr.mxu0 0.0
    %2434 = vmatpush1.xpose.msra.mxu0 %v133
    %2435 = vmatprep.subr.mxu0 0.0
    %2436 = vmatpush1.xpose.msra.mxu0 %v134
    %2437 = vmatprep.subr.mxu0 0.0
    %2438 = vmatpush1.xpose.msra.mxu0 %v135
    %2439 = vmatprep.subr.mxu0 0.0
    %2440 = vmatpush1.xpose.msra.mxu0 %v136
    %2441 = vmatprep.subr.mxu0 0.0
    %2442 = vmatpush1.xpose.msra.mxu0 %v137
    %2443 = vmatprep.subr.mxu0 0.0
    %2444 = vmatpush1.xpose.msra.mxu0 %v138
    %2445 = vmatprep.subr.mxu0 0.0
    %2446 = vmatpush1.xpose.msra.mxu0 %v139
    %2447 = vmatprep.subr.mxu0 0.0
    %2448 = vmatpush1.xpose.msra.mxu0 %v140
    %2449 = vmatprep.subr.mxu0 0.0
    %2450 = vmatpush1.xpose.msra.mxu0 %v141
    %2451 = vmatprep.subr.mxu0 0.0
    %2452 = vmatpush1.xpose.msra.mxu0 0.0
    %2453 = vmatprep.subr.mxu0 0.0
    %2454 = vmatpush1.xpose.msra.mxu0 0.0
    %2455 = vmatprep.subr.mxu0 0.0
    %2456 = vmatpush1.xpose.msra.mxu0 0.0
    %2457 = vmatprep.subr.mxu0 0.0
    %2458 = vmatpush1.xpose.msra.mxu0 0.0
    %2459 = vmatprep.subr.mxu0 0.0
    %2460 = vmatpush1.xpose.msra.mxu0 0.0
    %2461 = vmatprep.subr.mxu0 0.0
    %2462 = vmatpush1.xpose.msra.mxu0 0.0
    %2463 = vmatprep.subr.mxu0 0.0
    %2464 = vmatpush1.xpose.msra.mxu0 0.0
    %2465 = vmatprep.subr.mxu0 0.0
    %2466 = vmatpush1.xpose.msra.mxu0 0.0
    %2467 = vmatprep.subr.mxu0 0.0
    %2468 = vmatpush1.xpose.msra.mxu0 0.0
    %2469 = vmatprep.subr.mxu0 0.0
    %2470 = vmatpush1.xpose.msra.mxu0 0.0
    %2471 = vmatprep.subr.mxu0 0.0
    %2472 = vmatpush1.xpose.msra.mxu0 0.0
    %2473 = vmatprep.subr.mxu0 0.0
    %2474 = vmatpush1.xpose.msra.mxu0 0.0
    %2475 = vmatprep.subr.mxu0 0.0
    %2476 = vmatpush1.xpose.msra.mxu0 0.0
    %2477 = vmatprep.subr.mxu0 0.0
    %2478 = vmatpush1.xpose.msra.mxu0 0.0
    %2479 = vmatprep.subr.mxu0 0.0
    %2480 = vmatpush1.xpose.msra.mxu0 0.0
    %2481 = vmatprep.subr.mxu0 0.0
    %2482 = vmatpush1.xpose.msra.mxu0 0.0
    %2483 = vmatprep.mubr.f32.mxu0 0.0
    %2484 = vmatmul.mubr.f32.gmra.mrb[0].mxu0 %v2056
    %v2485 = vpop.f32.mrb[0].mxu0
    %v2486 = vadd.f32 0.0, %v2485
    %v2487 = vpop.f32.mrb[0].mxu0
    %2488 = vdwg.mxu0
    %2489 = vmatprep.subr.mxu0 0.0
    %2490 = vmatpush1.xpose.msra.mxu0 %v142
    %2491 = vmatprep.subr.mxu0 0.0
    %2492 = vmatpush1.xpose.msra.mxu0 %v143
    %2493 = vmatprep.subr.mxu0 0.0
    %2494 = vmatpush1.xpose.msra.mxu0 %v144
    %2495 = vmatprep.subr.mxu0 0.0
    %2496 = vmatpush1.xpose.msra.mxu0 %v145
    %2497 = vmatprep.subr.mxu0 0.0
    %2498 = vmatpush1.xpose.msra.mxu0 %v146
    %2499 = vmatprep.subr.mxu0 0.0
    %2500 = vmatpush1.xpose.msra.mxu0 %v147
    %2501 = vmatprep.subr.mxu0 0.0
    %2502 = vmatpush1.xpose.msra.mxu0 %v148
    %2503 = vmatprep.subr.mxu0 0.0
    %2504 = vmatpush1.xpose.msra.mxu0 %v149
    %2505 = vmatprep.subr.mxu0 0.0
    %2506 = vmatpush1.xpose.msra.mxu0 %v150
    %2507 = vmatprep.subr.mxu0 0.0
    %2508 = vmatpush1.xpose.msra.mxu0 %v151
    %2509 = vmatprep.subr.mxu0 0.0
    %2510 = vmatpush1.xpose.msra.mxu0 %v152
    %2511 = vmatprep.subr.mxu0 0.0
    %2512 = vmatpush1.xpose.msra.mxu0 %v153
    %2513 = vmatprep.subr.mxu0 0.0
    %2514 = vmatpush1.xpose.msra.mxu0 %v154
    %2515 = vmatprep.subr.mxu0 0.0
    %2516 = vmatpush1.xpose.msra.mxu0 %v155
    %2517 = vmatprep.subr.mxu0 0.0
    %2518 = vmatpush1.xpose.msra.mxu0 %v156
    %2519 = vmatprep.subr.mxu0 0.0
    %2520 = vmatpush1.xpose.msra.mxu0 %v157
    %2521 = vmatprep.subr.mxu0 0.0
    %2522 = vmatpush1.xpose.msra.mxu0 0.0
    %2523 = vmatprep.subr.mxu0 0.0
    %2524 = vmatpush1.xpose.msra.mxu0 0.0
    %2525 = vmatprep.subr.mxu0 0.0
    %2526 = vmatpush1.xpose.msra.mxu0 0.0
    %2527 = vmatprep.subr.mxu0 0.0
    %2528 = vmatpush1.xpose.msra.mxu0 0.0
    %2529 = vmatprep.subr.mxu0 0.0
    %2530 = vmatpush1.xpose.msra.mxu0 0.0
    %2531 = vmatprep.subr.mxu0 0.0
    %2532 = vmatpush1.xpose.msra.mxu0 0.0
    %2533 = vmatprep.subr.mxu0 0.0
    %2534 = vmatpush1.xpose.msra.mxu0 0.0
    %2535 = vmatprep.subr.mxu0 0.0
    %2536 = vmatpush1.xpose.msra.mxu0 0.0
    %2537 = vmatprep.subr.mxu0 0.0
    %2538 = vmatpush1.xpose.msra.mxu0 0.0
    %2539 = vmatprep.subr.mxu0 0.0
    %2540 = vmatpush1.xpose.msra.mxu0 0.0
    %2541 = vmatprep.subr.mxu0 0.0
    %2542 = vmatpush1.xpose.msra.mxu0 0.0
    %2543 = vmatprep.subr.mxu0 0.0
    %2544 = vmatpush1.xpose.msra.mxu0 0.0
    %2545 = vmatprep.subr.mxu0 0.0
    %2546 = vmatpush1.xpose.msra.mxu0 0.0
    %2547 = vmatprep.subr.mxu0 0.0
    %2548 = vmatpush1.xpose.msra.mxu0 0.0
    %2549 = vmatprep.subr.mxu0 0.0
    %2550 = vmatpush1.xpose.msra.mxu0 0.0
    %2551 = vmatprep.subr.mxu0 0.0
    %2552 = vmatpush1.xpose.msra.mxu0 0.0
    %2553 = vmatprep.mubr.f32.mxu0 0.0
    %2554 = vmatmul.mubr.f32.gmra.mrb[0].mxu0 %v2058
    %v2555 = vpop.f32.mrb[0].mxu0
    %v2556 = vadd.f32 0.0, %v2555
    %v2557 = vpop.f32.mrb[0].mxu0
    %2558 = vdwg.mxu0
    %2559 = vmatprep.subr.mxu0 0.0
    %2560 = vmatpush1.xpose.msra.mxu0 %v158
    %2561 = vmatprep.subr.mxu0 0.0
    %2562 = vmatpush1.xpose.msra.mxu0 %v159
    %2563 = vmatprep.subr.mxu0 0.0
    %2564 = vmatpush1.xpose.msra.mxu0 %v160
    %2565 = vmatprep.subr.mxu0 0.0
    %2566 = vmatpush1.xpose.msra.mxu0 %v161
    %2567 = vmatprep.subr.mxu0 0.0
    %2568 = vmatpush1.xpose.msra.mxu0 %v162
    %2569 = vmatprep.subr.mxu0 0.0
    %2570 = vmatpush1.xpose.msra.mxu0 %v163
    %2571 = vmatprep.subr.mxu0 0.0
    %2572 = vmatpush1.xpose.msra.mxu0 %v164
    %2573 = vmatprep.subr.mxu0 0.0
    %2574 = vmatpush1.xpose.msra.mxu0 %v165
    %2575 = vmatprep.subr.mxu0 0.0
    %2576 = vmatpush1.xpose.msra.mxu0 %v166
    %2577 = vmatprep.subr.mxu0 0.0
    %2578 = vmatpush1.xpose.msra.mxu0 %v167
    %2579 = vmatprep.subr.mxu0 0.0
    %2580 = vmatpush1.xpose.msra.mxu0 %v168
    %2581 = vmatprep.subr.mxu0 0.0
    %2582 = vmatpush1.xpose.msra.mxu0 %v169
    %2583 = vmatprep.subr.mxu0 0.0
    %2584 = vmatpush1.xpose.msra.mxu0 %v170
    %2585 = vmatprep.subr.mxu0 0.0
    %2586 = vmatpush1.xpose.msra.mxu0 %v171
    %2587 = vmatprep.subr.mxu0 0.0
    %2588 = vmatpush1.xpose.msra.mxu0 %v172
    %2589 = vmatprep.subr.mxu0 0.0
    %2590 = vmatpush1.xpose.msra.mxu0 %v173
    %2591 = vmatprep.subr.mxu0 0.0
    %2592 = vmatpush1.xpose.msra.mxu0 0.0
    %2593 = vmatprep.subr.mxu0 0.0
    %2594 = vmatpush1.xpose.msra.mxu0 0.0
    %2595 = vmatprep.subr.mxu0 0.0
    %2596 = vmatpush1.xpose.msra.mxu0 0.0
    %2597 = vmatprep.subr.mxu0 0.0
    %2598 = vmatpush1.xpose.msra.mxu0 0.0
    %2599 = vmatprep.subr.mxu0 0.0
    %2600 = vmatpush1.xpose.msra.mxu0 0.0
    %2601 = vmatprep.subr.mxu0 0.0
    %2602 = vmatpush1.xpose.msra.mxu0 0.0
    %2603 = vmatprep.subr.mxu0 0.0
    %2604 = vmatpush1.xpose.msra.mxu0 0.0
    %2605 = vmatprep.subr.mxu0 0.0
    %2606 = vmatpush1.xpose.msra.mxu0 0.0
    %2607 = vmatprep.subr.mxu0 0.0
    %2608 = vmatpush1.xpose.msra.mxu0 0.0
    %2609 = vmatprep.subr.mxu0 0.0
    %2610 = vmatpush1.xpose.msra.mxu0 0.0
    %2611 = vmatprep.subr.mxu0 0.0
    %2612 = vmatpush1.xpose.msra.mxu0 0.0
    %2613 = vmatprep.subr.mxu0 0.0
    %2614 = vmatpush1.xpose.msra.mxu0 0.0
    %2615 = vmatprep.subr.mxu0 0.0
    %2616 = vmatpush1.xpose.msra.mxu0 0.0
    %2617 = vmatprep.subr.mxu0 0.0
    %2618 = vmatpush1.xpose.msra.mxu0 0.0
    %2619 = vmatprep.subr.mxu0 0.0
    %2620 = vmatpush1.xpose.msra.mxu0 0.0
    %2621 = vmatprep.subr.mxu0 0.0
    %2622 = vmatpush1.xpose.msra.mxu0 0.0
    %2623 = vmatprep.mubr.f32.mxu0 0.0
    %2624 = vmatmul.mubr.f32.gmra.mrb[0].mxu0 %v2060
    %v2625 = vpop.f32.mrb[0].mxu0
    %v2626 = vadd.f32 0.0, %v2625
    %v2627 = vpop.f32.mrb[0].mxu0
    %2628 = vdwg.mxu0
    %v2629 = vadd.f32 %v2136, %v331
    %v2630 = vadd.f32 %v2206, %v1117
    %v2631 = vadd.f32 %v2276, %v1118
    %v2632 = vadd.f32 %v2346, %v1119
    %v2633 = vadd.f32 %v2416, %v1120
    %v2634 = vadd.f32 %v2486, %v1121
    %v2635 = vadd.f32 %v2556, %v1122
    %v2636 = vadd.f32 %v2626, %v1123
    %v2645 = vrot.slane %v2630, 7
    %v2646 = vsel %vm1149, %v2645, %v2629
    %v2647 = vrot.slane %v2631, 6
    %v2648 = vsel %vm1152, %v2647, %v2646
    %v2649 = vrot.slane %v2632, 5
    %v2650 = vsel %vm1155, %v2649, %v2648
    %v2651 = vrot.slane %v2633, 4
    %v2652 = vsel %vm1158, %v2651, %v2650
    %v2653 = vrot.slane %v2634, 3
    %v2654 = vsel %vm1161, %v2653, %v2652
    %v2655 = vrot.slane %v2635, 2
    %v2656 = vsel %vm1164, %v2655, %v2654
    %v2657 = vrot.slane %v2636, 1
    %v2658 = vsel %vm1167, %v2657, %v2656
    %2660 = vmax.xlane.f32.xlu0 %v2658
    %v2661 = vpop.xlane.xlu0 %2660
    %v2663 = vrot.slane %v2661, 1
    %v2664 = vrot.slane %v2661, 2
    %v2665 = vrot.slane %v2661, 3
    %v2666 = vrot.slane %v2661, 4
    %v2667 = vrot.slane %v2661, 5
    %v2668 = vrot.slane %v2661, 6
    %v2669 = vrot.slane %v2661, 7
    %v2678 = vsub.f32 %v2629, %v2661
    %v2679 = vsub.f32 %v2630, %v2663
    %v2680 = vsub.f32 %v2631, %v2664
    %v2681 = vsub.f32 %v2632, %v2665
    %v2682 = vsub.f32 %v2633, %v2666
    %v2683 = vsub.f32 %v2634, %v2667
    %v2684 = vsub.f32 %v2635, %v2668
    %v2685 = vsub.f32 %v2636, %v2669
    %v2686 = vmul.f32 %v2678, 1.442695
    %v2687 = vpow.pop %v2686
    %v2688 = vmul.f32 %v2679, 1.442695
    %v2689 = vpow.pop %v2688
    %v2690 = vmul.f32 %v2680, 1.442695
    %v2691 = vpow.pop %v2690
    %v2692 = vmul.f32 %v2681, 1.442695
    %v2693 = vpow.pop %v2692
    %v2694 = vmul.f32 %v2682, 1.442695
    %v2695 = vpow.pop %v2694
    %v2696 = vmul.f32 %v2683, 1.442695
    %v2697 = vpow.pop %v2696
    %v2698 = vmul.f32 %v2684, 1.442695
    %v2699 = vpow.pop %v2698
    %v2700 = vmul.f32 %v2685, 1.442695
    %v2701 = vpow.pop %v2700
    %v2710 = vrot.slane %v2689, 7
    %v2711 = vsel %vm1149, %v2710, %v2687
    %v2712 = vrot.slane %v2691, 6
    %v2713 = vsel %vm1152, %v2712, %v2711
    %v2714 = vrot.slane %v2693, 5
    %v2715 = vsel %vm1155, %v2714, %v2713
    %v2716 = vrot.slane %v2695, 4
    %v2717 = vsel %vm1158, %v2716, %v2715
    %v2718 = vrot.slane %v2697, 3
    %v2719 = vsel %vm1161, %v2718, %v2717
    %v2720 = vrot.slane %v2699, 2
    %v2721 = vsel %vm1164, %v2720, %v2719
    %v2722 = vrot.slane %v2701, 1
    %v2723 = vsel %vm1167, %v2722, %v2721
    %2725 = vadd.xlane.f32.xlu0 %v2723
    %v2726 = vpop.xlane.xlu0 %2725
    %v2727 = vrcp.pop %v2726
    %v2729 = vrot.slane %v2727, 1
    %v2730 = vrot.slane %v2727, 2
    %v2731 = vrot.slane %v2727, 3
    %v2732 = vrot.slane %v2727, 4
    %v2733 = vrot.slane %v2727, 5
    %v2734 = vrot.slane %v2727, 6
    %v2735 = vrot.slane %v2727, 7
    %v2744 = vmul.f32 %v2687, %v2727
    %v2745 = vmul.f32 %v2689, %v2729
    %v2746 = vmul.f32 %v2691, %v2730
    %v2747 = vmul.f32 %v2693, %v2731
    %v2748 = vmul.f32 %v2695, %v2732
    %v2749 = vmul.f32 %v2697, %v2733
    %v2750 = vmul.f32 %v2699, %v2734
    %v2751 = vmul.f32 %v2701, %v2735
    %2752 = vmatprep.subr.mxu0 0.0
    %2753 = vmatpush1.msra.mxu0 %v46
    %2754 = vmatprep.subr.mxu0 0.0
    %2755 = vmatpush1.msra.mxu0 %v47
    %2756 = vmatprep.subr.mxu0 0.0
    %2757 = vmatpush1.msra.mxu0 %v48
    %2758 = vmatprep.subr.mxu0 0.0
    %2759 = vmatpush1.msra.mxu0 %v49
    %2760 = vmatprep.subr.mxu0 0.0
    %2761 = vmatpush1.msra.mxu0 %v50
    %2762 = vmatprep.subr.mxu0 0.0
    %2763 = vmatpush1.msra.mxu0 %v51
    %2764 = vmatprep.subr.mxu0 0.0
    %2765 = vmatpush1.msra.mxu0 %v52
    %2766 = vmatprep.subr.mxu0 0.0
    %2767 = vmatpush1.msra.mxu0 %v53
    %2768 = vmatprep.subr.mxu0 0.0
    %2769 = vmatpush1.msra.mxu0 %v54
    %2770 = vmatprep.subr.mxu0 0.0
    %2771 = vmatpush1.msra.mxu0 %v55
    %2772 = vmatprep.subr.mxu0 0.0
    %2773 = vmatpush1.msra.mxu0 %v56
    %2774 = vmatprep.subr.mxu0 0.0
    %2775 = vmatpush1.msra.mxu0 %v57
    %2776 = vmatprep.subr.mxu0 0.0
    %2777 = vmatpush1.msra.mxu0 %v58
    %2778 = vmatprep.subr.mxu0 0.0
    %2779 = vmatpush1.msra.mxu0 %v59
    %2780 = vmatprep.subr.mxu0 0.0
    %2781 = vmatpush1.msra.mxu0 %v60
    %2782 = vmatprep.subr.mxu0 0.0
    %2783 = vmatpush1.msra.mxu0 %v61
    %2784 = vmatprep.subr.mxu0 0.0
    %2785 = vmatpush1.msra.mxu0 0.0
    %2786 = vmatprep.subr.mxu0 0.0
    %2787 = vmatpush1.msra.mxu0 0.0
    %2788 = vmatprep.subr.mxu0 0.0
    %2789 = vmatpush1.msra.mxu0 0.0
    %2790 = vmatprep.subr.mxu0 0.0
    %2791 = vmatpush1.msra.mxu0 0.0
    %2792 = vmatprep.subr.mxu0 0.0
    %2793 = vmatpush1.msra.mxu0 0.0
    %2794 = vmatprep.subr.mxu0 0.0
    %2795 = vmatpush1.msra.mxu0 0.0
    %2796 = vmatprep.subr.mxu0 0.0
    %2797 = vmatpush1.msra.mxu0 0.0
    %2798 = vmatprep.subr.mxu0 0.0
    %2799 = vmatpush1.msra.mxu0 0.0
    %2800 = vmatprep.subr.mxu0 0.0
    %2801 = vmatpush1.msra.mxu0 0.0
    %2802 = vmatprep.subr.mxu0 0.0
    %2803 = vmatpush1.msra.mxu0 0.0
    %2804 = vmatprep.subr.mxu0 0.0
    %2805 = vmatpush1.msra.mxu0 0.0
    %2806 = vmatprep.subr.mxu0 0.0
    %2807 = vmatpush1.msra.mxu0 0.0
    %2808 = vmatprep.subr.mxu0 0.0
    %2809 = vmatpush1.msra.mxu0 0.0
    %2810 = vmatprep.subr.mxu0 0.0
    %2811 = vmatpush1.msra.mxu0 0.0
    %2812 = vmatprep.subr.mxu0 0.0
    %2813 = vmatpush1.msra.mxu0 0.0
    %2814 = vmatprep.subr.mxu0 0.0
    %2815 = vmatpush1.msra.mxu0 0.0
    %2816 = vmatprep.mubr.f32.mxu0 0.0
    %2817 = vmatmul.mubr.f32.gmra.mrb[0].mxu0 %v2744
    %v2818 = vpop.f32.mrb[0].mxu0
    %v2819 = vadd.f32 0.0, %v2818
    %v2820 = vpop.f32.mrb[0].mxu0
    %2821 = vdwg.mxu0
    %2822 = vmatprep.subr.mxu0 0.0
    %2823 = vmatpush1.msra.mxu0 %v62
    %2824 = vmatprep.subr.mxu0 0.0
    %2825 = vmatpush1.msra.mxu0 %v63
    %2826 = vmatprep.subr.mxu0 0.0
    %2827 = vmatpush1.msra.mxu0 %v64
    %2828 = vmatprep.subr.mxu0 0.0
    %2829 = vmatpush1.msra.mxu0 %v65
    %2830 = vmatprep.subr.mxu0 0.0
    %2831 = vmatpush1.msra.mxu0 %v66
    %2832 = vmatprep.subr.mxu0 0.0
    %2833 = vmatpush1.msra.mxu0 %v67
    %2834 = vmatprep.subr.mxu0 0.0
    %2835 = vmatpush1.msra.mxu0 %v68
    %2836 = vmatprep.subr.mxu0 0.0
    %2837 = vmatpush1.msra.mxu0 %v69
    %2838 = vmatprep.subr.mxu0 0.0
    %2839 = vmatpush1.msra.mxu0 %v70
    %2840 = vmatprep.subr.mxu0 0.0
    %2841 = vmatpush1.msra.mxu0 %v71
    %2842 = vmatprep.subr.mxu0 0.0
    %2843 = vmatpush1.msra.mxu0 %v72
    %2844 = vmatprep.subr.mxu0 0.0
    %2845 = vmatpush1.msra.mxu0 %v73
    %2846 = vmatprep.subr.mxu0 0.0
    %2847 = vmatpush1.msra.mxu0 %v74
    %2848 = vmatprep.subr.mxu0 0.0
    %2849 = vmatpush1.msra.mxu0 %v75
    %2850 = vmatprep.subr.mxu0 0.0
    %2851 = vmatpush1.msra.mxu0 %v76
    %2852 = vmatprep.subr.mxu0 0.0
    %2853 = vmatpush1.msra.mxu0 %v77
    %2854 = vmatprep.subr.mxu0 0.0
    %2855 = vmatpush1.msra.mxu0 0.0
    %2856 = vmatprep.subr.mxu0 0.0
    %2857 = vmatpush1.msra.mxu0 0.0
    %2858 = vmatprep.subr.mxu0 0.0
    %2859 = vmatpush1.msra.mxu0 0.0
    %2860 = vmatprep.subr.mxu0 0.0
    %2861 = vmatpush1.msra.mxu0 0.0
    %2862 = vmatprep.subr.mxu0 0.0
    %2863 = vmatpush1.msra.mxu0 0.0
    %2864 = vmatprep.subr.mxu0 0.0
    %2865 = vmatpush1.msra.mxu0 0.0
    %2866 = vmatprep.subr.mxu0 0.0
    %2867 = vmatpush1.msra.mxu0 0.0
    %2868 = vmatprep.subr.mxu0 0.0
    %2869 = vmatpush1.msra.mxu0 0.0
    %2870 = vmatprep.subr.mxu0 0.0
    %2871 = vmatpush1.msra.mxu0 0.0
    %2872 = vmatprep.subr.mxu0 0.0
    %2873 = vmatpush1.msra.mxu0 0.0
    %2874 = vmatprep.subr.mxu0 0.0
    %2875 = vmatpush1.msra.mxu0 0.0
    %2876 = vmatprep.subr.mxu0 0.0
    %2877 = vmatpush1.msra.mxu0 0.0
    %2878 = vmatprep.subr.mxu0 0.0
    %2879 = vmatpush1.msra.mxu0 0.0
    %2880 = vmatprep.subr.mxu0 0.0
    %2881 = vmatpush1.msra.mxu0 0.0
    %2882 = vmatprep.subr.mxu0 0.0
    %2883 = vmatpush1.msra.mxu0 0.0
    %2884 = vmatprep.subr.mxu0 0.0
    %2885 = vmatpush1.msra.mxu0 0.0
    %2886 = vmatprep.mubr.f32.mxu0 0.0
    %2887 = vmatmul.mubr.f32.gmra.mrb[0].mxu0 %v2745
    %v2888 = vpop.f32.mrb[0].mxu0
    %v2889 = vadd.f32 0.0, %v2888
    %v2890 = vpop.f32.mrb[0].mxu0
    %2891 = vdwg.mxu0
    %2892 = vmatprep.subr.mxu0 0.0
    %2893 = vmatpush1.msra.mxu0 %v78
    %2894 = vmatprep.subr.mxu0 0.0
    %2895 = vmatpush1.msra.mxu0 %v79
    %2896 = vmatprep.subr.mxu0 0.0
    %2897 = vmatpush1.msra.mxu0 %v80
    %2898 = vmatprep.subr.mxu0 0.0
    %2899 = vmatpush1.msra.mxu0 %v81
    %2900 = vmatprep.subr.mxu0 0.0
    %2901 = vmatpush1.msra.mxu0 %v82
    %2902 = vmatprep.subr.mxu0 0.0
    %2903 = vmatpush1.msra.mxu0 %v83
    %2904 = vmatprep.subr.mxu0 0.0
    %2905 = vmatpush1.msra.mxu0 %v84
    %2906 = vmatprep.subr.mxu0 0.0
    %2907 = vmatpush1.msra.mxu0 %v85
    %2908 = vmatprep.subr.mxu0 0.0
    %2909 = vmatpush1.msra.mxu0 %v86
    %2910 = vmatprep.subr.mxu0 0.0
    %2911 = vmatpush1.msra.mxu0 %v87
    %2912 = vmatprep.subr.mxu0 0.0
    %2913 = vmatpush1.msra.mxu0 %v88
    %2914 = vmatprep.subr.mxu0 0.0
    %2915 = vmatpush1.msra.mxu0 %v89
    %2916 = vmatprep.subr.mxu0 0.0
    %2917 = vmatpush1.msra.mxu0 %v90
    %2918 = vmatprep.subr.mxu0 0.0
    %2919 = vmatpush1.msra.mxu0 %v91
    %2920 = vmatprep.subr.mxu0 0.0
    %2921 = vmatpush1.msra.mxu0 %v92
    %2922 = vmatprep.subr.mxu0 0.0
    %2923 = vmatpush1.msra.mxu0 %v93
    %2924 = vmatprep.subr.mxu0 0.0
    %2925 = vmatpush1.msra.mxu0 0.0
    %2926 = vmatprep.subr.mxu0 0.0
    %2927 = vmatpush1.msra.mxu0 0.0
    %2928 = vmatprep.subr.mxu0 0.0
    %2929 = vmatpush1.msra.mxu0 0.0
    %2930 = vmatprep.subr.mxu0 0.0
    %2931 = vmatpush1.msra.mxu0 0.0
    %2932 = vmatprep.subr.mxu0 0.0
    %2933 = vmatpush1.msra.mxu0 0.0
    %2934 = vmatprep.subr.mxu0 0.0
    %2935 = vmatpush1.msra.mxu0 0.0
    %2936 = vmatprep.subr.mxu0 0.0
    %2937 = vmatpush1.msra.mxu0 0.0
    %2938 = vmatprep.subr.mxu0 0.0
    %2939 = vmatpush1.msra.mxu0 0.0
    %2940 = vmatprep.subr.mxu0 0.0
    %2941 = vmatpush1.msra.mxu0 0.0
    %2942 = vmatprep.subr.mxu0 0.0
    %2943 = vmatpush1.msra.mxu0 0.0
    %2944 = vmatprep.subr.mxu0 0.0
    %2945 = vmatpush1.msra.mxu0 0.0
    %2946 = vmatprep.subr.mxu0 0.0
    %2947 = vmatpush1.msra.mxu0 0.0
    %2948 = vmatprep.subr.mxu0 0.0
    %2949 = vmatpush1.msra.mxu0 0.0
    %2950 = vmatprep.subr.mxu0 0.0
    %2951 = vmatpush1.msra.mxu0 0.0
    %2952 = vmatprep.subr.mxu0 0.0
    %2953 = vmatpush1.msra.mxu0 0.0
    %2954 = vmatprep.subr.mxu0 0.0
    %2955 = vmatpush1.msra.mxu0 0.0
    %2956 = vmatprep.mubr.f32.mxu0 0.0
    %2957 = vmatmul.mubr.f32.gmra.mrb[0].mxu0 %v2746
    %v2958 = vpop.f32.mrb[0].mxu0
    %v2959 = vadd.f32 0.0, %v2958
    %v2960 = vpop.f32.mrb[0].mxu0
    %2961 = vdwg.mxu0
    %2962 = vmatprep.subr.mxu0 0.0
    %2963 = vmatpush1.msra.mxu0 %v94
    %2964 = vmatprep.subr.mxu0 0.0
    %2965 = vmatpush1.msra.mxu0 %v95
    %2966 = vmatprep.subr.mxu0 0.0
    %2967 = vmatpush1.msra.mxu0 %v96
    %2968 = vmatprep.subr.mxu0 0.0
    %2969 = vmatpush1.msra.mxu0 %v97
    %2970 = vmatprep.subr.mxu0 0.0
    %2971 = vmatpush1.msra.mxu0 %v98
    %2972 = vmatprep.subr.mxu0 0.0
    %2973 = vmatpush1.msra.mxu0 %v99
    %2974 = vmatprep.subr.mxu0 0.0
    %2975 = vmatpush1.msra.mxu0 %v100
    %2976 = vmatprep.subr.mxu0 0.0
    %2977 = vmatpush1.msra.mxu0 %v101
    %2978 = vmatprep.subr.mxu0 0.0
    %2979 = vmatpush1.msra.mxu0 %v102
    %2980 = vmatprep.subr.mxu0 0.0
    %2981 = vmatpush1.msra.mxu0 %v103
    %2982 = vmatprep.subr.mxu0 0.0
    %2983 = vmatpush1.msra.mxu0 %v104
    %2984 = vmatprep.subr.mxu0 0.0
    %2985 = vmatpush1.msra.mxu0 %v105
    %2986 = vmatprep.subr.mxu0 0.0
    %2987 = vmatpush1.msra.mxu0 %v106
    %2988 = vmatprep.subr.mxu0 0.0
    %2989 = vmatpush1.msra.mxu0 %v107
    %2990 = vmatprep.subr.mxu0 0.0
    %2991 = vmatpush1.msra.mxu0 %v108
    %2992 = vmatprep.subr.mxu0 0.0
    %2993 = vmatpush1.msra.mxu0 %v109
    %2994 = vmatprep.subr.mxu0 0.0
    %2995 = vmatpush1.msra.mxu0 0.0
    %2996 = vmatprep.subr.mxu0 0.0
    %2997 = vmatpush1.msra.mxu0 0.0
    %2998 = vmatprep.subr.mxu0 0.0
    %2999 = vmatpush1.msra.mxu0 0.0
    %3000 = vmatprep.subr.mxu0 0.0
    %3001 = vmatpush1.msra.mxu0 0.0
    %3002 = vmatprep.subr.mxu0 0.0
    %3003 = vmatpush1.msra.mxu0 0.0
    %3004 = vmatprep.subr.mxu0 0.0
    %3005 = vmatpush1.msra.mxu0 0.0
    %3006 = vmatprep.subr.mxu0 0.0
    %3007 = vmatpush1.msra.mxu0 0.0
    %3008 = vmatprep.subr.mxu0 0.0
    %3009 = vmatpush1.msra.mxu0 0.0
    %3010 = vmatprep.subr.mxu0 0.0
    %3011 = vmatpush1.msra.mxu0 0.0
    %3012 = vmatprep.subr.mxu0 0.0
    %3013 = vmatpush1.msra.mxu0 0.0
    %3014 = vmatprep.subr.mxu0 0.0
    %3015 = vmatpush1.msra.mxu0 0.0
    %3016 = vmatprep.subr.mxu0 0.0
    %3017 = vmatpush1.msra.mxu0 0.0
    %3018 = vmatprep.subr.mxu0 0.0
    %3019 = vmatpush1.msra.mxu0 0.0
    %3020 = vmatprep.subr.mxu0 0.0
    %3021 = vmatpush1.msra.mxu0 0.0
    %3022 = vmatprep.subr.mxu0 0.0
    %3023 = vmatpush1.msra.mxu0 0.0
    %3024 = vmatprep.subr.mxu0 0.0
    %3025 = vmatpush1.msra.mxu0 0.0
    %3026 = vmatprep.mubr.f32.mxu0 0.0
    %3027 = vmatmul.mubr.f32.gmra.mrb[0].mxu0 %v2747
    %v3028 = vpop.f32.mrb[0].mxu0
    %v3029 = vadd.f32 0.0, %v3028
    %v3030 = vpop.f32.mrb[0].mxu0
    %3031 = vdwg.mxu0
    %3032 = vmatprep.subr.mxu0 0.0
    %3033 = vmatpush1.msra.mxu0 %v110
    %3034 = vmatprep.subr.mxu0 0.0
    %3035 = vmatpush1.msra.mxu0 %v111
    %3036 = vmatprep.subr.mxu0 0.0
    %3037 = vmatpush1.msra.mxu0 %v112
    %3038 = vmatprep.subr.mxu0 0.0
    %3039 = vmatpush1.msra.mxu0 %v113
    %3040 = vmatprep.subr.mxu0 0.0
    %3041 = vmatpush1.msra.mxu0 %v114
    %3042 = vmatprep.subr.mxu0 0.0
    %3043 = vmatpush1.msra.mxu0 %v115
    %3044 = vmatprep.subr.mxu0 0.0
    %3045 = vmatpush1.msra.mxu0 %v116
    %3046 = vmatprep.subr.mxu0 0.0
    %3047 = vmatpush1.msra.mxu0 %v117
    %3048 = vmatprep.subr.mxu0 0.0
    %3049 = vmatpush1.msra.mxu0 %v118
    %3050 = vmatprep.subr.mxu0 0.0
    %3051 = vmatpush1.msra.mxu0 %v119
    %3052 = vmatprep.subr.mxu0 0.0
    %3053 = vmatpush1.msra.mxu0 %v120
    %3054 = vmatprep.subr.mxu0 0.0
    %3055 = vmatpush1.msra.mxu0 %v121
    %3056 = vmatprep.subr.mxu0 0.0
    %3057 = vmatpush1.msra.mxu0 %v122
    %3058 = vmatprep.subr.mxu0 0.0
    %3059 = vmatpush1.msra.mxu0 %v123
    %3060 = vmatprep.subr.mxu0 0.0
    %3061 = vmatpush1.msra.mxu0 %v124
    %3062 = vmatprep.subr.mxu0 0.0
    %3063 = vmatpush1.msra.mxu0 %v125
    %3064 = vmatprep.subr.mxu0 0.0
    %3065 = vmatpush1.msra.mxu0 0.0
    %3066 = vmatprep.subr.mxu0 0.0
    %3067 = vmatpush1.msra.mxu0 0.0
    %3068 = vmatprep.subr.mxu0 0.0
    %3069 = vmatpush1.msra.mxu0 0.0
    %3070 = vmatprep.subr.mxu0 0.0
    %3071 = vmatpush1.msra.mxu0 0.0
    %3072 = vmatprep.subr.mxu0 0.0
    %3073 = vmatpush1.msra.mxu0 0.0
    %3074 = vmatprep.subr.mxu0 0.0
    %3075 = vmatpush1.msra.mxu0 0.0
    %3076 = vmatprep.subr.mxu0 0.0
    %3077 = vmatpush1.msra.mxu0 0.0
    %3078 = vmatprep.subr.mxu0 0.0
    %3079 = vmatpush1.msra.mxu0 0.0
    %3080 = vmatprep.subr.mxu0 0.0
    %3081 = vmatpush1.msra.mxu0 0.0
    %3082 = vmatprep.subr.mxu0 0.0
    %3083 = vmatpush1.msra.mxu0 0.0
    %3084 = vmatprep.subr.mxu0 0.0
    %3085 = vmatpush1.msra.mxu0 0.0
    %3086 = vmatprep.subr.mxu0 0.0
    %3087 = vmatpush1.msra.mxu0 0.0
    %3088 = vmatprep.subr.mxu0 0.0
    %3089 = vmatpush1.msra.mxu0 0.0
    %3090 = vmatprep.subr.mxu0 0.0
    %3091 = vmatpush1.msra.mxu0 0.0
    %3092 = vmatprep.subr.mxu0 0.0
    %3093 = vmatpush1.msra.mxu0 0.0
    %3094 = vmatprep.subr.mxu0 0.0
    %3095 = vmatpush1.msra.mxu0 0.0
    %3096 = vmatprep.mubr.f32.mxu0 0.0
    %3097 = vmatmul.mubr.f32.gmra.mrb[0].mxu0 %v2748
    %v3098 = vpop.f32.mrb[0].mxu0
    %v3099 = vadd.f32 0.0, %v3098
    %v3100 = vpop.f32.mrb[0].mxu0
    %3101 = vdwg.mxu0
    %3102 = vmatprep.subr.mxu0 0.0
    %3103 = vmatpush1.msra.mxu0 %v126
    %3104 = vmatprep.subr.mxu0 0.0
    %3105 = vmatpush1.msra.mxu0 %v127
    %3106 = vmatprep.subr.mxu0 0.0
    %3107 = vmatpush1.msra.mxu0 %v128
    %3108 = vmatprep.subr.mxu0 0.0
    %3109 = vmatpush1.msra.mxu0 %v129
    %3110 = vmatprep.subr.mxu0 0.0
    %3111 = vmatpush1.msra.mxu0 %v130
    %3112 = vmatprep.subr.mxu0 0.0
    %3113 = vmatpush1.msra.mxu0 %v131
    %3114 = vmatprep.subr.mxu0 0.0
    %3115 = vmatpush1.msra.mxu0 %v132
    %3116 = vmatprep.subr.mxu0 0.0
    %3117 = vmatpush1.msra.mxu0 %v133
    %3118 = vmatprep.subr.mxu0 0.0
    %3119 = vmatpush1.msra.mxu0 %v134
    %3120 = vmatprep.subr.mxu0 0.0
    %3121 = vmatpush1.msra.mxu0 %v135
    %3122 = vmatprep.subr.mxu0 0.0
    %3123 = vmatpush1.msra.mxu0 %v136
    %3124 = vmatprep.subr.mxu0 0.0
    %3125 = vmatpush1.msra.mxu0 %v137
    %3126 = vmatprep.subr.mxu0 0.0
    %3127 = vmatpush1.msra.mxu0 %v138
    %3128 = vmatprep.subr.mxu0 0.0
    %3129 = vmatpush1.msra.mxu0 %v139
    %3130 = vmatprep.subr.mxu0 0.0
    %3131 = vmatpush1.msra.mxu0 %v140
    %3132 = vmatprep.subr.mxu0 0.0
    %3133 = vmatpush1.msra.mxu0 %v141
    %3134 = vmatprep.subr.mxu0 0.0
    %3135 = vmatpush1.msra.mxu0 0.0
    %3136 = vmatprep.subr.mxu0 0.0
    %3137 = vmatpush1.msra.mxu0 0.0
    %3138 = vmatprep.subr.mxu0 0.0
    %3139 = vmatpush1.msra.mxu0 0.0
    %3140 = vmatprep.subr.mxu0 0.0
    %3141 = vmatpush1.msra.mxu0 0.0
    %3142 = vmatprep.subr.mxu0 0.0
    %3143 = vmatpush1.msra.mxu0 0.0
    %3144 = vmatprep.subr.mxu0 0.0
    %3145 = vmatpush1.msra.mxu0 0.0
    %3146 = vmatprep.subr.mxu0 0.0
    %3147 = vmatpush1.msra.mxu0 0.0
    %3148 = vmatprep.subr.mxu0 0.0
    %3149 = vmatpush1.msra.mxu0 0.0
    %3150 = vmatprep.subr.mxu0 0.0
    %3151 = vmatpush1.msra.mxu0 0.0
    %3152 = vmatprep.subr.mxu0 0.0
    %3153 = vmatpush1.msra.mxu0 0.0
    %3154 = vmatprep.subr.mxu0 0.0
    %3155 = vmatpush1.msra.mxu0 0.0
    %3156 = vmatprep.subr.mxu0 0.0
    %3157 = vmatpush1.msra.mxu0 0.0
    %3158 = vmatprep.subr.mxu0 0.0
    %3159 = vmatpush1.msra.mxu0 0.0
    %3160 = vmatprep.subr.mxu0 0.0
    %3161 = vmatpush1.msra.mxu0 0.0
    %3162 = vmatprep.subr.mxu0 0.0
    %3163 = vmatpush1.msra.mxu0 0.0
    %3164 = vmatprep.subr.mxu0 0.0
    %3165 = vmatpush1.msra.mxu0 0.0
    %3166 = vmatprep.mubr.f32.mxu0 0.0
    %3167 = vmatmul.mubr.f32.gmra.mrb[0].mxu0 %v2749
    %v3168 = vpop.f32.mrb[0].mxu0
    %v3169 = vadd.f32 0.0, %v3168
    %v3170 = vpop.f32.mrb[0].mxu0
    %3171 = vdwg.mxu0
    %3172 = vmatprep.subr.mxu0 0.0
    %3173 = vmatpush1.msra.mxu0 %v142
    %3174 = vmatprep.subr.mxu0 0.0
    %3175 = vmatpush1.msra.mxu0 %v143
    %3176 = vmatprep.subr.mxu0 0.0
    %3177 = vmatpush1.msra.mxu0 %v144
    %3178 = vmatprep.subr.mxu0 0.0
    %3179 = vmatpush1.msra.mxu0 %v145
    %3180 = vmatprep.subr.mxu0 0.0
    %3181 = vmatpush1.msra.mxu0 %v146
    %3182 = vmatprep.subr.mxu0 0.0
    %3183 = vmatpush1.msra.mxu0 %v147
    %3184 = vmatprep.subr.mxu0 0.0
    %3185 = vmatpush1.msra.mxu0 %v148
    %3186 = vmatprep.subr.mxu0 0.0
    %3187 = vmatpush1.msra.mxu0 %v149
    %3188 = vmatprep.subr.mxu0 0.0
    %3189 = vmatpush1.msra.mxu0 %v150
    %3190 = vmatprep.subr.mxu0 0.0
    %3191 = vmatpush1.msra.mxu0 %v151
    %3192 = vmatprep.subr.mxu0 0.0
    %3193 = vmatpush1.msra.mxu0 %v152
    %3194 = vmatprep.subr.mxu0 0.0
    %3195 = vmatpush1.msra.mxu0 %v153
    %3196 = vmatprep.subr.mxu0 0.0
    %3197 = vmatpush1.msra.mxu0 %v154
    %3198 = vmatprep.subr.mxu0 0.0
    %3199 = vmatpush1.msra.mxu0 %v155
    %3200 = vmatprep.subr.mxu0 0.0
    %3201 = vmatpush1.msra.mxu0 %v156
    %3202 = vmatprep.subr.mxu0 0.0
    %3203 = vmatpush1.msra.mxu0 %v157
    %3204 = vmatprep.subr.mxu0 0.0
    %3205 = vmatpush1.msra.mxu0 0.0
    %3206 = vmatprep.subr.mxu0 0.0
    %3207 = vmatpush1.msra.mxu0 0.0
    %3208 = vmatprep.subr.mxu0 0.0
    %3209 = vmatpush1.msra.mxu0 0.0
    %3210 = vmatprep.subr.mxu0 0.0
    %3211 = vmatpush1.msra.mxu0 0.0
    %3212 = vmatprep.subr.mxu0 0.0
    %3213 = vmatpush1.msra.mxu0 0.0
    %3214 = vmatprep.subr.mxu0 0.0
    %3215 = vmatpush1.msra.mxu0 0.0
    %3216 = vmatprep.subr.mxu0 0.0
    %3217 = vmatpush1.msra.mxu0 0.0
    %3218 = vmatprep.subr.mxu0 0.0
    %3219 = vmatpush1.msra.mxu0 0.0
    %3220 = vmatprep.subr.mxu0 0.0
    %3221 = vmatpush1.msra.mxu0 0.0
    %3222 = vmatprep.subr.mxu0 0.0
    %3223 = vmatpush1.msra.mxu0 0.0
    %3224 = vmatprep.subr.mxu0 0.0
    %3225 = vmatpush1.msra.mxu0 0.0
    %3226 = vmatprep.subr.mxu0 0.0
    %3227 = vmatpush1.msra.mxu0 0.0
    %3228 = vmatprep.subr.mxu0 0.0
    %3229 = vmatpush1.msra.mxu0 0.0
    %3230 = vmatprep.subr.mxu0 0.0
    %3231 = vmatpush1.msra.mxu0 0.0
    %3232 = vmatprep.subr.mxu0 0.0
    %3233 = vmatpush1.msra.mxu0 0.0
    %3234 = vmatprep.subr.mxu0 0.0
    %3235 = vmatpush1.msra.mxu0 0.0
    %3236 = vmatprep.mubr.f32.mxu0 0.0
    %3237 = vmatmul.mubr.f32.gmra.mrb[0].mxu0 %v2750
    %v3238 = vpop.f32.mrb[0].mxu0
    %v3239 = vadd.f32 0.0, %v3238
    %v3240 = vpop.f32.mrb[0].mxu0
    %3241 = vdwg.mxu0
    %3242 = vmatprep.subr.mxu0 0.0
    %3243 = vmatpush1.msra.mxu0 %v158
    %3244 = vmatprep.subr.mxu0 0.0
    %3245 = vmatpush1.msra.mxu0 %v159
    %3246 = vmatprep.subr.mxu0 0.0
    %3247 = vmatpush1.msra.mxu0 %v160
    %3248 = vmatprep.subr.mxu0 0.0
    %3249 = vmatpush1.msra.mxu0 %v161
    %3250 = vmatprep.subr.mxu0 0.0
    %3251 = vmatpush1.msra.mxu0 %v162
    %3252 = vmatprep.subr.mxu0 0.0
    %3253 = vmatpush1.msra.mxu0 %v163
    %3254 = vmatprep.subr.mxu0 0.0
    %3255 = vmatpush1.msra.mxu0 %v164
    %3256 = vmatprep.subr.mxu0 0.0
    %3257 = vmatpush1.msra.mxu0 %v165
    %3258 = vmatprep.subr.mxu0 0.0
    %3259 = vmatpush1.msra.mxu0 %v166
    %3260 = vmatprep.subr.mxu0 0.0
    %3261 = vmatpush1.msra.mxu0 %v167
    %3262 = vmatprep.subr.mxu0 0.0
    %3263 = vmatpush1.msra.mxu0 %v168
    %3264 = vmatprep.subr.mxu0 0.0
    %3265 = vmatpush1.msra.mxu0 %v169
    %3266 = vmatprep.subr.mxu0 0.0
    %3267 = vmatpush1.msra.mxu0 %v170
    %3268 = vmatprep.subr.mxu0 0.0
    %3269 = vmatpush1.msra.mxu0 %v171
    %3270 = vmatprep.subr.mxu0 0.0
    %3271 = vmatpush1.msra.mxu0 %v172
    %3272 = vmatprep.subr.mxu0 0.0
    %3273 = vmatpush1.msra.mxu0 %v173
    %3274 = vmatprep.subr.mxu0 0.0
    %3275 = vmatpush1.msra.mxu0 0.0
    %3276 = vmatprep.subr.mxu0 0.0
    %3277 = vmatpush1.msra.mxu0 0.0
    %3278 = vmatprep.subr.mxu0 0.0
    %3279 = vmatpush1.msra.mxu0 0.0
    %3280 = vmatprep.subr.mxu0 0.0
    %3281 = vmatpush1.msra.mxu0 0.0
    %3282 = vmatprep.subr.mxu0 0.0
    %3283 = vmatpush1.msra.mxu0 0.0
    %3284 = vmatprep.subr.mxu0 0.0
    %3285 = vmatpush1.msra.mxu0 0.0
    %3286 = vmatprep.subr.mxu0 0.0
    %3287 = vmatpush1.msra.mxu0 0.0
    %3288 = vmatprep.subr.mxu0 0.0
    %3289 = vmatpush1.msra.mxu0 0.0
    %3290 = vmatprep.subr.mxu0 0.0
    %3291 = vmatpush1.msra.mxu0 0.0
    %3292 = vmatprep.subr.mxu0 0.0
    %3293 = vmatpush1.msra.mxu0 0.0
    %3294 = vmatprep.subr.mxu0 0.0
    %3295 = vmatpush1.msra.mxu0 0.0
    %3296 = vmatprep.subr.mxu0 0.0
    %3297 = vmatpush1.msra.mxu0 0.0
    %3298 = vmatprep.subr.mxu0 0.0
    %3299 = vmatpush1.msra.mxu0 0.0
    %3300 = vmatprep.subr.mxu0 0.0
    %3301 = vmatpush1.msra.mxu0 0.0
    %3302 = vmatprep.subr.mxu0 0.0
    %3303 = vmatpush1.msra.mxu0 0.0
    %3304 = vmatprep.subr.mxu0 0.0
    %3305 = vmatpush1.msra.mxu0 0.0
    %3306 = vmatprep.mubr.f32.mxu0 0.0
    %3307 = vmatmul.mubr.f32.gmra.mrb[0].mxu0 %v2751
    %v3308 = vpop.f32.mrb[0].mxu0
    %v3309 = vadd.f32 0.0, %v3308
    %v3310 = vpop.f32.mrb[0].mxu0
    %3311 = vdwg.mxu0
    %v3320 = vrot.slane %v2889, 7
    %v3321 = vsel %vm1149, %v3320, %v2819
    %v3322 = vrot.slane %v2959, 6
    %v3323 = vsel %vm1152, %v3322, %v3321
    %v3324 = vrot.slane %v3029, 5
    %v3325 = vsel %vm1155, %v3324, %v3323
    %v3326 = vrot.slane %v3099, 4
    %v3327 = vsel %vm1158, %v3326, %v3325
    %v3328 = vrot.slane %v3169, 3
    %v3329 = vsel %vm1161, %v3328, %v3327
    %v3330 = vrot.slane %v3239, 2
    %v3331 = vsel %vm1164, %v3330, %v3329
    %v3332 = vrot.slane %v3309, 1
    %v3333 = vsel %vm1167, %v3332, %v3331
    %3335 = vmatprep.subr.mxu0 %v175
    %3336 = vmatpush1.msra.mxu0 %v174
    %3337 = vmatprep.subr.mxu0 %v179
    %3338 = vmatpush1.msra.mxu0 %v178
    %3339 = vmatprep.subr.mxu0 %v183
    %3340 = vmatpush1.msra.mxu0 %v182
    %3341 = vmatprep.subr.mxu0 %v187
    %3342 = vmatpush1.msra.mxu0 %v186
    %3343 = vmatprep.subr.mxu0 %v191
    %3344 = vmatpush1.msra.mxu0 %v190
    %3345 = vmatprep.subr.mxu0 %v195
    %3346 = vmatpush1.msra.mxu0 %v194
    %3347 = vmatprep.subr.mxu0 %v199
    %3348 = vmatpush1.msra.mxu0 %v198
    %3349 = vmatprep.subr.mxu0 %v203
    %3350 = vmatpush1.msra.mxu0 %v202
    %3351 = vmatprep.subr.mxu0 %v207
    %3352 = vmatpush1.msra.mxu0 %v206
    %3353 = vmatprep.subr.mxu0 %v211
    %3354 = vmatpush1.msra.mxu0 %v210
    %3355 = vmatprep.subr.mxu0 %v215
    %3356 = vmatpush1.msra.mxu0 %v214
    %3357 = vmatprep.subr.mxu0 %v219
    %3358 = vmatpush1.msra.mxu0 %v218
    %3359 = vmatprep.subr.mxu0 %v223
    %3360 = vmatpush1.msra.mxu0 %v222
    %3361 = vmatprep.subr.mxu0 %v227
    %3362 = vmatpush1.msra.mxu0 %v226
    %3363 = vmatprep.subr.mxu0 %v231
    %3364 = vmatpush1.msra.mxu0 %v230
    %3365 = vmatprep.subr.mxu0 %v235
    %3366 = vmatpush1.msra.mxu0 %v234
    %3367 = vmatprep.subr.mxu0 %v239
    %3368 = vmatpush1.msra.mxu0 %v238
    %3369 = vmatprep.subr.mxu0 %v243
    %3370 = vmatpush1.msra.mxu0 %v242
    %3371 = vmatprep.subr.mxu0 %v247
    %3372 = vmatpush1.msra.mxu0 %v246
    %3373 = vmatprep.subr.mxu0 %v251
    %3374 = vmatpush1.msra.mxu0 %v250
    %3375 = vmatprep.subr.mxu0 %v255
    %3376 = vmatpush1.msra.mxu0 %v254
    %3377 = vmatprep.subr.mxu0 %v259
    %3378 = vmatpush1.msra.mxu0 %v258
    %3379 = vmatprep.subr.mxu0 %v263
    %3380 = vmatpush1.msra.mxu0 %v262
    %3381 = vmatprep.subr.mxu0 %v267
    %3382 = vmatpush1.msra.mxu0 %v266
    %3383 = vmatprep.subr.mxu0 %v271
    %3384 = vmatpush1.msra.mxu0 %v270
    %3385 = vmatprep.subr.mxu0 %v275
    %3386 = vmatpush1.msra.mxu0 %v274
    %3387 = vmatprep.subr.mxu0 %v279
    %3388 = vmatpush1.msra.mxu0 %v278
    %3389 = vmatprep.subr.mxu0 %v283
    %3390 = vmatpush1.msra.mxu0 %v282
    %3391 = vmatprep.subr.mxu0 %v287
    %3392 = vmatpush1.msra.mxu0 %v286
    %3393 = vmatprep.subr.mxu0 %v291
    %3394 = vmatpush1.msra.mxu0 %v290
    %3395 = vmatprep.subr.mxu0 %v295
    %3396 = vmatpush1.msra.mxu0 %v294
    %3397 = vmatprep.subr.mxu0 %v299
    %3398 = vmatpush1.msra.mxu0 %v298
    %3399 = vmatprep.mubr.f32.mxu0 %v3333
    %3400 = vmatmul.mubr.f32.gmra.mrb[0].mxu0 %v2010
    %v3401 = vpop.f32.mrb[0].mxu0
    %v3402 = vadd.f32 %v307, %v3401
    %v3403 = vpop.f32.mrb[0].mxu0
    %v3404 = vadd.f32 %v311, %v3403
    %3405 = vdwg.mxu0
    %3406 = vmatprep.subr.mxu0 %v177
    %3407 = vmatpush1.msra.mxu0 %v176
    %3408 = vmatprep.subr.mxu0 %v181
    %3409 = vmatpush1.msra.mxu0 %v180
    %3410 = vmatprep.subr.mxu0 %v185
    %3411 = vmatpush1.msra.mxu0 %v184
    %3412 = vmatprep.subr.mxu0 %v189
    %3413 = vmatpush1.msra.mxu0 %v188
    %3414 = vmatprep.subr.mxu0 %v193
    %3415 = vmatpush1.msra.mxu0 %v192
    %3416 = vmatprep.subr.mxu0 %v197
    %3417 = vmatpush1.msra.mxu0 %v196
    %3418 = vmatprep.subr.mxu0 %v201
    %3419 = vmatpush1.msra.mxu0 %v200
    %3420 = vmatprep.subr.mxu0 %v205
    %3421 = vmatpush1.msra.mxu0 %v204
    %3422 = vmatprep.subr.mxu0 %v209
    %3423 = vmatpush1.msra.mxu0 %v208
    %3424 = vmatprep.subr.mxu0 %v213
    %3425 = vmatpush1.msra.mxu0 %v212
    %3426 = vmatprep.subr.mxu0 %v217
    %3427 = vmatpush1.msra.mxu0 %v216
    %3428 = vmatprep.subr.mxu0 %v221
    %3429 = vmatpush1.msra.mxu0 %v220
    %3430 = vmatprep.subr.mxu0 %v225
    %3431 = vmatpush1.msra.mxu0 %v224
    %3432 = vmatprep.subr.mxu0 %v229
    %3433 = vmatpush1.msra.mxu0 %v228
    %3434 = vmatprep.subr.mxu0 %v233
    %3435 = vmatpush1.msra.mxu0 %v232
    %3436 = vmatprep.subr.mxu0 %v237
    %3437 = vmatpush1.msra.mxu0 %v236
    %3438 = vmatprep.subr.mxu0 %v241
    %3439 = vmatpush1.msra.mxu0 %v240
    %3440 = vmatprep.subr.mxu0 %v245
    %3441 = vmatpush1.msra.mxu0 %v244
    %3442 = vmatprep.subr.mxu0 %v249
    %3443 = vmatpush1.msra.mxu0 %v248
    %3444 = vmatprep.subr.mxu0 %v253
    %3445 = vmatpush1.msra.mxu0 %v252
    %3446 = vmatprep.subr.mxu0 %v257
    %3447 = vmatpush1.msra.mxu0 %v256
    %3448 = vmatprep.subr.mxu0 %v261
    %3449 = vmatpush1.msra.mxu0 %v260
    %3450 = vmatprep.subr.mxu0 %v265
    %3451 = vmatpush1.msra.mxu0 %v264
    %3452 = vmatprep.subr.mxu0 %v269
    %3453 = vmatpush1.msra.mxu0 %v268
    %3454 = vmatprep.subr.mxu0 %v273
    %3455 = vmatpush1.msra.mxu0 %v272
    %3456 = vmatprep.subr.mxu0 %v277
    %3457 = vmatpush1.msra.mxu0 %v276
    %3458 = vmatprep.subr.mxu0 %v281
    %3459 = vmatpush1.msra.mxu0 %v280
    %3460 = vmatprep.subr.mxu0 %v285
    %3461 = vmatpush1.msra.mxu0 %v284
    %3462 = vmatprep.subr.mxu0 %v289
    %3463 = vmatpush1.msra.mxu0 %v288
    %3464 = vmatprep.subr.mxu0 %v293
    %3465 = vmatpush1.msra.mxu0 %v292
    %3466 = vmatprep.subr.mxu0 %v297
    %3467 = vmatpush1.msra.mxu0 %v296
    %3468 = vmatprep.subr.mxu0 %v301
    %3469 = vmatpush1.msra.mxu0 %v300
    %3470 = vmatprep.mubr.f32.mxu0 %v3333
    %3471 = vmatmul.mubr.f32.gmra.mrb[0].mxu0 %v2010
    %v3472 = vpop.f32.mrb[0].mxu0
    %v3473 = vadd.f32 %v315, %v3472
    %v3474 = vpop.f32.mrb[0].mxu0
    %v3475 = vadd.f32 %v319, %v3474
    %3476 = vdwg.mxu0
    %v3477 = vxor.u32 %v3402, 2147483648
    %v3478 = vmul.f32 %v3477, 1.442695
    %v3479 = vpow.pop %v3478
    %v3480 = vadd.f32 %v3479, 1.0
    %v3481 = vrcp.pop %v3480
    %v3482 = vmul.f32 1.0, %v3481
    %v3483 = vxor.u32 %v3404, 2147483648
    %v3484 = vmul.f32 %v3483, 1.442695
    %v3485 = vpow.pop %v3484
    %v3486 = vadd.f32 %v3485, 1.0
    %v3487 = vrcp.pop %v3486
    %v3488 = vmul.f32 1.0, %v3487
    %v3489 = vtanh.pop %v3473
    %v3490 = vxor.u32 %v3475, 2147483648
    %v3491 = vmul.f32 %v3490, 1.442695
    %v3492 = vpow.pop %v3491
    %v3493 = vadd.f32 %v3492, 1.0
    %v3494 = vrcp.pop %v3493
    %v3495 = vmul.f32 1.0, %v3494
    %v3496 = vmul.f32 %v3488, %v2008
    %v3497 = vmul.f32 %v3482, %v3489
    %v3498 = vadd.f32 %v3496, %v3497
    %v3499 = vtanh.pop %v3498
    %v3500 = vmul.f32 %v3495, %v3499
    %v3502 = vcombine.high %v3500, %v3500
    %v3504 = vunpack.c.l.s4 1966171168
    %v3505 = vunpack.c.0.s8 %v3504
    %v3506 = vlaneseq
    %v3507 = vshrl.u32 %v3506, 7
    %v3508 = vsub.s32 %v3505, %v3507
    %v3509 = vrot.slane %v3500, %v3508
    %v3511 = vunpack.c.l.s4 1966171168
    %v3512 = vunpack.c.0.s8 %v3511
    %v3513 = vlaneseq
    %v3514 = vshrl.u32 %v3513, 7
    %v3515 = vsub.s32 %v3512, %v3514
    %v3516 = vrot.slane %v3502, %v3515
    %v3517 = vcombine.high %v3509, %v3509
    %v3518 = vcombine.high %v3516, %v3516
    %v3520 = vunpack.c.l.s4 1966171168
    %v3521 = vunpack.c.0.s8 %v3520
    %v3522 = vlaneseq
    %v3523 = vshrl.u32 %v3522, 7
    %v3524 = vsub.s32 %v3521, %v3523
    %v3525 = vrot.slane %v3509, %v3524
    %v3527 = vunpack.c.l.s4 1966171168
    %v3528 = vunpack.c.0.s8 %v3527
    %v3529 = vlaneseq
    %v3530 = vshrl.u32 %v3529, 7
    %v3531 = vsub.s32 %v3528, %v3530
    %v3532 = vrot.slane %v3516, %v3531
    %v3534 = vunpack.c.l.s4 1966171168
    %v3535 = vunpack.c.0.s8 %v3534
    %v3536 = vlaneseq
    %v3537 = vshrl.u32 %v3536, 7
    %v3538 = vsub.s32 %v3535, %v3537
    %v3539 = vrot.slane %v3517, %v3538
    %v3541 = vunpack.c.l.s4 1966171168
    %v3542 = vunpack.c.0.s8 %v3541
    %v3543 = vlaneseq
    %v3544 = vshrl.u32 %v3543, 7
    %v3545 = vsub.s32 %v3542, %v3544
    %v3546 = vrot.slane %v3518, %v3545
    %v3547 = vcombine.high %v3525, %v3525
    %v3548 = vcombine.high %v3532, %v3532
    %v3549 = vcombine.high %v3539, %v3539
    %v3550 = vcombine.high %v3546, %v3546
    %3559 = vmatprep.subr.mxu0 0.0
    %3560 = vmatpush1.xpose.msra.mxu0 %v46
    %3561 = vmatprep.subr.mxu0 0.0
    %3562 = vmatpush1.xpose.msra.mxu0 %v47
    %3563 = vmatprep.subr.mxu0 0.0
    %3564 = vmatpush1.xpose.msra.mxu0 %v48
    %3565 = vmatprep.subr.mxu0 0.0
    %3566 = vmatpush1.xpose.msra.mxu0 %v49
    %3567 = vmatprep.subr.mxu0 0.0
    %3568 = vmatpush1.xpose.msra.mxu0 %v50
    %3569 = vmatprep.subr.mxu0 0.0
    %3570 = vmatpush1.xpose.msra.mxu0 %v51
    %3571 = vmatprep.subr.mxu0 0.0
    %3572 = vmatpush1.xpose.msra.mxu0 %v52
    %3573 = vmatprep.subr.mxu0 0.0
    %3574 = vmatpush1.xpose.msra.mxu0 %v53
    %3575 = vmatprep.subr.mxu0 0.0
    %3576 = vmatpush1.xpose.msra.mxu0 %v54
    %3577 = vmatprep.subr.mxu0 0.0
    %3578 = vmatpush1.xpose.msra.mxu0 %v55
    %3579 = vmatprep.subr.mxu0 0.0
    %3580 = vmatpush1.xpose.msra.mxu0 %v56
    %3581 = vmatprep.subr.mxu0 0.0
    %3582 = vmatpush1.xpose.msra.mxu0 %v57
    %3583 = vmatprep.subr.mxu0 0.0
    %3584 = vmatpush1.xpose.msra.mxu0 %v58
    %3585 = vmatprep.subr.mxu0 0.0
    %3586 = vmatpush1.xpose.msra.mxu0 %v59
    %3587 = vmatprep.subr.mxu0 0.0
    %3588 = vmatpush1.xpose.msra.mxu0 %v60
    %3589 = vmatprep.subr.mxu0 0.0
    %3590 = vmatpush1.xpose.msra.mxu0 %v61
    %3591 = vmatprep.subr.mxu0 0.0
    %3592 = vmatpush1.xpose.msra.mxu0 0.0
    %3593 = vmatprep.subr.mxu0 0.0
    %3594 = vmatpush1.xpose.msra.mxu0 0.0
    %3595 = vmatprep.subr.mxu0 0.0
    %3596 = vmatpush1.xpose.msra.mxu0 0.0
    %3597 = vmatprep.subr.mxu0 0.0
    %3598 = vmatpush1.xpose.msra.mxu0 0.0
    %3599 = vmatprep.subr.mxu0 0.0
    %3600 = vmatpush1.xpose.msra.mxu0 0.0
    %3601 = vmatprep.subr.mxu0 0.0
    %3602 = vmatpush1.xpose.msra.mxu0 0.0
    %3603 = vmatprep.subr.mxu0 0.0
    %3604 = vmatpush1.xpose.msra.mxu0 0.0
    %3605 = vmatprep.subr.mxu0 0.0
    %3606 = vmatpush1.xpose.msra.mxu0 0.0
    %3607 = vmatprep.subr.mxu0 0.0
    %3608 = vmatpush1.xpose.msra.mxu0 0.0
    %3609 = vmatprep.subr.mxu0 0.0
    %3610 = vmatpush1.xpose.msra.mxu0 0.0
    %3611 = vmatprep.subr.mxu0 0.0
    %3612 = vmatpush1.xpose.msra.mxu0 0.0
    %3613 = vmatprep.subr.mxu0 0.0
    %3614 = vmatpush1.xpose.msra.mxu0 0.0
    %3615 = vmatprep.subr.mxu0 0.0
    %3616 = vmatpush1.xpose.msra.mxu0 0.0
    %3617 = vmatprep.subr.mxu0 0.0
    %3618 = vmatpush1.xpose.msra.mxu0 0.0
    %3619 = vmatprep.subr.mxu0 0.0
    %3620 = vmatpush1.xpose.msra.mxu0 0.0
    %3621 = vmatprep.subr.mxu0 0.0
    %3622 = vmatpush1.xpose.msra.mxu0 0.0
    %3623 = vmatprep.mubr.f32.mxu0 0.0
    %3624 = vmatmul.mubr.f32.gmra.mrb[0].mxu0 %v3525
    %v3625 = vpop.f32.mrb[0].mxu0
    %v3626 = vadd.f32 0.0, %v3625
    %v3627 = vpop.f32.mrb[0].mxu0
    %3628 = vdwg.mxu0
    %3629 = vmatprep.subr.mxu0 0.0
    %3630 = vmatpush1.xpose.msra.mxu0 %v62
    %3631 = vmatprep.subr.mxu0 0.0
    %3632 = vmatpush1.xpose.msra.mxu0 %v63
    %3633 = vmatprep.subr.mxu0 0.0
    %3634 = vmatpush1.xpose.msra.mxu0 %v64
    %3635 = vmatprep.subr.mxu0 0.0
    %3636 = vmatpush1.xpose.msra.mxu0 %v65
    %3637 = vmatprep.subr.mxu0 0.0
    %3638 = vmatpush1.xpose.msra.mxu0 %v66
    %3639 = vmatprep.subr.mxu0 0.0
    %3640 = vmatpush1.xpose.msra.mxu0 %v67
    %3641 = vmatprep.subr.mxu0 0.0
    %3642 = vmatpush1.xpose.msra.mxu0 %v68
    %3643 = vmatprep.subr.mxu0 0.0
    %3644 = vmatpush1.xpose.msra.mxu0 %v69
    %3645 = vmatprep.subr.mxu0 0.0
    %3646 = vmatpush1.xpose.msra.mxu0 %v70
    %3647 = vmatprep.subr.mxu0 0.0
    %3648 = vmatpush1.xpose.msra.mxu0 %v71
    %3649 = vmatprep.subr.mxu0 0.0
    %3650 = vmatpush1.xpose.msra.mxu0 %v72
    %3651 = vmatprep.subr.mxu0 0.0
    %3652 = vmatpush1.xpose.msra.mxu0 %v73
    %3653 = vmatprep.subr.mxu0 0.0
    %3654 = vmatpush1.xpose.msra.mxu0 %v74
    %3655 = vmatprep.subr.mxu0 0.0
    %3656 = vmatpush1.xpose.msra.mxu0 %v75
    %3657 = vmatprep.subr.mxu0 0.0
    %3658 = vmatpush1.xpose.msra.mxu0 %v76
    %3659 = vmatprep.subr.mxu0 0.0
    %3660 = vmatpush1.xpose.msra.mxu0 %v77
    %3661 = vmatprep.subr.mxu0 0.0
    %3662 = vmatpush1.xpose.msra.mxu0 0.0
    %3663 = vmatprep.subr.mxu0 0.0
    %3664 = vmatpush1.xpose.msra.mxu0 0.0
    %3665 = vmatprep.subr.mxu0 0.0
    %3666 = vmatpush1.xpose.msra.mxu0 0.0
    %3667 = vmatprep.subr.mxu0 0.0
    %3668 = vmatpush1.xpose.msra.mxu0 0.0
    %3669 = vmatprep.subr.mxu0 0.0
    %3670 = vmatpush1.xpose.msra.mxu0 0.0
    %3671 = vmatprep.subr.mxu0 0.0
    %3672 = vmatpush1.xpose.msra.mxu0 0.0
    %3673 = vmatprep.subr.mxu0 0.0
    %3674 = vmatpush1.xpose.msra.mxu0 0.0
    %3675 = vmatprep.subr.mxu0 0.0
    %3676 = vmatpush1.xpose.msra.mxu0 0.0
    %3677 = vmatprep.subr.mxu0 0.0
    %3678 = vmatpush1.xpose.msra.mxu0 0.0
    %3679 = vmatprep.subr.mxu0 0.0
    %3680 = vmatpush1.xpose.msra.mxu0 0.0
    %3681 = vmatprep.subr.mxu0 0.0
    %3682 = vmatpush1.xpose.msra.mxu0 0.0
    %3683 = vmatprep.subr.mxu0 0.0
    %3684 = vmatpush1.xpose.msra.mxu0 0.0
    %3685 = vmatprep.subr.mxu0 0.0
    %3686 = vmatpush1.xpose.msra.mxu0 0.0
    %3687 = vmatprep.subr.mxu0 0.0
    %3688 = vmatpush1.xpose.msra.mxu0 0.0
    %3689 = vmatprep.subr.mxu0 0.0
    %3690 = vmatpush1.xpose.msra.mxu0 0.0
    %3691 = vmatprep.subr.mxu0 0.0
    %3692 = vmatpush1.xpose.msra.mxu0 0.0
    %3693 = vmatprep.mubr.f32.mxu0 0.0
    %3694 = vmatmul.mubr.f32.gmra.mrb[0].mxu0 %v3539
    %v3695 = vpop.f32.mrb[0].mxu0
    %v3696 = vadd.f32 0.0, %v3695
    %v3697 = vpop.f32.mrb[0].mxu0
    %3698 = vdwg.mxu0
    %3699 = vmatprep.subr.mxu0 0.0
    %3700 = vmatpush1.xpose.msra.mxu0 %v78
    %3701 = vmatprep.subr.mxu0 0.0
    %3702 = vmatpush1.xpose.msra.mxu0 %v79
    %3703 = vmatprep.subr.mxu0 0.0
    %3704 = vmatpush1.xpose.msra.mxu0 %v80
    %3705 = vmatprep.subr.mxu0 0.0
    %3706 = vmatpush1.xpose.msra.mxu0 %v81
    %3707 = vmatprep.subr.mxu0 0.0
    %3708 = vmatpush1.xpose.msra.mxu0 %v82
    %3709 = vmatprep.subr.mxu0 0.0
    %3710 = vmatpush1.xpose.msra.mxu0 %v83
    %3711 = vmatprep.subr.mxu0 0.0
    %3712 = vmatpush1.xpose.msra.mxu0 %v84
    %3713 = vmatprep.subr.mxu0 0.0
    %3714 = vmatpush1.xpose.msra.mxu0 %v85
    %3715 = vmatprep.subr.mxu0 0.0
    %3716 = vmatpush1.xpose.msra.mxu0 %v86
    %3717 = vmatprep.subr.mxu0 0.0
    %3718 = vmatpush1.xpose.msra.mxu0 %v87
    %3719 = vmatprep.subr.mxu0 0.0
    %3720 = vmatpush1.xpose.msra.mxu0 %v88
    %3721 = vmatprep.subr.mxu0 0.0
    %3722 = vmatpush1.xpose.msra.mxu0 %v89
    %3723 = vmatprep.subr.mxu0 0.0
    %3724 = vmatpush1.xpose.msra.mxu0 %v90
    %3725 = vmatprep.subr.mxu0 0.0
    %3726 = vmatpush1.xpose.msra.mxu0 %v91
    %3727 = vmatprep.subr.mxu0 0.0
    %3728 = vmatpush1.xpose.msra.mxu0 %v92
    %3729 = vmatprep.subr.mxu0 0.0
    %3730 = vmatpush1.xpose.msra.mxu0 %v93
    %3731 = vmatprep.subr.mxu0 0.0
    %3732 = vmatpush1.xpose.msra.mxu0 0.0
    %3733 = vmatprep.subr.mxu0 0.0
    %3734 = vmatpush1.xpose.msra.mxu0 0.0
    %3735 = vmatprep.subr.mxu0 0.0
    %3736 = vmatpush1.xpose.msra.mxu0 0.0
    %3737 = vmatprep.subr.mxu0 0.0
    %3738 = vmatpush1.xpose.msra.mxu0 0.0
    %3739 = vmatprep.subr.mxu0 0.0
    %3740 = vmatpush1.xpose.msra.mxu0 0.0
    %3741 = vmatprep.subr.mxu0 0.0
    %3742 = vmatpush1.xpose.msra.mxu0 0.0
    %3743 = vmatprep.subr.mxu0 0.0
    %3744 = vmatpush1.xpose.msra.mxu0 0.0
    %3745 = vmatprep.subr.mxu0 0.0
    %3746 = vmatpush1.xpose.msra.mxu0 0.0
    %3747 = vmatprep.subr.mxu0 0.0
    %3748 = vmatpush1.xpose.msra.mxu0 0.0
    %3749 = vmatprep.subr.mxu0 0.0
    %3750 = vmatpush1.xpose.msra.mxu0 0.0
    %3751 = vmatprep.subr.mxu0 0.0
    %3752 = vmatpush1.xpose.msra.mxu0 0.0
    %3753 = vmatprep.subr.mxu0 0.0
    %3754 = vmatpush1.xpose.msra.mxu0 0.0
    %3755 = vmatprep.subr.mxu0 0.0
    %3756 = vmatpush1.xpose.msra.mxu0 0.0
    %3757 = vmatprep.subr.mxu0 0.0
    %3758 = vmatpush1.xpose.msra.mxu0 0.0
    %3759 = vmatprep.subr.mxu0 0.0
    %3760 = vmatpush1.xpose.msra.mxu0 0.0
    %3761 = vmatprep.subr.mxu0 0.0
    %3762 = vmatpush1.xpose.msra.mxu0 0.0
    %3763 = vmatprep.mubr.f32.mxu0 0.0
    %3764 = vmatmul.mubr.f32.gmra.mrb[0].mxu0 %v3547
    %v3765 = vpop.f32.mrb[0].mxu0
    %v3766 = vadd.f32 0.0, %v3765
    %v3767 = vpop.f32.mrb[0].mxu0
    %3768 = vdwg.mxu0
    %3769 = vmatprep.subr.mxu0 0.0
    %3770 = vmatpush1.xpose.msra.mxu0 %v94
    %3771 = vmatprep.subr.mxu0 0.0
    %3772 = vmatpush1.xpose.msra.mxu0 %v95
    %3773 = vmatprep.subr.mxu0 0.0
    %3774 = vmatpush1.xpose.msra.mxu0 %v96
    %3775 = vmatprep.subr.mxu0 0.0
    %3776 = vmatpush1.xpose.msra.mxu0 %v97
    %3777 = vmatprep.subr.mxu0 0.0
    %3778 = vmatpush1.xpose.msra.mxu0 %v98
    %3779 = vmatprep.subr.mxu0 0.0
    %3780 = vmatpush1.xpose.msra.mxu0 %v99
    %3781 = vmatprep.subr.mxu0 0.0
    %3782 = vmatpush1.xpose.msra.mxu0 %v100
    %3783 = vmatprep.subr.mxu0 0.0
    %3784 = vmatpush1.xpose.msra.mxu0 %v101
    %3785 = vmatprep.subr.mxu0 0.0
    %3786 = vmatpush1.xpose.msra.mxu0 %v102
    %3787 = vmatprep.subr.mxu0 0.0
    %3788 = vmatpush1.xpose.msra.mxu0 %v103
    %3789 = vmatprep.subr.mxu0 0.0
    %3790 = vmatpush1.xpose.msra.mxu0 %v104
    %3791 = vmatprep.subr.mxu0 0.0
    %3792 = vmatpush1.xpose.msra.mxu0 %v105
    %3793 = vmatprep.subr.mxu0 0.0
    %3794 = vmatpush1.xpose.msra.mxu0 %v106
    %3795 = vmatprep.subr.mxu0 0.0
    %3796 = vmatpush1.xpose.msra.mxu0 %v107
    %3797 = vmatprep.subr.mxu0 0.0
    %3798 = vmatpush1.xpose.msra.mxu0 %v108
    %3799 = vmatprep.subr.mxu0 0.0
    %3800 = vmatpush1.xpose.msra.mxu0 %v109
    %3801 = vmatprep.subr.mxu0 0.0
    %3802 = vmatpush1.xpose.msra.mxu0 0.0
    %3803 = vmatprep.subr.mxu0 0.0
    %3804 = vmatpush1.xpose.msra.mxu0 0.0
    %3805 = vmatprep.subr.mxu0 0.0
    %3806 = vmatpush1.xpose.msra.mxu0 0.0
    %3807 = vmatprep.subr.mxu0 0.0
    %3808 = vmatpush1.xpose.msra.mxu0 0.0
    %3809 = vmatprep.subr.mxu0 0.0
    %3810 = vmatpush1.xpose.msra.mxu0 0.0
    %3811 = vmatprep.subr.mxu0 0.0
    %3812 = vmatpush1.xpose.msra.mxu0 0.0
    %3813 = vmatprep.subr.mxu0 0.0
    %3814 = vmatpush1.xpose.msra.mxu0 0.0
    %3815 = vmatprep.subr.mxu0 0.0
    %3816 = vmatpush1.xpose.msra.mxu0 0.0
    %3817 = vmatprep.subr.mxu0 0.0
    %3818 = vmatpush1.xpose.msra.mxu0 0.0
    %3819 = vmatprep.subr.mxu0 0.0
    %3820 = vmatpush1.xpose.msra.mxu0 0.0
    %3821 = vmatprep.subr.mxu0 0.0
    %3822 = vmatpush1.xpose.msra.mxu0 0.0
    %3823 = vmatprep.subr.mxu0 0.0
    %3824 = vmatpush1.xpose.msra.mxu0 0.0
    %3825 = vmatprep.subr.mxu0 0.0
    %3826 = vmatpush1.xpose.msra.mxu0 0.0
    %3827 = vmatprep.subr.mxu0 0.0
    %3828 = vmatpush1.xpose.msra.mxu0 0.0
    %3829 = vmatprep.subr.mxu0 0.0
    %3830 = vmatpush1.xpose.msra.mxu0 0.0
    %3831 = vmatprep.subr.mxu0 0.0
    %3832 = vmatpush1.xpose.msra.mxu0 0.0
    %3833 = vmatprep.mubr.f32.mxu0 0.0
    %3834 = vmatmul.mubr.f32.gmra.mrb[0].mxu0 %v3549
    %v3835 = vpop.f32.mrb[0].mxu0
    %v3836 = vadd.f32 0.0, %v3835
    %v3837 = vpop.f32.mrb[0].mxu0
    %3838 = vdwg.mxu0
    %3839 = vmatprep.subr.mxu0 0.0
    %3840 = vmatpush1.xpose.msra.mxu0 %v110
    %3841 = vmatprep.subr.mxu0 0.0
    %3842 = vmatpush1.xpose.msra.mxu0 %v111
    %3843 = vmatprep.subr.mxu0 0.0
    %3844 = vmatpush1.xpose.msra.mxu0 %v112
    %3845 = vmatprep.subr.mxu0 0.0
    %3846 = vmatpush1.xpose.msra.mxu0 %v113
    %3847 = vmatprep.subr.mxu0 0.0
    %3848 = vmatpush1.xpose.msra.mxu0 %v114
    %3849 = vmatprep.subr.mxu0 0.0
    %3850 = vmatpush1.xpose.msra.mxu0 %v115
    %3851 = vmatprep.subr.mxu0 0.0
    %3852 = vmatpush1.xpose.msra.mxu0 %v116
    %3853 = vmatprep.subr.mxu0 0.0
    %3854 = vmatpush1.xpose.msra.mxu0 %v117
    %3855 = vmatprep.subr.mxu0 0.0
    %3856 = vmatpush1.xpose.msra.mxu0 %v118
    %3857 = vmatprep.subr.mxu0 0.0
    %3858 = vmatpush1.xpose.msra.mxu0 %v119
    %3859 = vmatprep.subr.mxu0 0.0
    %3860 = vmatpush1.xpose.msra.mxu0 %v120
    %3861 = vmatprep.subr.mxu0 0.0
    %3862 = vmatpush1.xpose.msra.mxu0 %v121
    %3863 = vmatprep.subr.mxu0 0.0
    %3864 = vmatpush1.xpose.msra.mxu0 %v122
    %3865 = vmatprep.subr.mxu0 0.0
    %3866 = vmatpush1.xpose.msra.mxu0 %v123
    %3867 = vmatprep.subr.mxu0 0.0
    %3868 = vmatpush1.xpose.msra.mxu0 %v124
    %3869 = vmatprep.subr.mxu0 0.0
    %3870 = vmatpush1.xpose.msra.mxu0 %v125
    %3871 = vmatprep.subr.mxu0 0.0
    %3872 = vmatpush1.xpose.msra.mxu0 0.0
    %3873 = vmatprep.subr.mxu0 0.0
    %3874 = vmatpush1.xpose.msra.mxu0 0.0
    %3875 = vmatprep.subr.mxu0 0.0
    %3876 = vmatpush1.xpose.msra.mxu0 0.0
    %3877 = vmatprep.subr.mxu0 0.0
    %3878 = vmatpush1.xpose.msra.mxu0 0.0
    %3879 = vmatprep.subr.mxu0 0.0
    %3880 = vmatpush1.xpose.msra.mxu0 0.0
    %3881 = vmatprep.subr.mxu0 0.0
    %3882 = vmatpush1.xpose.msra.mxu0 0.0
    %3883 = vmatprep.subr.mxu0 0.0
    %3884 = vmatpush1.xpose.msra.mxu0 0.0
    %3885 = vmatprep.subr.mxu0 0.0
    %3886 = vmatpush1.xpose.msra.mxu0 0.0
    %3887 = vmatprep.subr.mxu0 0.0
    %3888 = vmatpush1.xpose.msra.mxu0 0.0
    %3889 = vmatprep.subr.mxu0 0.0
    %3890 = vmatpush1.xpose.msra.mxu0 0.0
    %3891 = vmatprep.subr.mxu0 0.0
    %3892 = vmatpush1.xpose.msra.mxu0 0.0
    %3893 = vmatprep.subr.mxu0 0.0
    %3894 = vmatpush1.xpose.msra.mxu0 0.0
    %3895 = vmatprep.subr.mxu0 0.0
    %3896 = vmatpush1.xpose.msra.mxu0 0.0
    %3897 = vmatprep.subr.mxu0 0.0
    %3898 = vmatpush1.xpose.msra.mxu0 0.0
    %3899 = vmatprep.subr.mxu0 0.0
    %3900 = vmatpush1.xpose.msra.mxu0 0.0
    %3901 = vmatprep.subr.mxu0 0.0
    %3902 = vmatpush1.xpose.msra.mxu0 0.0
    %3903 = vmatprep.mubr.f32.mxu0 0.0
    %3904 = vmatmul.mubr.f32.gmra.mrb[0].mxu0 %v3532
    %v3905 = vpop.f32.mrb[0].mxu0
    %v3906 = vadd.f32 0.0, %v3905
    %v3907 = vpop.f32.mrb[0].mxu0
    %3908 = vdwg.mxu0
    %3909 = vmatprep.subr.mxu0 0.0
    %3910 = vmatpush1.xpose.msra.mxu0 %v126
    %3911 = vmatprep.subr.mxu0 0.0
    %3912 = vmatpush1.xpose.msra.mxu0 %v127
    %3913 = vmatprep.subr.mxu0 0.0
    %3914 = vmatpush1.xpose.msra.mxu0 %v128
    %3915 = vmatprep.subr.mxu0 0.0
    %3916 = vmatpush1.xpose.msra.mxu0 %v129
    %3917 = vmatprep.subr.mxu0 0.0
    %3918 = vmatpush1.xpose.msra.mxu0 %v130
    %3919 = vmatprep.subr.mxu0 0.0
    %3920 = vmatpush1.xpose.msra.mxu0 %v131
    %3921 = vmatprep.subr.mxu0 0.0
    %3922 = vmatpush1.xpose.msra.mxu0 %v132
    %3923 = vmatprep.subr.mxu0 0.0
    %3924 = vmatpush1.xpose.msra.mxu0 %v133
    %3925 = vmatprep.subr.mxu0 0.0
    %3926 = vmatpush1.xpose.msra.mxu0 %v134
    %3927 = vmatprep.subr.mxu0 0.0
    %3928 = vmatpush1.xpose.msra.mxu0 %v135
    %3929 = vmatprep.subr.mxu0 0.0
    %3930 = vmatpush1.xpose.msra.mxu0 %v136
    %3931 = vmatprep.subr.mxu0 0.0
    %3932 = vmatpush1.xpose.msra.mxu0 %v137
    %3933 = vmatprep.subr.mxu0 0.0
    %3934 = vmatpush1.xpose.msra.mxu0 %v138
    %3935 = vmatprep.subr.mxu0 0.0
    %3936 = vmatpush1.xpose.msra.mxu0 %v139
    %3937 = vmatprep.subr.mxu0 0.0
    %3938 = vmatpush1.xpose.msra.mxu0 %v140
    %3939 = vmatprep.subr.mxu0 0.0
    %3940 = vmatpush1.xpose.msra.mxu0 %v141
    %3941 = vmatprep.subr.mxu0 0.0
    %3942 = vmatpush1.xpose.msra.mxu0 0.0
    %3943 = vmatprep.subr.mxu0 0.0
    %3944 = vmatpush1.xpose.msra.mxu0 0.0
    %3945 = vmatprep.subr.mxu0 0.0
    %3946 = vmatpush1.xpose.msra.mxu0 0.0
    %3947 = vmatprep.subr.mxu0 0.0
    %3948 = vmatpush1.xpose.msra.mxu0 0.0
    %3949 = vmatprep.subr.mxu0 0.0
    %3950 = vmatpush1.xpose.msra.mxu0 0.0
    %3951 = vmatprep.subr.mxu0 0.0
    %3952 = vmatpush1.xpose.msra.mxu0 0.0
    %3953 = vmatprep.subr.mxu0 0.0
    %3954 = vmatpush1.xpose.msra.mxu0 0.0
    %3955 = vmatprep.subr.mxu0 0.0
    %3956 = vmatpush1.xpose.msra.mxu0 0.0
    %3957 = vmatprep.subr.mxu0 0.0
    %3958 = vmatpush1.xpose.msra.mxu0 0.0
    %3959 = vmatprep.subr.mxu0 0.0
    %3960 = vmatpush1.xpose.msra.mxu0 0.0
    %3961 = vmatprep.subr.mxu0 0.0
    %3962 = vmatpush1.xpose.msra.mxu0 0.0
    %3963 = vmatprep.subr.mxu0 0.0
    %3964 = vmatpush1.xpose.msra.mxu0 0.0
    %3965 = vmatprep.subr.mxu0 0.0
    %3966 = vmatpush1.xpose.msra.mxu0 0.0
    %3967 = vmatprep.subr.mxu0 0.0
    %3968 = vmatpush1.xpose.msra.mxu0 0.0
    %3969 = vmatprep.subr.mxu0 0.0
    %3970 = vmatpush1.xpose.msra.mxu0 0.0
    %3971 = vmatprep.subr.mxu0 0.0
    %3972 = vmatpush1.xpose.msra.mxu0 0.0
    %3973 = vmatprep.mubr.f32.mxu0 0.0
    %3974 = vmatmul.mubr.f32.gmra.mrb[0].mxu0 %v3546
    %v3975 = vpop.f32.mrb[0].mxu0
    %v3976 = vadd.f32 0.0, %v3975
    %v3977 = vpop.f32.mrb[0].mxu0
    %3978 = vdwg.mxu0
    %3979 = vmatprep.subr.mxu0 0.0
    %3980 = vmatpush1.xpose.msra.mxu0 %v142
    %3981 = vmatprep.subr.mxu0 0.0
    %3982 = vmatpush1.xpose.msra.mxu0 %v143
    %3983 = vmatprep.subr.mxu0 0.0
    %3984 = vmatpush1.xpose.msra.mxu0 %v144
    %3985 = vmatprep.subr.mxu0 0.0
    %3986 = vmatpush1.xpose.msra.mxu0 %v145
    %3987 = vmatprep.subr.mxu0 0.0
    %3988 = vmatpush1.xpose.msra.mxu0 %v146
    %3989 = vmatprep.subr.mxu0 0.0
    %3990 = vmatpush1.xpose.msra.mxu0 %v147
    %3991 = vmatprep.subr.mxu0 0.0
    %3992 = vmatpush1.xpose.msra.mxu0 %v148
    %3993 = vmatprep.subr.mxu0 0.0
    %3994 = vmatpush1.xpose.msra.mxu0 %v149
    %3995 = vmatprep.subr.mxu0 0.0
    %3996 = vmatpush1.xpose.msra.mxu0 %v150
    %3997 = vmatprep.subr.mxu0 0.0
    %3998 = vmatpush1.xpose.msra.mxu0 %v151
    %3999 = vmatprep.subr.mxu0 0.0
    %4000 = vmatpush1.xpose.msra.mxu0 %v152
    %4001 = vmatprep.subr.mxu0 0.0
    %4002 = vmatpush1.xpose.msra.mxu0 %v153
    %4003 = vmatprep.subr.mxu0 0.0
    %4004 = vmatpush1.xpose.msra.mxu0 %v154
    %4005 = vmatprep.subr.mxu0 0.0
    %4006 = vmatpush1.xpose.msra.mxu0 %v155
    %4007 = vmatprep.subr.mxu0 0.0
    %4008 = vmatpush1.xpose.msra.mxu0 %v156
    %4009 = vmatprep.subr.mxu0 0.0
    %4010 = vmatpush1.xpose.msra.mxu0 %v157
    %4011 = vmatprep.subr.mxu0 0.0
    %4012 = vmatpush1.xpose.msra.mxu0 0.0
    %4013 = vmatprep.subr.mxu0 0.0
    %4014 = vmatpush1.xpose.msra.mxu0 0.0
    %4015 = vmatprep.subr.mxu0 0.0
    %4016 = vmatpush1.xpose.msra.mxu0 0.0
    %4017 = vmatprep.subr.mxu0 0.0
    %4018 = vmatpush1.xpose.msra.mxu0 0.0
    %4019 = vmatprep.subr.mxu0 0.0
    %4020 = vmatpush1.xpose.msra.mxu0 0.0
    %4021 = vmatprep.subr.mxu0 0.0
    %4022 = vmatpush1.xpose.msra.mxu0 0.0
    %4023 = vmatprep.subr.mxu0 0.0
    %4024 = vmatpush1.xpose.msra.mxu0 0.0
    %4025 = vmatprep.subr.mxu0 0.0
    %4026 = vmatpush1.xpose.msra.mxu0 0.0
    %4027 = vmatprep.subr.mxu0 0.0
    %4028 = vmatpush1.xpose.msra.mxu0 0.0
    %4029 = vmatprep.subr.mxu0 0.0
    %4030 = vmatpush1.xpose.msra.mxu0 0.0
    %4031 = vmatprep.subr.mxu0 0.0
    %4032 = vmatpush1.xpose.msra.mxu0 0.0
    %4033 = vmatprep.subr.mxu0 0.0
    %4034 = vmatpush1.xpose.msra.mxu0 0.0
    %4035 = vmatprep.subr.mxu0 0.0
    %4036 = vmatpush1.xpose.msra.mxu0 0.0
    %4037 = vmatprep.subr.mxu0 0.0
    %4038 = vmatpush1.xpose.msra.mxu0 0.0
    %4039 = vmatprep.subr.mxu0 0.0
    %4040 = vmatpush1.xpose.msra.mxu0 0.0
    %4041 = vmatprep.subr.mxu0 0.0
    %4042 = vmatpush1.xpose.msra.mxu0 0.0
    %4043 = vmatprep.mubr.f32.mxu0 0.0
    %4044 = vmatmul.mubr.f32.gmra.mrb[0].mxu0 %v3548
    %v4045 = vpop.f32.mrb[0].mxu0
    %v4046 = vadd.f32 0.0, %v4045
    %v4047 = vpop.f32.mrb[0].mxu0
    %4048 = vdwg.mxu0
    %4049 = vmatprep.subr.mxu0 0.0
    %4050 = vmatpush1.xpose.msra.mxu0 %v158
    %4051 = vmatprep.subr.mxu0 0.0
    %4052 = vmatpush1.xpose.msra.mxu0 %v159
    %4053 = vmatprep.subr.mxu0 0.0
    %4054 = vmatpush1.xpose.msra.mxu0 %v160
    %4055 = vmatprep.subr.mxu0 0.0
    %4056 = vmatpush1.xpose.msra.mxu0 %v161
    %4057 = vmatprep.subr.mxu0 0.0
    %4058 = vmatpush1.xpose.msra.mxu0 %v162
    %4059 = vmatprep.subr.mxu0 0.0
    %4060 = vmatpush1.xpose.msra.mxu0 %v163
    %4061 = vmatprep.subr.mxu0 0.0
    %4062 = vmatpush1.xpose.msra.mxu0 %v164
    %4063 = vmatprep.subr.mxu0 0.0
    %4064 = vmatpush1.xpose.msra.mxu0 %v165
    %4065 = vmatprep.subr.mxu0 0.0
    %4066 = vmatpush1.xpose.msra.mxu0 %v166
    %4067 = vmatprep.subr.mxu0 0.0
    %4068 = vmatpush1.xpose.msra.mxu0 %v167
    %4069 = vmatprep.subr.mxu0 0.0
    %4070 = vmatpush1.xpose.msra.mxu0 %v168
    %4071 = vmatprep.subr.mxu0 0.0
    %4072 = vmatpush1.xpose.msra.mxu0 %v169
    %4073 = vmatprep.subr.mxu0 0.0
    %4074 = vmatpush1.xpose.msra.mxu0 %v170
    %4075 = vmatprep.subr.mxu0 0.0
    %4076 = vmatpush1.xpose.msra.mxu0 %v171
    %4077 = vmatprep.subr.mxu0 0.0
    %4078 = vmatpush1.xpose.msra.mxu0 %v172
    %4079 = vmatprep.subr.mxu0 0.0
    %4080 = vmatpush1.xpose.msra.mxu0 %v173
    %4081 = vmatprep.subr.mxu0 0.0
    %4082 = vmatpush1.xpose.msra.mxu0 0.0
    %4083 = vmatprep.subr.mxu0 0.0
    %4084 = vmatpush1.xpose.msra.mxu0 0.0
    %4085 = vmatprep.subr.mxu0 0.0
    %4086 = vmatpush1.xpose.msra.mxu0 0.0
    %4087 = vmatprep.subr.mxu0 0.0
    %4088 = vmatpush1.xpose.msra.mxu0 0.0
    %4089 = vmatprep.subr.mxu0 0.0
    %4090 = vmatpush1.xpose.msra.mxu0 0.0
    %4091 = vmatprep.subr.mxu0 0.0
    %4092 = vmatpush1.xpose.msra.mxu0 0.0
    %4093 = vmatprep.subr.mxu0 0.0
    %4094 = vmatpush1.xpose.msra.mxu0 0.0
    %4095 = vmatprep.subr.mxu0 0.0
    %4096 = vmatpush1.xpose.msra.mxu0 0.0
    %4097 = vmatprep.subr.mxu0 0.0
    %4098 = vmatpush1.xpose.msra.mxu0 0.0
    %4099 = vmatprep.subr.mxu0 0.0
    %4100 = vmatpush1.xpose.msra.mxu0 0.0
    %4101 = vmatprep.subr.mxu0 0.0
    %4102 = vmatpush1.xpose.msra.mxu0 0.0
    %4103 = vmatprep.subr.mxu0 0.0
    %4104 = vmatpush1.xpose.msra.mxu0 0.0
    %4105 = vmatprep.subr.mxu0 0.0
    %4106 = vmatpush1.xpose.msra.mxu0 0.0
    %4107 = vmatprep.subr.mxu0 0.0
    %4108 = vmatpush1.xpose.msra.mxu0 0.0
    %4109 = vmatprep.subr.mxu0 0.0
    %4110 = vmatpush1.xpose.msra.mxu0 0.0
    %4111 = vmatprep.subr.mxu0 0.0
    %4112 = vmatpush1.xpose.msra.mxu0 0.0
    %4113 = vmatprep.mubr.f32.mxu0 0.0
    %4114 = vmatmul.mubr.f32.gmra.mrb[0].mxu0 %v3550
    %v4115 = vpop.f32.mrb[0].mxu0
    %v4116 = vadd.f32 0.0, %v4115
    %v4117 = vpop.f32.mrb[0].mxu0
    %4118 = vdwg.mxu0
    %v4119 = vadd.f32 %v3626, %v331
    %v4120 = vadd.f32 %v3696, %v1117
    %v4121 = vadd.f32 %v3766, %v1118
    %v4122 = vadd.f32 %v3836, %v1119
    %v4123 = vadd.f32 %v3906, %v1120
    %v4124 = vadd.f32 %v3976, %v1121
    %v4125 = vadd.f32 %v4046, %v1122
    %v4126 = vadd.f32 %v4116, %v1123
    %v4135 = vrot.slane %v4120, 7
    %v4136 = vsel %vm1149, %v4135, %v4119
    %v4137 = vrot.slane %v4121, 6
    %v4138 = vsel %vm1152, %v4137, %v4136
    %v4139 = vrot.slane %v4122, 5
    %v4140 = vsel %vm1155, %v4139, %v4138
    %v4141 = vrot.slane %v4123, 4
    %v4142 = vsel %vm1158, %v4141, %v4140
    %v4143 = vrot.slane %v4124, 3
    %v4144 = vsel %vm1161, %v4143, %v4142
    %v4145 = vrot.slane %v4125, 2
    %v4146 = vsel %vm1164, %v4145, %v4144
    %v4147 = vrot.slane %v4126, 1
    %v4148 = vsel %vm1167, %v4147, %v4146
    %4150 = vmax.xlane.f32.xlu0 %v4148
    %v4151 = vpop.xlane.xlu0 %4150
    %v4153 = vrot.slane %v4151, 1
    %v4154 = vrot.slane %v4151, 2
    %v4155 = vrot.slane %v4151, 3
    %v4156 = vrot.slane %v4151, 4
    %v4157 = vrot.slane %v4151, 5
    %v4158 = vrot.slane %v4151, 6
    %v4159 = vrot.slane %v4151, 7
    %v4168 = vsub.f32 %v4119, %v4151
    %v4169 = vsub.f32 %v4120, %v4153
    %v4170 = vsub.f32 %v4121, %v4154
    %v4171 = vsub.f32 %v4122, %v4155
    %v4172 = vsub.f32 %v4123, %v4156
    %v4173 = vsub.f32 %v4124, %v4157
    %v4174 = vsub.f32 %v4125, %v4158
    %v4175 = vsub.f32 %v4126, %v4159
    %v4176 = vmul.f32 %v4168, 1.442695
    %v4177 = vpow.pop %v4176
    %v4178 = vmul.f32 %v4169, 1.442695
    %v4179 = vpow.pop %v4178
    %v4180 = vmul.f32 %v4170, 1.442695
    %v4181 = vpow.pop %v4180
    %v4182 = vmul.f32 %v4171, 1.442695
    %v4183 = vpow.pop %v4182
    %v4184 = vmul.f32 %v4172, 1.442695
    %v4185 = vpow.pop %v4184
    %v4186 = vmul.f32 %v4173, 1.442695
    %v4187 = vpow.pop %v4186
    %v4188 = vmul.f32 %v4174, 1.442695
    %v4189 = vpow.pop %v4188
    %v4190 = vmul.f32 %v4175, 1.442695
    %v4191 = vpow.pop %v4190
    %v4200 = vrot.slane %v4179, 7
    %v4201 = vsel %vm1149, %v4200, %v4177
    %v4202 = vrot.slane %v4181, 6
    %v4203 = vsel %vm1152, %v4202, %v4201
    %v4204 = vrot.slane %v4183, 5
    %v4205 = vsel %vm1155, %v4204, %v4203
    %v4206 = vrot.slane %v4185, 4
    %v4207 = vsel %vm1158, %v4206, %v4205
    %v4208 = vrot.slane %v4187, 3
    %v4209 = vsel %vm1161, %v4208, %v4207
    %v4210 = vrot.slane %v4189, 2
    %v4211 = vsel %vm1164, %v4210, %v4209
    %v4212 = vrot.slane %v4191, 1
    %v4213 = vsel %vm1167, %v4212, %v4211
    %4215 = vadd.xlane.f32.xlu0 %v4213
    %v4216 = vpop.xlane.xlu0 %4215
    %v4217 = vrcp.pop %v4216
    %v4219 = vrot.slane %v4217, 1
    %v4220 = vrot.slane %v4217, 2
    %v4221 = vrot.slane %v4217, 3
    %v4222 = vrot.slane %v4217, 4
    %v4223 = vrot.slane %v4217, 5
    %v4224 = vrot.slane %v4217, 6
    %v4225 = vrot.slane %v4217, 7
    %v4234 = vmul.f32 %v4177, %v4217
    %v4235 = vmul.f32 %v4179, %v4219
    %v4236 = vmul.f32 %v4181, %v4220
    %v4237 = vmul.f32 %v4183, %v4221
    %v4238 = vmul.f32 %v4185, %v4222
    %v4239 = vmul.f32 %v4187, %v4223
    %v4240 = vmul.f32 %v4189, %v4224
    %v4241 = vmul.f32 %v4191, %v4225
    %4242 = vmatprep.subr.mxu0 0.0
    %4243 = vmatpush1.msra.mxu0 %v46
    %4244 = vmatprep.subr.mxu0 0.0
    %4245 = vmatpush1.msra.mxu0 %v47
    %4246 = vmatprep.subr.mxu0 0.0
    %4247 = vmatpush1.msra.mxu0 %v48
    %4248 = vmatprep.subr.mxu0 0.0
    %4249 = vmatpush1.msra.mxu0 %v49
    %4250 = vmatprep.subr.mxu0 0.0
    %4251 = vmatpush1.msra.mxu0 %v50
    %4252 = vmatprep.subr.mxu0 0.0
    %4253 = vmatpush1.msra.mxu0 %v51
    %4254 = vmatprep.subr.mxu0 0.0
    %4255 = vmatpush1.msra.mxu0 %v52
    %4256 = vmatprep.subr.mxu0 0.0
    %4257 = vmatpush1.msra.mxu0 %v53
    %4258 = vmatprep.subr.mxu0 0.0
    %4259 = vmatpush1.msra.mxu0 %v54
    %4260 = vmatprep.subr.mxu0 0.0
    %4261 = vmatpush1.msra.mxu0 %v55
    %4262 = vmatprep.subr.mxu0 0.0
    %4263 = vmatpush1.msra.mxu0 %v56
    %4264 = vmatprep.subr.mxu0 0.0
    %4265 = vmatpush1.msra.mxu0 %v57
    %4266 = vmatprep.subr.mxu0 0.0
    %4267 = vmatpush1.msra.mxu0 %v58
    %4268 = vmatprep.subr.mxu0 0.0
    %4269 = vmatpush1.msra.mxu0 %v59
    %4270 = vmatprep.subr.mxu0 0.0
    %4271 = vmatpush1.msra.mxu0 %v60
    %4272 = vmatprep.subr.mxu0 0.0
    %4273 = vmatpush1.msra.mxu0 %v61
    %4274 = vmatprep.subr.mxu0 0.0
    %4275 = vmatpush1.msra.mxu0 0.0
    %4276 = vmatprep.subr.mxu0 0.0
    %4277 = vmatpush1.msra.mxu0 0.0
    %4278 = vmatprep.subr.mxu0 0.0
    %4279 = vmatpush1.msra.mxu0 0.0
    %4280 = vmatprep.subr.mxu0 0.0
    %4281 = vmatpush1.msra.mxu0 0.0
    %4282 = vmatprep.subr.mxu0 0.0
    %4283 = vmatpush1.msra.mxu0 0.0
    %4284 = vmatprep.subr.mxu0 0.0
    %4285 = vmatpush1.msra.mxu0 0.0
    %4286 = vmatprep.subr.mxu0 0.0
    %4287 = vmatpush1.msra.mxu0 0.0
    %4288 = vmatprep.subr.mxu0 0.0
    %4289 = vmatpush1.msra.mxu0 0.0
    %4290 = vmatprep.subr.mxu0 0.0
    %4291 = vmatpush1.msra.mxu0 0.0
    %4292 = vmatprep.subr.mxu0 0.0
    %4293 = vmatpush1.msra.mxu0 0.0
    %4294 = vmatprep.subr.mxu0 0.0
    %4295 = vmatpush1.msra.mxu0 0.0
    %4296 = vmatprep.subr.mxu0 0.0
    %4297 = vmatpush1.msra.mxu0 0.0
    %4298 = vmatprep.subr.mxu0 0.0
    %4299 = vmatpush1.msra.mxu0 0.0
    %4300 = vmatprep.subr.mxu0 0.0
    %4301 = vmatpush1.msra.mxu0 0.0
    %4302 = vmatprep.subr.mxu0 0.0
    %4303 = vmatpush1.msra.mxu0 0.0
    %4304 = vmatprep.subr.mxu0 0.0
    %4305 = vmatpush1.msra.mxu0 0.0
    %4306 = vmatprep.mubr.f32.mxu0 0.0
    %4307 = vmatmul.mubr.f32.gmra.mrb[0].mxu0 %v4234
    %v4308 = vpop.f32.mrb[0].mxu0
    %v4309 = vadd.f32 0.0, %v4308
    %v4310 = vpop.f32.mrb[0].mxu0
    %4311 = vdwg.mxu0
    %4312 = vmatprep.subr.mxu0 0.0
    %4313 = vmatpush1.msra.mxu0 %v62
    %4314 = vmatprep.subr.mxu0 0.0
    %4315 = vmatpush1.msra.mxu0 %v63
    %4316 = vmatprep.subr.mxu0 0.0
    %4317 = vmatpush1.msra.mxu0 %v64
    %4318 = vmatprep.subr.mxu0 0.0
    %4319 = vmatpush1.msra.mxu0 %v65
    %4320 = vmatprep.subr.mxu0 0.0
    %4321 = vmatpush1.msra.mxu0 %v66
    %4322 = vmatprep.subr.mxu0 0.0
    %4323 = vmatpush1.msra.mxu0 %v67
    %4324 = vmatprep.subr.mxu0 0.0
    %4325 = vmatpush1.msra.mxu0 %v68
    %4326 = vmatprep.subr.mxu0 0.0
    %4327 = vmatpush1.msra.mxu0 %v69
    %4328 = vmatprep.subr.mxu0 0.0
    %4329 = vmatpush1.msra.mxu0 %v70
    %4330 = vmatprep.subr.mxu0 0.0
    %4331 = vmatpush1.msra.mxu0 %v71
    %4332 = vmatprep.subr.mxu0 0.0
    %4333 = vmatpush1.msra.mxu0 %v72
    %4334 = vmatprep.subr.mxu0 0.0
    %4335 = vmatpush1.msra.mxu0 %v73
    %4336 = vmatprep.subr.mxu0 0.0
    %4337 = vmatpush1.msra.mxu0 %v74
    %4338 = vmatprep.subr.mxu0 0.0
    %4339 = vmatpush1.msra.mxu0 %v75
    %4340 = vmatprep.subr.mxu0 0.0
    %4341 = vmatpush1.msra.mxu0 %v76
    %4342 = vmatprep.subr.mxu0 0.0
    %4343 = vmatpush1.msra.mxu0 %v77
    %4344 = vmatprep.subr.mxu0 0.0
    %4345 = vmatpush1.msra.mxu0 0.0
    %4346 = vmatprep.subr.mxu0 0.0
    %4347 = vmatpush1.msra.mxu0 0.0
    %4348 = vmatprep.subr.mxu0 0.0
    %4349 = vmatpush1.msra.mxu0 0.0
    %4350 = vmatprep.subr.mxu0 0.0
    %4351 = vmatpush1.msra.mxu0 0.0
    %4352 = vmatprep.subr.mxu0 0.0
    %4353 = vmatpush1.msra.mxu0 0.0
    %4354 = vmatprep.subr.mxu0 0.0
    %4355 = vmatpush1.msra.mxu0 0.0
    %4356 = vmatprep.subr.mxu0 0.0
    %4357 = vmatpush1.msra.mxu0 0.0
    %4358 = vmatprep.subr.mxu0 0.0
    %4359 = vmatpush1.msra.mxu0 0.0
    %4360 = vmatprep.subr.mxu0 0.0
    %4361 = vmatpush1.msra.mxu0 0.0
    %4362 = vmatprep.subr.mxu0 0.0
    %4363 = vmatpush1.msra.mxu0 0.0
    %4364 = vmatprep.subr.mxu0 0.0
    %4365 = vmatpush1.msra.mxu0 0.0
    %4366 = vmatprep.subr.mxu0 0.0
    %4367 = vmatpush1.msra.mxu0 0.0
    %4368 = vmatprep.subr.mxu0 0.0
    %4369 = vmatpush1.msra.mxu0 0.0
    %4370 = vmatprep.subr.mxu0 0.0
    %4371 = vmatpush1.msra.mxu0 0.0
    %4372 = vmatprep.subr.mxu0 0.0
    %4373 = vmatpush1.msra.mxu0 0.0
    %4374 = vmatprep.subr.mxu0 0.0
    %4375 = vmatpush1.msra.mxu0 0.0
    %4376 = vmatprep.mubr.f32.mxu0 0.0
    %4377 = vmatmul.mubr.f32.gmra.mrb[0].mxu0 %v4235
    %v4378 = vpop.f32.mrb[0].mxu0
    %v4379 = vadd.f32 0.0, %v4378
    %v4380 = vpop.f32.mrb[0].mxu0
    %4381 = vdwg.mxu0
    %4382 = vmatprep.subr.mxu0 0.0
    %4383 = vmatpush1.msra.mxu0 %v78
    %4384 = vmatprep.subr.mxu0 0.0
    %4385 = vmatpush1.msra.mxu0 %v79
    %4386 = vmatprep.subr.mxu0 0.0
    %4387 = vmatpush1.msra.mxu0 %v80
    %4388 = vmatprep.subr.mxu0 0.0
    %4389 = vmatpush1.msra.mxu0 %v81
    %4390 = vmatprep.subr.mxu0 0.0
    %4391 = vmatpush1.msra.mxu0 %v82
    %4392 = vmatprep.subr.mxu0 0.0
    %4393 = vmatpush1.msra.mxu0 %v83
    %4394 = vmatprep.subr.mxu0 0.0
    %4395 = vmatpush1.msra.mxu0 %v84
    %4396 = vmatprep.subr.mxu0 0.0
    %4397 = vmatpush1.msra.mxu0 %v85
    %4398 = vmatprep.subr.mxu0 0.0
    %4399 = vmatpush1.msra.mxu0 %v86
    %4400 = vmatprep.subr.mxu0 0.0
    %4401 = vmatpush1.msra.mxu0 %v87
    %4402 = vmatprep.subr.mxu0 0.0
    %4403 = vmatpush1.msra.mxu0 %v88
    %4404 = vmatprep.subr.mxu0 0.0
    %4405 = vmatpush1.msra.mxu0 %v89
    %4406 = vmatprep.subr.mxu0 0.0
    %4407 = vmatpush1.msra.mxu0 %v90
    %4408 = vmatprep.subr.mxu0 0.0
    %4409 = vmatpush1.msra.mxu0 %v91
    %4410 = vmatprep.subr.mxu0 0.0
    %4411 = vmatpush1.msra.mxu0 %v92
    %4412 = vmatprep.subr.mxu0 0.0
    %4413 = vmatpush1.msra.mxu0 %v93
    %4414 = vmatprep.subr.mxu0 0.0
    %4415 = vmatpush1.msra.mxu0 0.0
    %4416 = vmatprep.subr.mxu0 0.0
    %4417 = vmatpush1.msra.mxu0 0.0
    %4418 = vmatprep.subr.mxu0 0.0
    %4419 = vmatpush1.msra.mxu0 0.0
    %4420 = vmatprep.subr.mxu0 0.0
    %4421 = vmatpush1.msra.mxu0 0.0
    %4422 = vmatprep.subr.mxu0 0.0
    %4423 = vmatpush1.msra.mxu0 0.0
    %4424 = vmatprep.subr.mxu0 0.0
    %4425 = vmatpush1.msra.mxu0 0.0
    %4426 = vmatprep.subr.mxu0 0.0
    %4427 = vmatpush1.msra.mxu0 0.0
    %4428 = vmatprep.subr.mxu0 0.0
    %4429 = vmatpush1.msra.mxu0 0.0
    %4430 = vmatprep.subr.mxu0 0.0
    %4431 = vmatpush1.msra.mxu0 0.0
    %4432 = vmatprep.subr.mxu0 0.0
    %4433 = vmatpush1.msra.mxu0 0.0
    %4434 = vmatprep.subr.mxu0 0.0
    %4435 = vmatpush1.msra.mxu0 0.0
    %4436 = vmatprep.subr.mxu0 0.0
    %4437 = vmatpush1.msra.mxu0 0.0
    %4438 = vmatprep.subr.mxu0 0.0
    %4439 = vmatpush1.msra.mxu0 0.0
    %4440 = vmatprep.subr.mxu0 0.0
    %4441 = vmatpush1.msra.mxu0 0.0
    %4442 = vmatprep.subr.mxu0 0.0
    %4443 = vmatpush1.msra.mxu0 0.0
    %4444 = vmatprep.subr.mxu0 0.0
    %4445 = vmatpush1.msra.mxu0 0.0
    %4446 = vmatprep.mubr.f32.mxu0 0.0
    %4447 = vmatmul.mubr.f32.gmra.mrb[0].mxu0 %v4236
    %v4448 = vpop.f32.mrb[0].mxu0
    %v4449 = vadd.f32 0.0, %v4448
    %v4450 = vpop.f32.mrb[0].mxu0
    %4451 = vdwg.mxu0
    %4452 = vmatprep.subr.mxu0 0.0
    %4453 = vmatpush1.msra.mxu0 %v94
    %4454 = vmatprep.subr.mxu0 0.0
    %4455 = vmatpush1.msra.mxu0 %v95
    %4456 = vmatprep.subr.mxu0 0.0
    %4457 = vmatpush1.msra.mxu0 %v96
    %4458 = vmatprep.subr.mxu0 0.0
    %4459 = vmatpush1.msra.mxu0 %v97
    %4460 = vmatprep.subr.mxu0 0.0
    %4461 = vmatpush1.msra.mxu0 %v98
    %4462 = vmatprep.subr.mxu0 0.0
    %4463 = vmatpush1.msra.mxu0 %v99
    %4464 = vmatprep.subr.mxu0 0.0
    %4465 = vmatpush1.msra.mxu0 %v100
    %4466 = vmatprep.subr.mxu0 0.0
    %4467 = vmatpush1.msra.mxu0 %v101
    %4468 = vmatprep.subr.mxu0 0.0
    %4469 = vmatpush1.msra.mxu0 %v102
    %4470 = vmatprep.subr.mxu0 0.0
    %4471 = vmatpush1.msra.mxu0 %v103
    %4472 = vmatprep.subr.mxu0 0.0
    %4473 = vmatpush1.msra.mxu0 %v104
    %4474 = vmatprep.subr.mxu0 0.0
    %4475 = vmatpush1.msra.mxu0 %v105
    %4476 = vmatprep.subr.mxu0 0.0
    %4477 = vmatpush1.msra.mxu0 %v106
    %4478 = vmatprep.subr.mxu0 0.0
    %4479 = vmatpush1.msra.mxu0 %v107
    %4480 = vmatprep.subr.mxu0 0.0
    %4481 = vmatpush1.msra.mxu0 %v108
    %4482 = vmatprep.subr.mxu0 0.0
    %4483 = vmatpush1.msra.mxu0 %v109
    %4484 = vmatprep.subr.mxu0 0.0
    %4485 = vmatpush1.msra.mxu0 0.0
    %4486 = vmatprep.subr.mxu0 0.0
    %4487 = vmatpush1.msra.mxu0 0.0
    %4488 = vmatprep.subr.mxu0 0.0
    %4489 = vmatpush1.msra.mxu0 0.0
    %4490 = vmatprep.subr.mxu0 0.0
    %4491 = vmatpush1.msra.mxu0 0.0
    %4492 = vmatprep.subr.mxu0 0.0
    %4493 = vmatpush1.msra.mxu0 0.0
    %4494 = vmatprep.subr.mxu0 0.0
    %4495 = vmatpush1.msra.mxu0 0.0
    %4496 = vmatprep.subr.mxu0 0.0
    %4497 = vmatpush1.msra.mxu0 0.0
    %4498 = vmatprep.subr.mxu0 0.0
    %4499 = vmatpush1.msra.mxu0 0.0
    %4500 = vmatprep.subr.mxu0 0.0
    %4501 = vmatpush1.msra.mxu0 0.0
    %4502 = vmatprep.subr.mxu0 0.0
    %4503 = vmatpush1.msra.mxu0 0.0
    %4504 = vmatprep.subr.mxu0 0.0
    %4505 = vmatpush1.msra.mxu0 0.0
    %4506 = vmatprep.subr.mxu0 0.0
    %4507 = vmatpush1.msra.mxu0 0.0
    %4508 = vmatprep.subr.mxu0 0.0
    %4509 = vmatpush1.msra.mxu0 0.0
    %4510 = vmatprep.subr.mxu0 0.0
    %4511 = vmatpush1.msra.mxu0 0.0
    %4512 = vmatprep.subr.mxu0 0.0
    %4513 = vmatpush1.msra.mxu0 0.0
    %4514 = vmatprep.subr.mxu0 0.0
    %4515 = vmatpush1.msra.mxu0 0.0
    %4516 = vmatprep.mubr.f32.mxu0 0.0
    %4517 = vmatmul.mubr.f32.gmra.mrb[0].mxu0 %v4237
    %v4518 = vpop.f32.mrb[0].mxu0
    %v4519 = vadd.f32 0.0, %v4518
    %v4520 = vpop.f32.mrb[0].mxu0
    %4521 = vdwg.mxu0
    %4522 = vmatprep.subr.mxu0 0.0
    %4523 = vmatpush1.msra.mxu0 %v110
    %4524 = vmatprep.subr.mxu0 0.0
    %4525 = vmatpush1.msra.mxu0 %v111
    %4526 = vmatprep.subr.mxu0 0.0
    %4527 = vmatpush1.msra.mxu0 %v112
    %4528 = vmatprep.subr.mxu0 0.0
    %4529 = vmatpush1.msra.mxu0 %v113
    %4530 = vmatprep.subr.mxu0 0.0
    %4531 = vmatpush1.msra.mxu0 %v114
    %4532 = vmatprep.subr.mxu0 0.0
    %4533 = vmatpush1.msra.mxu0 %v115
    %4534 = vmatprep.subr.mxu0 0.0
    %4535 = vmatpush1.msra.mxu0 %v116
    %4536 = vmatprep.subr.mxu0 0.0
    %4537 = vmatpush1.msra.mxu0 %v117
    %4538 = vmatprep.subr.mxu0 0.0
    %4539 = vmatpush1.msra.mxu0 %v118
    %4540 = vmatprep.subr.mxu0 0.0
    %4541 = vmatpush1.msra.mxu0 %v119
    %4542 = vmatprep.subr.mxu0 0.0
    %4543 = vmatpush1.msra.mxu0 %v120
    %4544 = vmatprep.subr.mxu0 0.0
    %4545 = vmatpush1.msra.mxu0 %v121
    %4546 = vmatprep.subr.mxu0 0.0
    %4547 = vmatpush1.msra.mxu0 %v122
    %4548 = vmatprep.subr.mxu0 0.0
    %4549 = vmatpush1.msra.mxu0 %v123
    %4550 = vmatprep.subr.mxu0 0.0
    %4551 = vmatpush1.msra.mxu0 %v124
    %4552 = vmatprep.subr.mxu0 0.0
    %4553 = vmatpush1.msra.mxu0 %v125
    %4554 = vmatprep.subr.mxu0 0.0
    %4555 = vmatpush1.msra.mxu0 0.0
    %4556 = vmatprep.subr.mxu0 0.0
    %4557 = vmatpush1.msra.mxu0 0.0
    %4558 = vmatprep.subr.mxu0 0.0
    %4559 = vmatpush1.msra.mxu0 0.0
    %4560 = vmatprep.subr.mxu0 0.0
    %4561 = vmatpush1.msra.mxu0 0.0
    %4562 = vmatprep.subr.mxu0 0.0
    %4563 = vmatpush1.msra.mxu0 0.0
    %4564 = vmatprep.subr.mxu0 0.0
    %4565 = vmatpush1.msra.mxu0 0.0
    %4566 = vmatprep.subr.mxu0 0.0
    %4567 = vmatpush1.msra.mxu0 0.0
    %4568 = vmatprep.subr.mxu0 0.0
    %4569 = vmatpush1.msra.mxu0 0.0
    %4570 = vmatprep.subr.mxu0 0.0
    %4571 = vmatpush1.msra.mxu0 0.0
    %4572 = vmatprep.subr.mxu0 0.0
    %4573 = vmatpush1.msra.mxu0 0.0
    %4574 = vmatprep.subr.mxu0 0.0
    %4575 = vmatpush1.msra.mxu0 0.0
    %4576 = vmatprep.subr.mxu0 0.0
    %4577 = vmatpush1.msra.mxu0 0.0
    %4578 = vmatprep.subr.mxu0 0.0
    %4579 = vmatpush1.msra.mxu0 0.0
    %4580 = vmatprep.subr.mxu0 0.0
    %4581 = vmatpush1.msra.mxu0 0.0
    %4582 = vmatprep.subr.mxu0 0.0
    %4583 = vmatpush1.msra.mxu0 0.0
    %4584 = vmatprep.subr.mxu0 0.0
    %4585 = vmatpush1.msra.mxu0 0.0
    %4586 = vmatprep.mubr.f32.mxu0 0.0
    %4587 = vmatmul.mubr.f32.gmra.mrb[0].mxu0 %v4238
    %v4588 = vpop.f32.mrb[0].mxu0
    %v4589 = vadd.f32 0.0, %v4588
    %v4590 = vpop.f32.mrb[0].mxu0
    %4591 = vdwg.mxu0
    %4592 = vmatprep.subr.mxu0 0.0
    %4593 = vmatpush1.msra.mxu0 %v126
    %4594 = vmatprep.subr.mxu0 0.0
    %4595 = vmatpush1.msra.mxu0 %v127
    %4596 = vmatprep.subr.mxu0 0.0
    %4597 = vmatpush1.msra.mxu0 %v128
    %4598 = vmatprep.subr.mxu0 0.0
    %4599 = vmatpush1.msra.mxu0 %v129
    %4600 = vmatprep.subr.mxu0 0.0
    %4601 = vmatpush1.msra.mxu0 %v130
    %4602 = vmatprep.subr.mxu0 0.0
    %4603 = vmatpush1.msra.mxu0 %v131
    %4604 = vmatprep.subr.mxu0 0.0
    %4605 = vmatpush1.msra.mxu0 %v132
    %4606 = vmatprep.subr.mxu0 0.0
    %4607 = vmatpush1.msra.mxu0 %v133
    %4608 = vmatprep.subr.mxu0 0.0
    %4609 = vmatpush1.msra.mxu0 %v134
    %4610 = vmatprep.subr.mxu0 0.0
    %4611 = vmatpush1.msra.mxu0 %v135
    %4612 = vmatprep.subr.mxu0 0.0
    %4613 = vmatpush1.msra.mxu0 %v136
    %4614 = vmatprep.subr.mxu0 0.0
    %4615 = vmatpush1.msra.mxu0 %v137
    %4616 = vmatprep.subr.mxu0 0.0
    %4617 = vmatpush1.msra.mxu0 %v138
    %4618 = vmatprep.subr.mxu0 0.0
    %4619 = vmatpush1.msra.mxu0 %v139
    %4620 = vmatprep.subr.mxu0 0.0
    %4621 = vmatpush1.msra.mxu0 %v140
    %4622 = vmatprep.subr.mxu0 0.0
    %4623 = vmatpush1.msra.mxu0 %v141
    %4624 = vmatprep.subr.mxu0 0.0
    %4625 = vmatpush1.msra.mxu0 0.0
    %4626 = vmatprep.subr.mxu0 0.0
    %4627 = vmatpush1.msra.mxu0 0.0
    %4628 = vmatprep.subr.mxu0 0.0
    %4629 = vmatpush1.msra.mxu0 0.0
    %4630 = vmatprep.subr.mxu0 0.0
    %4631 = vmatpush1.msra.mxu0 0.0
    %4632 = vmatprep.subr.mxu0 0.0
    %4633 = vmatpush1.msra.mxu0 0.0
    %4634 = vmatprep.subr.mxu0 0.0
    %4635 = vmatpush1.msra.mxu0 0.0
    %4636 = vmatprep.subr.mxu0 0.0
    %4637 = vmatpush1.msra.mxu0 0.0
    %4638 = vmatprep.subr.mxu0 0.0
    %4639 = vmatpush1.msra.mxu0 0.0
    %4640 = vmatprep.subr.mxu0 0.0
    %4641 = vmatpush1.msra.mxu0 0.0
    %4642 = vmatprep.subr.mxu0 0.0
    %4643 = vmatpush1.msra.mxu0 0.0
    %4644 = vmatprep.subr.mxu0 0.0
    %4645 = vmatpush1.msra.mxu0 0.0
    %4646 = vmatprep.subr.mxu0 0.0
    %4647 = vmatpush1.msra.mxu0 0.0
    %4648 = vmatprep.subr.mxu0 0.0
    %4649 = vmatpush1.msra.mxu0 0.0
    %4650 = vmatprep.subr.mxu0 0.0
    %4651 = vmatpush1.msra.mxu0 0.0
    %4652 = vmatprep.subr.mxu0 0.0
    %4653 = vmatpush1.msra.mxu0 0.0
    %4654 = vmatprep.subr.mxu0 0.0
    %4655 = vmatpush1.msra.mxu0 0.0
    %4656 = vmatprep.mubr.f32.mxu0 0.0
    %4657 = vmatmul.mubr.f32.gmra.mrb[0].mxu0 %v4239
    %v4658 = vpop.f32.mrb[0].mxu0
    %v4659 = vadd.f32 0.0, %v4658
    %v4660 = vpop.f32.mrb[0].mxu0
    %4661 = vdwg.mxu0
    %4662 = vmatprep.subr.mxu0 0.0
    %4663 = vmatpush1.msra.mxu0 %v142
    %4664 = vmatprep.subr.mxu0 0.0
    %4665 = vmatpush1.msra.mxu0 %v143
    %4666 = vmatprep.subr.mxu0 0.0
    %4667 = vmatpush1.msra.mxu0 %v144
    %4668 = vmatprep.subr.mxu0 0.0
    %4669 = vmatpush1.msra.mxu0 %v145
    %4670 = vmatprep.subr.mxu0 0.0
    %4671 = vmatpush1.msra.mxu0 %v146
    %4672 = vmatprep.subr.mxu0 0.0
    %4673 = vmatpush1.msra.mxu0 %v147
    %4674 = vmatprep.subr.mxu0 0.0
    %4675 = vmatpush1.msra.mxu0 %v148
    %4676 = vmatprep.subr.mxu0 0.0
    %4677 = vmatpush1.msra.mxu0 %v149
    %4678 = vmatprep.subr.mxu0 0.0
    %4679 = vmatpush1.msra.mxu0 %v150
    %4680 = vmatprep.subr.mxu0 0.0
    %4681 = vmatpush1.msra.mxu0 %v151
    %4682 = vmatprep.subr.mxu0 0.0
    %4683 = vmatpush1.msra.mxu0 %v152
    %4684 = vmatprep.subr.mxu0 0.0
    %4685 = vmatpush1.msra.mxu0 %v153
    %4686 = vmatprep.subr.mxu0 0.0
    %4687 = vmatpush1.msra.mxu0 %v154
    %4688 = vmatprep.subr.mxu0 0.0
    %4689 = vmatpush1.msra.mxu0 %v155
    %4690 = vmatprep.subr.mxu0 0.0
    %4691 = vmatpush1.msra.mxu0 %v156
    %4692 = vmatprep.subr.mxu0 0.0
    %4693 = vmatpush1.msra.mxu0 %v157
    %4694 = vmatprep.subr.mxu0 0.0
    %4695 = vmatpush1.msra.mxu0 0.0
    %4696 = vmatprep.subr.mxu0 0.0
    %4697 = vmatpush1.msra.mxu0 0.0
    %4698 = vmatprep.subr.mxu0 0.0
    %4699 = vmatpush1.msra.mxu0 0.0
    %4700 = vmatprep.subr.mxu0 0.0
    %4701 = vmatpush1.msra.mxu0 0.0
    %4702 = vmatprep.subr.mxu0 0.0
    %4703 = vmatpush1.msra.mxu0 0.0
    %4704 = vmatprep.subr.mxu0 0.0
    %4705 = vmatpush1.msra.mxu0 0.0
    %4706 = vmatprep.subr.mxu0 0.0
    %4707 = vmatpush1.msra.mxu0 0.0
    %4708 = vmatprep.subr.mxu0 0.0
    %4709 = vmatpush1.msra.mxu0 0.0
    %4710 = vmatprep.subr.mxu0 0.0
    %4711 = vmatpush1.msra.mxu0 0.0
    %4712 = vmatprep.subr.mxu0 0.0
    %4713 = vmatpush1.msra.mxu0 0.0
    %4714 = vmatprep.subr.mxu0 0.0
    %4715 = vmatpush1.msra.mxu0 0.0
    %4716 = vmatprep.subr.mxu0 0.0
    %4717 = vmatpush1.msra.mxu0 0.0
    %4718 = vmatprep.subr.mxu0 0.0
    %4719 = vmatpush1.msra.mxu0 0.0
    %4720 = vmatprep.subr.mxu0 0.0
    %4721 = vmatpush1.msra.mxu0 0.0
    %4722 = vmatprep.subr.mxu0 0.0
    %4723 = vmatpush1.msra.mxu0 0.0
    %4724 = vmatprep.subr.mxu0 0.0
    %4725 = vmatpush1.msra.mxu0 0.0
    %4726 = vmatprep.mubr.f32.mxu0 0.0
    %4727 = vmatmul.mubr.f32.gmra.mrb[0].mxu0 %v4240
    %v4728 = vpop.f32.mrb[0].mxu0
    %v4729 = vadd.f32 0.0, %v4728
    %v4730 = vpop.f32.mrb[0].mxu0
    %4731 = vdwg.mxu0
    %4732 = vmatprep.subr.mxu0 0.0
    %4733 = vmatpush1.msra.mxu0 %v158
    %4734 = vmatprep.subr.mxu0 0.0
    %4735 = vmatpush1.msra.mxu0 %v159
    %4736 = vmatprep.subr.mxu0 0.0
    %4737 = vmatpush1.msra.mxu0 %v160
    %4738 = vmatprep.subr.mxu0 0.0
    %4739 = vmatpush1.msra.mxu0 %v161
    %4740 = vmatprep.subr.mxu0 0.0
    %4741 = vmatpush1.msra.mxu0 %v162
    %4742 = vmatprep.subr.mxu0 0.0
    %4743 = vmatpush1.msra.mxu0 %v163
    %4744 = vmatprep.subr.mxu0 0.0
    %4745 = vmatpush1.msra.mxu0 %v164
    %4746 = vmatprep.subr.mxu0 0.0
    %4747 = vmatpush1.msra.mxu0 %v165
    %4748 = vmatprep.subr.mxu0 0.0
    %4749 = vmatpush1.msra.mxu0 %v166
    %4750 = vmatprep.subr.mxu0 0.0
    %4751 = vmatpush1.msra.mxu0 %v167
    %4752 = vmatprep.subr.mxu0 0.0
    %4753 = vmatpush1.msra.mxu0 %v168
    %4754 = vmatprep.subr.mxu0 0.0
    %4755 = vmatpush1.msra.mxu0 %v169
    %4756 = vmatprep.subr.mxu0 0.0
    %4757 = vmatpush1.msra.mxu0 %v170
    %4758 = vmatprep.subr.mxu0 0.0
    %4759 = vmatpush1.msra.mxu0 %v171
    %4760 = vmatprep.subr.mxu0 0.0
    %4761 = vmatpush1.msra.mxu0 %v172
    %4762 = vmatprep.subr.mxu0 0.0
    %4763 = vmatpush1.msra.mxu0 %v173
    %4764 = vmatprep.subr.mxu0 0.0
    %4765 = vmatpush1.msra.mxu0 0.0
    %4766 = vmatprep.subr.mxu0 0.0
    %4767 = vmatpush1.msra.mxu0 0.0
    %4768 = vmatprep.subr.mxu0 0.0
    %4769 = vmatpush1.msra.mxu0 0.0
    %4770 = vmatprep.subr.mxu0 0.0
    %4771 = vmatpush1.msra.mxu0 0.0
    %4772 = vmatprep.subr.mxu0 0.0
    %4773 = vmatpush1.msra.mxu0 0.0
    %4774 = vmatprep.subr.mxu0 0.0
    %4775 = vmatpush1.msra.mxu0 0.0
    %4776 = vmatprep.subr.mxu0 0.0
    %4777 = vmatpush1.msra.mxu0 0.0
    %4778 = vmatprep.subr.mxu0 0.0
    %4779 = vmatpush1.msra.mxu0 0.0
    %4780 = vmatprep.subr.mxu0 0.0
    %4781 = vmatpush1.msra.mxu0 0.0
    %4782 = vmatprep.subr.mxu0 0.0
    %4783 = vmatpush1.msra.mxu0 0.0
    %4784 = vmatprep.subr.mxu0 0.0
    %4785 = vmatpush1.msra.mxu0 0.0
    %4786 = vmatprep.subr.mxu0 0.0
    %4787 = vmatpush1.msra.mxu0 0.0
    %4788 = vmatprep.subr.mxu0 0.0
    %4789 = vmatpush1.msra.mxu0 0.0
    %4790 = vmatprep.subr.mxu0 0.0
    %4791 = vmatpush1.msra.mxu0 0.0
    %4792 = vmatprep.subr.mxu0 0.0
    %4793 = vmatpush1.msra.mxu0 0.0
    %4794 = vmatprep.subr.mxu0 0.0
    %4795 = vmatpush1.msra.mxu0 0.0
    %4796 = vmatprep.mubr.f32.mxu0 0.0
    %4797 = vmatmul.mubr.f32.gmra.mrb[0].mxu0 %v4241
    %v4798 = vpop.f32.mrb[0].mxu0
    %v4799 = vadd.f32 0.0, %v4798
    %v4800 = vpop.f32.mrb[0].mxu0
    %4801 = vdwg.mxu0
    %4802 = vst [vmem:[#allocation7] sm:$0xff] %v3500
    %v4811 = vrot.slane %v4379, 7
    %v4812 = vsel %vm1149, %v4811, %v4309
    %v4813 = vrot.slane %v4449, 6
    %v4814 = vsel %vm1152, %v4813, %v4812
    %v4815 = vrot.slane %v4519, 5
    %v4816 = vsel %vm1155, %v4815, %v4814
    %v4817 = vrot.slane %v4589, 4
    %v4818 = vsel %vm1158, %v4817, %v4816
    %v4819 = vrot.slane %v4659, 3
    %v4820 = vsel %vm1161, %v4819, %v4818
    %v4821 = vrot.slane %v4729, 2
    %v4822 = vsel %vm1164, %v4821, %v4820
    %v4823 = vrot.slane %v4799, 1
    %v4824 = vsel %vm1167, %v4823, %v4822
    %4826 = vst [vmem:[#allocation7 + $0x8] sm:$0xff] %v4824
    // Predicated region
    $region26: #{tpu_custom_call.1} parent=1 // pred_check
      _
    $region27: #{tpu_custom_call.1} parent=1 // pred_check_branch
      %4828 = sbr.rel (0) target = $region29
    $region28: #{tpu_custom_call.1} parent=1 // pred_region
      %s4830 = ssub.s32 256, 256
      %4831 = vsyncadd [#allocation4], %s4830
      %s4833 = sshll.u32 [#allocation7], 4
      %s4834 = int_to_ptr.vmem [resolvable:$true] %s4833
      %4836 = dma.vmem_to_hbm [thread:$0]  %s4834, 256, %s4, [#allocation4]
    $region29: #{tpu_custom_call.1} parent=1 // pred_fallthru
      _
    // Predicated region
    $region30: #{tpu_custom_call.1} parent=1 // pred_check
      _
    $region31: #{tpu_custom_call.1} parent=1 // pred_check_branch
      %4838 = sbr.rel (0) target = $region33
    $region32: #{tpu_custom_call.1} parent=1 // pred_region
      %4839 = dma.done [#allocation4], 256
    $region33: #{tpu_custom_call.1} parent=1 // pred_fallthru
      _
    %4840 = vsyncpa [#allocation3], 1
    %4841 = vsyncpa [#allocation6], 1
    %4842 = vsyncpa [#allocation4], 1

</llo_original>
